<compile_context>
chip_gen: v6e
topology: v6e:2x2x1
jax: 0.10.0
libtpu: 0.0.40
codegen_flags: <defaults>
</compile_context>

<pallas_src>
import math
import functools

import jax
import jax.numpy as jnp
from jax.experimental import pallas as pl
from jax.experimental.pallas import tpu as pltpu


# --------------------------------------------------------------------------- attention core

def _attend_heads(qp, kv_ref, ctx_ref, *, h, d_k):
    """Per-head scaled-dot-product attention written into the ctx scratch.

    qp:      (Sq, D) bf16, already scaled by 1/sqrt(d_k) (folded into weights).
    kv_ref:  (Sk, 2D) bf16 VMEM scratch holding [KP | VP].
    ctx_ref: (Sq, D) f32 VMEM scratch receiving each head's context slice.
    """
    D = h * d_k
    for i in range(h):                       # h is small & static -> unrolled
        lo = i * d_k
        qh = qp[:, lo:lo + d_k]              # (Sq, d_k) bf16
        kh = kv_ref[:, lo:lo + d_k]          # (Sk, d_k) bf16
        vh = kv_ref[:, D + lo:D + lo + d_k]  # (Sk, d_k) bf16
        # scores = qh @ kh.T on the MXU (contract last dims, no transpose copy).
        # TODO(synk): d_k < 128 underfills MXU contraction depth; head packing
        # (block-diagonal K) would help when the score matmul dominates.
        s = jax.lax.dot_general(qh, kh, (((1,), (1,)), ((), ())),
                                preferred_element_type=jnp.float32)   # (Sq, Sk) f32
        m = jnp.max(s, axis=-1, keepdims=True)
        e = jnp.exp(s - m)                                            # f32 numerator
        denom = jnp.sum(e, axis=-1, keepdims=True)
        # Normalize the small (Sq, d_k) context, not the (Sq, Sk) probabilities;
        # exact reciprocal is now essentially free (only Sq elements).
        # TODO(synk): masked_fill branch (mask != None) of the module not implemented.
        # TODO(synk): dropout on the attention weights is identity (eval-mode semantics).
        ctx_h = jnp.dot(e.astype(jnp.bfloat16), vh,
                        preferred_element_type=jnp.float32)           # (Sq, d_k) f32
        ctx_ref[:, lo:lo + d_k] = ctx_h * pl.reciprocal(denom, approx=False)


def _project_out(ctx_ref, wo_ref, bo_ref, o_ref):
    ctx = ctx_ref[...].astype(jnp.bfloat16)                           # (Sq, D)
    o_ref[...] = (jnp.dot(ctx, wo_ref[...], preferred_element_type=jnp.float32)
                  + bo_ref[...]).astype(o_ref.dtype)


# --------------------------------------------------------------------------- kernels

def mha_self_kernel(x_ref, wqkv_ref, bqkv_ref, wo_ref, bo_ref, o_ref,
                    kv_ref, ctx_ref, *, h, d_k, q_block):
    """Self-attention (q = k = v). grid = (batch, query tiles).

    K/V projection for the full sequence is computed once per batch element
    (qi == 0) into kv_ref; each step projects only its q_block query rows.
    """
    D = h * d_k
    qi = pl.program_id(1)

    @pl.when(qi == 0)
    def _project_kv():
        x_all = x_ref[...].astype(jnp.bfloat16)                       # (S, D)
        kv = jnp.dot(x_all, wqkv_ref[:, D:],
                     preferred_element_type=jnp.float32) + bqkv_ref[:, D:]
        kv_ref[...] = kv.astype(jnp.bfloat16)                         # (S, 2D)

    row0 = pl.multiple_of(qi * q_block, q_block)
    xq = x_ref[pl.ds(row0, q_block), :].astype(jnp.bfloat16)          # (q_block, D)
    qp = (jnp.dot(xq, wqkv_ref[:, :D], preferred_element_type=jnp.float32)
          + bqkv_ref[:, :D]).astype(jnp.bfloat16)                     # scale pre-folded

    _attend_heads(qp, kv_ref, ctx_ref, h=h, d_k=d_k)
    _project_out(ctx_ref, wo_ref, bo_ref, o_ref)


def mha_cross_kernel(q_ref, k_ref, v_ref, wqkv_ref, bqkv_ref, wo_ref, bo_ref,
                     o_ref, kv_ref, ctx_ref, *, h, d_k):
    """General path (distinct q/k/v). grid = (batch, query tiles).

    K/V projection is cached in VMEM at qi == 0 (qi axis is "arbitrary", so the
    cache is valid per core); only the q projection runs per query tile.
    """
    D = h * d_k
    qi = pl.program_id(1)

    @pl.when(qi == 0)
    def _project_kv():
        k_all = k_ref[...].astype(jnp.bfloat16)                       # (Sk, D)
        v_all = v_ref[...].astype(jnp.bfloat16)                       # (Sk, D)
        kp = (jnp.dot(k_all, wqkv_ref[:, D:2 * D],
                      preferred_element_type=jnp.float32) + bqkv_ref[:, D:2 * D])
        vp = (jnp.dot(v_all, wqkv_ref[:, 2 * D:],
                      preferred_element_type=jnp.float32) + bqkv_ref[:, 2 * D:])
        kv_ref[:, :D] = kp.astype(jnp.bfloat16)
        kv_ref[:, D:] = vp.astype(jnp.bfloat16)

    qb = q_ref[...].astype(jnp.bfloat16)                              # (q_block, D)
    qp = (jnp.dot(qb, wqkv_ref[:, :D], preferred_element_type=jnp.float32)
          + bqkv_ref[:, :D]).astype(jnp.bfloat16)

    _attend_heads(qp, kv_ref, ctx_ref, h=h, d_k=d_k)
    _project_out(ctx_ref, wo_ref, bo_ref, o_ref)
    # TODO(synk): for very long Sk add a flash-style KV grid axis with online-softmax
    # state in scratch instead of holding the full (Sk, D) K/V blocks.


# --------------------------------------------------------------------------- wrappers

def _pick_q_block(S, q_block):
    if q_block is not None:
        assert S % q_block == 0, "q_block must divide the query sequence length"
        return q_block
    for cand in (256, 128, 64, 32, 16, 8):
        if S % cand == 0:
            return cand
    return S


def _vmem_limit(S_kv, D, q_block, requested):
    if requested is not None:
        return requested
    weights = (3 * D * D + D * D) * 2 + (3 * D + D) * 4        # bf16 W (single-buffered) + f32 b
    kv_scratch = S_kv * 2 * D * 2                               # (Sk, 2D) bf16
    ctx_scratch = q_block * D * 4                               # (q_block, D) f32
    io = 2 * 2 * (S_kv * D * 4) + 2 * 2 * (q_block * D * 4)     # double-buffered f32 in/out blocks
    scores = 3 * q_block * S_kv * 4                             # score/exp intermediates + slack
    est = weights + kv_scratch + ctx_scratch + io + scores
    return int(min(max(2 * est, 32 << 20), 64 << 20))           # 64 MiB cap keeps v7x valid


def _prepare_params(params, h):
    """Cast weights to bf16 for the MXU and fold 1/sqrt(d_k) into the Q columns."""
    D = params['wo'].shape[0]
    d_k = D // h
    scale = 1.0 / math.sqrt(d_k)
    col_scale = jnp.concatenate([jnp.full((D,), scale, jnp.float32),
                                 jnp.ones((2 * D,), jnp.float32)])
    wqkv = (params['wqkv'] * col_scale).astype(jnp.bfloat16)    # (D, 3D)
    bqkv = (params['bqkv'] * col_scale).astype(jnp.float32)     # (1, 3D)
    wo = params['wo'].astype(jnp.bfloat16)                      # (D, D)
    bo = params['bo'].astype(jnp.float32)                       # (1, D)
    return wqkv, bqkv, wo, bo


def _weight_spec(shape):
    # Constant index map -> nothing to pipeline; single-buffer to halve weight VMEM.
    return pl.BlockSpec(shape, lambda b, qi: (0, 0), pipeline_mode=pl.Buffered(1))


def multi_head_self_attention(x, params, *, h, q_block=None, vmem_limit_bytes=None):
    B, S, D = x.shape
    assert D % h == 0
    d_k = D // h
    q_block = _pick_q_block(S, q_block)
    n_q = S // q_block
    wqkv, bqkv, wo, bo = _prepare_params(params, h)
    kernel = functools.partial(mha_self_kernel, h=h, d_k=d_k, q_block=q_block)

    return pl.pallas_call(
        kernel,
        out_shape=jax.ShapeDtypeStruct((B, S, D), x.dtype),
        grid_spec=pltpu.PrefetchScalarGridSpec(
            num_scalar_prefetch=0,
            grid=(B, n_q),
            in_specs=[pl.BlockSpec((None, S, D), lambda b, qi: (b, 0, 0)),
                      _weight_spec((D, 3 * D)),
                      _weight_spec((1, 3 * D)),
                      _weight_spec((D, D)),
                      _weight_spec((1, D))],
            out_specs=pl.BlockSpec((None, q_block, D), lambda b, qi: (b, qi, 0)),
            scratch_shapes=[pltpu.VMEM((S, 2 * D), jnp.bfloat16),      # cached KP|VP
                            pltpu.VMEM((q_block, D), jnp.float32)]),   # context tile
        compiler_params=pltpu.CompilerParams(
            # B "parallel" (feeds both v7x TCs); qi must stay "arbitrary" so the
            # qi==0 KV-projection cache is valid on each core.
            dimension_semantics=("parallel", "arbitrary"),
            vmem_limit_bytes=_vmem_limit(S, D, q_block, vmem_limit_bytes)),
    )(x, wqkv, bqkv, wo, bo)


def multi_head_attention(q, k, v, params, *, h, q_block=None, vmem_limit_bytes=None):
    """params: dict with 'wqkv' (D,3D), 'bqkv' (1,3D), 'wo' (D,D), 'bo' (1,D).

    NOTE: the fused self-attention path is selected by Python object identity
    (q is k is v); equal-but-distinct arrays take the (still correct) general path.
    """
    if q is k and k is v:
        return multi_head_self_attention(q, params, h=h, q_block=q_block,
                                         vmem_limit_bytes=vmem_limit_bytes)
    B, Sq, D = q.shape
    Sk = k.shape[1]
    assert D % h == 0
    d_k = D // h
    q_block = _pick_q_block(Sq, q_block)
    n_q = Sq // q_block
    wqkv, bqkv, wo, bo = _prepare_params(params, h)
    kernel = functools.partial(mha_cross_kernel, h=h, d_k=d_k)

    q_spec = pl.BlockSpec((None, q_block, D), lambda b, qi: (b, qi, 0))
    kv_spec = pl.BlockSpec((None, Sk, D), lambda b, qi: (b, 0, 0))

    return pl.pallas_call(
        kernel,
        out_shape=jax.ShapeDtypeStruct((B, Sq, D), q.dtype),
        grid_spec=pltpu.PrefetchScalarGridSpec(
            num_scalar_prefetch=0,
            grid=(B, n_q),
            in_specs=[q_spec, kv_spec, kv_spec,
                      _weight_spec((D, 3 * D)),
                      _weight_spec((1, 3 * D)),
                      _weight_spec((D, D)),
                      _weight_spec((1, D))],
            out_specs=q_spec,
            scratch_shapes=[pltpu.VMEM((Sk, 2 * D), jnp.bfloat16),     # cached KP|VP
                            pltpu.VMEM((q_block, D), jnp.float32)]),   # context tile
        compiler_params=pltpu.CompilerParams(
            dimension_semantics=("parallel", "arbitrary"),
            vmem_limit_bytes=_vmem_limit(Sk, D, q_block, vmem_limit_bytes)),
    )(q, k, v, wqkv, bqkv, wo, bo)


# --------------------------------------------------------------------------- helpers

def init_linear(key, d_in, d_out):
    # PyTorch nn.Linear default init: U(-1/sqrt(d_in), 1/sqrt(d_in)).
    kw, kb = jax.random.split(key)
    bound = 1.0 / math.sqrt(d_in)
    w = jax.random.uniform(kw, (d_in, d_out), jnp.float32, -bound, bound)
    b = jax.random.uniform(kb, (1, d_out), jnp.float32, -bound, bound)
    return w, b


def init_params(key, d_model):
    kq, kk, kv, ko = jax.random.split(key, 4)
    wq, bq = init_linear(kq, d_model, d_model)
    wk, bk = init_linear(kk, d_model, d_model)
    wv, bv = init_linear(kv, d_model, d_model)
    wo, bo = init_linear(ko, d_model, d_model)
    return dict(wqkv=jnp.concatenate([wq, wk, wv], axis=1),
                bqkv=jnp.concatenate([bq, bk, bv], axis=1),
                wo=wo, bo=bo)


def reference_mha(q, k, v, params, *, h):
    """Pure-JAX f32 reference matching the PyTorch module (mask=None, eval mode)."""
    B, Sq, D = q.shape
    d_k = D // h
    w, b3 = params['wqkv'], params['bqkv'][0]
    qp = q @ w[:, :D] + b3[:D]
    kp = k @ w[:, D:2 * D] + b3[D:2 * D]
    vp = v @ w[:, 2 * D:] + b3[2 * D:]

    def split(x):
        return x.reshape(B, -1, h, d_k).transpose(0, 2, 1, 3)

    qh, kh, vh = split(qp), split(kp), split(vp)
    scores = jnp.einsum('bhqd,bhkd->bhqk', qh, kh) / math.sqrt(d_k)
    p = jax.nn.softmax(scores, axis=-1)
    ctx = jnp.einsum('bhqk,bhkd->bhqd', p, vh).transpose(0, 2, 1, 3).reshape(B, -1, D)
    return ctx @ params['wo'] + params['bo'][0]


if __name__ == "__main__":
    key = jax.random.PRNGKey(0)
    # Small but (8,128)-aligned shapes; S > q_block so the pl.when(qi==0) KV cache
    # and the "arbitrary" query-tile axis are actually exercised.
    B, S, Sk, d_model, h = 2, 256, 128, 128, 4
    k_x, k_q, k_k, k_v, k_p = jax.random.split(key, 5)
    params = init_params(k_p, d_model)

    # Tolerance reflects bf16 MXU operands (f32 accumulation) in the kernel vs the
    # f32 reference; real indexing/layout bugs would show up as O(1) mismatches.
    TOL = dict(atol=3e-2, rtol=3e-2)

    # Self-attention path (q = k = v): KV projected once per batch, 2 query tiles.
    x = jax.random.normal(k_x, (B, S, d_model), jnp.float32)
    out_self = jax.block_until_ready(multi_head_attention(x, x, x, params, h=h, q_block=128))
    ref_self = reference_mha(x, x, x, params, h=h)
    assert out_self.shape == (B, S, d_model)
    assert jnp.allclose(out_self, ref_self, **TOL), "self-attention mismatch vs reference"

    # Cross-attention path (distinct q/k/v, Sq != Sk), 4 query tiles per batch.
    q = jax.random.normal(k_q, (B, S, d_model), jnp.float32)
    kk = jax.random.normal(k_k, (B, Sk, d_model), jnp.float32)
    v = jax.random.normal(k_v, (B, Sk, d_model), jnp.float32)
    out_cross = jax.block_until_ready(
        multi_head_attention(q, kk, v, params, h=h, q_block=64))
    ref_cross = reference_mha(q, kk, v, params, h=h)
    assert out_cross.shape == (B, S, d_model)
    assert jnp.allclose(out_cross, ref_cross, **TOL), "cross-attention mismatch vs reference"

    print("KERNEL_OK")
</pallas_src>

<mosaic_0001>
module attributes {stable_mosaic.version = 11 : i64} {
  func.func @mha_self_kernel(%arg0: i32, %arg1: i32, %arg2: memref<1x256x128xf32, #tpu.memory_space<vmem>>, %arg3: memref<128x384xbf16, #tpu.memory_space<vmem>>, %arg4: memref<1x384xf32, #tpu.memory_space<vmem>>, %arg5: memref<128x128xbf16, #tpu.memory_space<vmem>>, %arg6: memref<1x128xf32, #tpu.memory_space<vmem>>, %arg7: memref<1x128x128xf32, #tpu.memory_space<vmem>>, %arg8: memref<256x256xbf16, #tpu.memory_space<vmem>>, %arg9: memref<128x128xf32, #tpu.memory_space<vmem>>) attributes {dimension_semantics = [#tpu.dimension_semantics<parallel>, #tpu.dimension_semantics<arbitrary>], iteration_bounds = array<i64: 2, 2>, scalar_prefetch = 0 : i64, scratch_operands = 2 : i64, tpu.core_type = #tpu.core_type<tc>, window_params = [{transform_indices = @transform_0, window_bounds = array<i64: 1, 256, 128>}, {pipeline_mode = #tpu.pipeline_mode<synchronous>, transform_indices = @transform_1, window_bounds = array<i64: 128, 384>}, {pipeline_mode = #tpu.pipeline_mode<synchronous>, transform_indices = @transform_2, window_bounds = array<i64: 1, 384>}, {pipeline_mode = #tpu.pipeline_mode<synchronous>, transform_indices = @transform_3, window_bounds = array<i64: 128, 128>}, {pipeline_mode = #tpu.pipeline_mode<synchronous>, transform_indices = @transform_4, window_bounds = array<i64: 1, 128>}, {transform_indices = @transform_5, window_bounds = array<i64: 1, 128, 128>}]} {
    %c0_i32 = arith.constant 0 : i32
    %0 = arith.cmpi eq, %arg1, %c0_i32 : i32
    %1 = arith.extui %0 : i1 to i32
    %c0_i32_0 = arith.constant 0 : i32
    %2 = arith.cmpi ne, %1, %c0_i32_0 : i32
    scf.if %2 {
      %c0_49 = arith.constant 0 : index
      %c0_50 = arith.constant 0 : index
      %c0_51 = arith.constant 0 : index
      %93 = vector.load %arg2[%c0_49, %c0_50, %c0_51] : memref<1x256x128xf32, #tpu.memory_space<vmem>>, vector<1x256x128xf32>
      %94 = vector.shape_cast %93 : vector<1x256x128xf32> to vector<256x128xf32>
      %95 = arith.truncf %94 : vector<256x128xf32> to vector<256x128xbf16>
      %c0_52 = arith.constant 0 : index
      %c128_53 = arith.constant 128 : index
      %96 = vector.load %arg3[%c0_52, %c128_53] : memref<128x384xbf16, #tpu.memory_space<vmem>>, vector<128x256xbf16>
      %cst_54 = arith.constant dense<0.000000e+00> : vector<256x256xf32>
      %97 = tpu.matmul %95, %96, %cst_54 {dimension_numbers = #tpu.dot_dimension_numbers<[1], [0], [0], [1], [0, 0, 1, 1], [], []>} : vector<256x128xbf16>, vector<128x256xbf16>, vector<256x256xf32> -> vector<256x256xf32>
      %c0_55 = arith.constant 0 : index
      %c128_56 = arith.constant 128 : index
      %98 = vector.load %arg4[%c0_55, %c128_56] : memref<1x384xf32, #tpu.memory_space<vmem>>, vector<1x256xf32>
      %99 = vector.broadcast %98 : vector<1x256xf32> to vector<256x256xf32>
      %100 = arith.addf %97, %99 : vector<256x256xf32>
      %101 = arith.truncf %100 : vector<256x256xf32> to vector<256x256xbf16>
      %c0_57 = arith.constant 0 : index
      %c0_58 = arith.constant 0 : index
      %102 = vector.load %arg8[%c0_57, %c0_58] : memref<256x256xbf16, #tpu.memory_space<vmem>>, vector<256x256xbf16>
      tpu.vector_store %arg8[%c0_57, %c0_58], %101 {strides = array<i32>} : memref<256x256xbf16, #tpu.memory_space<vmem>>, vector<256x256xbf16>,
    } else {
    }
    %c128_i32 = arith.constant 128 : i32
    %3 = arith.muli %arg1, %c128_i32 : i32
    %4 = tpu.assume_multiple %3, 128 : i32
    %c0 = arith.constant 0 : index
    %5 = arith.index_cast %4 : i32 to index
    %c0_1 = arith.constant 0 : index
    %6 = vector.load %arg2[%c0, %5, %c0_1] : memref<1x256x128xf32, #tpu.memory_space<vmem>>, vector<1x128x128xf32>
    %7 = vector.shape_cast %6 : vector<1x128x128xf32> to vector<128x128xf32>
    %8 = arith.truncf %7 : vector<128x128xf32> to vector<128x128xbf16>
    %c0_2 = arith.constant 0 : index
    %c0_3 = arith.constant 0 : index
    %9 = vector.load %arg3[%c0_2, %c0_3] : memref<128x384xbf16, #tpu.memory_space<vmem>>, vector<128x128xbf16>
    %cst = arith.constant dense<0.000000e+00> : vector<128x128xf32>
    %10 = tpu.matmul %8, %9, %cst {dimension_numbers = #tpu.dot_dimension_numbers<[1], [0], [0], [1], [0, 0, 1, 1], [], []>} : vector<128x128xbf16>, vector<128x128xbf16>, vector<128x128xf32> -> vector<128x128xf32>
    %c0_4 = arith.constant 0 : index
    %c0_5 = arith.constant 0 : index
    %11 = vector.load %arg4[%c0_4, %c0_5] : memref<1x384xf32, #tpu.memory_space<vmem>>, vector<1x128xf32>
    %12 = vector.broadcast %11 : vector<1x128xf32> to vector<128x128xf32>
    %13 = arith.addf %10, %12 : vector<128x128xf32>
    %14 = arith.truncf %13 : vector<128x128xf32> to vector<128x128xbf16>
    %15 = vector.extract_strided_slice %14 {offsets = [0, 0], sizes = [128, 32], strides = [1, 1]} : vector<128x128xbf16> to vector<128x32xbf16>
    %c0_6 = arith.constant 0 : index
    %c0_7 = arith.constant 0 : index
    %16 = vector.load %arg8[%c0_6, %c0_7] : memref<256x256xbf16, #tpu.memory_space<vmem>>, vector<256x32xbf16>
    %c0_8 = arith.constant 0 : index
    %c128 = arith.constant 128 : index
    %17 = vector.load %arg8[%c0_8, %c128] : memref<256x256xbf16, #tpu.memory_space<vmem>>, vector<256x32xbf16>
    %cst_9 = arith.constant dense<0.000000e+00> : vector<128x256xf32>
    %18 = tpu.matmul %15, %16, %cst_9 {dimension_numbers = #tpu.dot_dimension_numbers<[1], [1], [0], [0], [0, 0, 1, 0], [], []>} : vector<128x32xbf16>, vector<256x32xbf16>, vector<128x256xf32> -> vector<128x256xf32>
    %cst_10 = arith.constant dense<0xFF800000> : vector<128xf32>
    %19 = vector.multi_reduction <maximumf>, %18, %cst_10 [1] : vector<128x256xf32> to vector<128xf32>
    %20 = vector.shape_cast %19 : vector<128xf32> to vector<128x1xf32>
    %21 = vector.broadcast %20 : vector<128x1xf32> to vector<128x256xf32>
    %22 = arith.subf %18, %21 : vector<128x256xf32>
    %23 = math.exp %22 : vector<128x256xf32>
    %cst_11 = arith.constant dense<0.000000e+00> : vector<128xf32>
    %24 = vector.multi_reduction <add>, %23, %cst_11 [1] : vector<128x256xf32> to vector<128xf32>
    %25 = vector.shape_cast %24 : vector<128xf32> to vector<128x1xf32>
    %26 = arith.truncf %23 : vector<128x256xf32> to vector<128x256xbf16>
    %cst_12 = arith.constant dense<0.000000e+00> : vector<128x32xf32>
    %27 = tpu.matmul %26, %17, %cst_12 {dimension_numbers = #tpu.dot_dimension_numbers<[1], [0], [0], [1], [0, 0, 1, 1], [], []>} : vector<128x256xbf16>, vector<256x32xbf16>, vector<128x32xf32> -> vector<128x32xf32>
    %28 = tpu.reciprocal %25 : vector<128x1xf32> -> vector<128x1xf32>
    %29 = vector.broadcast %28 : vector<128x1xf32> to vector<128x32xf32>
    %30 = arith.mulf %27, %29 : vector<128x32xf32>
    %c0_13 = arith.constant 0 : index
    %c0_14 = arith.constant 0 : index
    %31 = vector.load %arg9[%c0_13, %c0_14] : memref<128x128xf32, #tpu.memory_space<vmem>>, vector<128x32xf32>
    tpu.vector_store %arg9[%c0_13, %c0_14], %30 {strides = array<i32>} : memref<128x128xf32, #tpu.memory_space<vmem>>, vector<128x32xf32>,
    %32 = vector.extract_strided_slice %14 {offsets = [0, 32], sizes = [128, 32], strides = [1, 1]} : vector<128x128xbf16> to vector<128x32xbf16>
    %c0_15 = arith.constant 0 : index
    %c32 = arith.constant 32 : index
    %33 = vector.load %arg8[%c0_15, %c32] : memref<256x256xbf16, #tpu.memory_space<vmem>>, vector<256x32xbf16>
    %c0_16 = arith.constant 0 : index
    %c160 = arith.constant 160 : index
    %34 = vector.load %arg8[%c0_16, %c160] : memref<256x256xbf16, #tpu.memory_space<vmem>>, vector<256x32xbf16>
    %cst_17 = arith.constant dense<0.000000e+00> : vector<128x256xf32>
    %35 = tpu.matmul %32, %33, %cst_17 {dimension_numbers = #tpu.dot_dimension_numbers<[1], [1], [0], [0], [0, 0, 1, 0], [], []>} : vector<128x32xbf16>, vector<256x32xbf16>, vector<128x256xf32> -> vector<128x256xf32>
    %cst_18 = arith.constant dense<0xFF800000> : vector<128xf32>
    %36 = vector.multi_reduction <maximumf>, %35, %cst_18 [1] : vector<128x256xf32> to vector<128xf32>
    %37 = vector.shape_cast %36 : vector<128xf32> to vector<128x1xf32>
    %38 = vector.broadcast %37 : vector<128x1xf32> to vector<128x256xf32>
    %39 = arith.subf %35, %38 : vector<128x256xf32>
    %40 = math.exp %39 : vector<128x256xf32>
    %cst_19 = arith.constant dense<0.000000e+00> : vector<128xf32>
    %41 = vector.multi_reduction <add>, %40, %cst_19 [1] : vector<128x256xf32> to vector<128xf32>
    %42 = vector.shape_cast %41 : vector<128xf32> to vector<128x1xf32>
    %43 = arith.truncf %40 : vector<128x256xf32> to vector<128x256xbf16>
    %cst_20 = arith.constant dense<0.000000e+00> : vector<128x32xf32>
    %44 = tpu.matmul %43, %34, %cst_20 {dimension_numbers = #tpu.dot_dimension_numbers<[1], [0], [0], [1], [0, 0, 1, 1], [], []>} : vector<128x256xbf16>, vector<256x32xbf16>, vector<128x32xf32> -> vector<128x32xf32>
    %45 = tpu.reciprocal %42 : vector<128x1xf32> -> vector<128x1xf32>
    %46 = vector.broadcast %45 : vector<128x1xf32> to vector<128x32xf32>
    %47 = arith.mulf %44, %46 : vector<128x32xf32>
    %c0_21 = arith.constant 0 : index
    %c32_22 = arith.constant 32 : index
    %48 = vector.load %arg9[%c0_21, %c32_22] : memref<128x128xf32, #tpu.memory_space<vmem>>, vector<128x32xf32>
    tpu.vector_store %arg9[%c0_21, %c32_22], %47 {strides = array<i32>} : memref<128x128xf32, #tpu.memory_space<vmem>>, vector<128x32xf32>,
    %49 = vector.extract_strided_slice %14 {offsets = [0, 64], sizes = [128, 32], strides = [1, 1]} : vector<128x128xbf16> to vector<128x32xbf16>
    %c0_23 = arith.constant 0 : index
    %c64 = arith.constant 64 : index
    %50 = vector.load %arg8[%c0_23, %c64] : memref<256x256xbf16, #tpu.memory_space<vmem>>, vector<256x32xbf16>
    %c0_24 = arith.constant 0 : index
    %c192 = arith.constant 192 : index
    %51 = vector.load %arg8[%c0_24, %c192] : memref<256x256xbf16, #tpu.memory_space<vmem>>, vector<256x32xbf16>
    %cst_25 = arith.constant dense<0.000000e+00> : vector<128x256xf32>
    %52 = tpu.matmul %49, %50, %cst_25 {dimension_numbers = #tpu.dot_dimension_numbers<[1], [1], [0], [0], [0, 0, 1, 0], [], []>} : vector<128x32xbf16>, vector<256x32xbf16>, vector<128x256xf32> -> vector<128x256xf32>
    %cst_26 = arith.constant dense<0xFF800000> : vector<128xf32>
    %53 = vector.multi_reduction <maximumf>, %52, %cst_26 [1] : vector<128x256xf32> to vector<128xf32>
    %54 = vector.shape_cast %53 : vector<128xf32> to vector<128x1xf32>
    %55 = vector.broadcast %54 : vector<128x1xf32> to vector<128x256xf32>
    %56 = arith.subf %52, %55 : vector<128x256xf32>
    %57 = math.exp %56 : vector<128x256xf32>
    %cst_27 = arith.constant dense<0.000000e+00> : vector<128xf32>
    %58 = vector.multi_reduction <add>, %57, %cst_27 [1] : vector<128x256xf32> to vector<128xf32>
    %59 = vector.shape_cast %58 : vector<128xf32> to vector<128x1xf32>
    %60 = arith.truncf %57 : vector<128x256xf32> to vector<128x256xbf16>
    %cst_28 = arith.constant dense<0.000000e+00> : vector<128x32xf32>
    %61 = tpu.matmul %60, %51, %cst_28 {dimension_numbers = #tpu.dot_dimension_numbers<[1], [0], [0], [1], [0, 0, 1, 1], [], []>} : vector<128x256xbf16>, vector<256x32xbf16>, vector<128x32xf32> -> vector<128x32xf32>
    %62 = tpu.reciprocal %59 : vector<128x1xf32> -> vector<128x1xf32>
    %63 = vector.broadcast %62 : vector<128x1xf32> to vector<128x32xf32>
    %64 = arith.mulf %61, %63 : vector<128x32xf32>
    %c0_29 = arith.constant 0 : index
    %c64_30 = arith.constant 64 : index
    %65 = vector.load %arg9[%c0_29, %c64_30] : memref<128x128xf32, #tpu.memory_space<vmem>>, vector<128x32xf32>
    tpu.vector_store %arg9[%c0_29, %c64_30], %64 {strides = array<i32>} : memref<128x128xf32, #tpu.memory_space<vmem>>, vector<128x32xf32>,
    %66 = vector.extract_strided_slice %14 {offsets = [0, 96], sizes = [128, 32], strides = [1, 1]} : vector<128x128xbf16> to vector<128x32xbf16>
    %c0_31 = arith.constant 0 : index
    %c96 = arith.constant 96 : index
    %67 = vector.load %arg8[%c0_31, %c96] : memref<256x256xbf16, #tpu.memory_space<vmem>>, vector<256x32xbf16>
    %c0_32 = arith.constant 0 : index
    %c224 = arith.constant 224 : index
    %68 = vector.load %arg8[%c0_32, %c224] : memref<256x256xbf16, #tpu.memory_space<vmem>>, vector<256x32xbf16>
    %cst_33 = arith.constant dense<0.000000e+00> : vector<128x256xf32>
    %69 = tpu.matmul %66, %67, %cst_33 {dimension_numbers = #tpu.dot_dimension_numbers<[1], [1], [0], [0], [0, 0, 1, 0], [], []>} : vector<128x32xbf16>, vector<256x32xbf16>, vector<128x256xf32> -> vector<128x256xf32>
    %cst_34 = arith.constant dense<0xFF800000> : vector<128xf32>
    %70 = vector.multi_reduction <maximumf>, %69, %cst_34 [1] : vector<128x256xf32> to vector<128xf32>
    %71 = vector.shape_cast %70 : vector<128xf32> to vector<128x1xf32>
    %72 = vector.broadcast %71 : vector<128x1xf32> to vector<128x256xf32>
    %73 = arith.subf %69, %72 : vector<128x256xf32>
    %74 = math.exp %73 : vector<128x256xf32>
    %cst_35 = arith.constant dense<0.000000e+00> : vector<128xf32>
    %75 = vector.multi_reduction <add>, %74, %cst_35 [1] : vector<128x256xf32> to vector<128xf32>
    %76 = vector.shape_cast %75 : vector<128xf32> to vector<128x1xf32>
    %77 = arith.truncf %74 : vector<128x256xf32> to vector<128x256xbf16>
    %cst_36 = arith.constant dense<0.000000e+00> : vector<128x32xf32>
    %78 = tpu.matmul %77, %68, %cst_36 {dimension_numbers = #tpu.dot_dimension_numbers<[1], [0], [0], [1], [0, 0, 1, 1], [], []>} : vector<128x256xbf16>, vector<256x32xbf16>, vector<128x32xf32> -> vector<128x32xf32>
    %79 = tpu.reciprocal %76 : vector<128x1xf32> -> vector<128x1xf32>
    %80 = vector.broadcast %79 : vector<128x1xf32> to vector<128x32xf32>
    %81 = arith.mulf %78, %80 : vector<128x32xf32>
    %c0_37 = arith.constant 0 : index
    %c96_38 = arith.constant 96 : index
    %82 = vector.load %arg9[%c0_37, %c96_38] : memref<128x128xf32, #tpu.memory_space<vmem>>, vector<128x32xf32>
    tpu.vector_store %arg9[%c0_37, %c96_38], %81 {strides = array<i32>} : memref<128x128xf32, #tpu.memory_space<vmem>>, vector<128x32xf32>,
    %c0_39 = arith.constant 0 : index
    %c0_40 = arith.constant 0 : index
    %83 = vector.load %arg9[%c0_39, %c0_40] : memref<128x128xf32, #tpu.memory_space<vmem>>, vector<128x128xf32>
    %84 = arith.truncf %83 : vector<128x128xf32> to vector<128x128xbf16>
    %c0_41 = arith.constant 0 : index
    %c0_42 = arith.constant 0 : index
    %85 = vector.load %arg5[%c0_41, %c0_42] : memref<128x128xbf16, #tpu.memory_space<vmem>>, vector<128x128xbf16>
    %cst_43 = arith.constant dense<0.000000e+00> : vector<128x128xf32>
    %86 = tpu.matmul %84, %85, %cst_43 {dimension_numbers = #tpu.dot_dimension_numbers<[1], [0], [0], [1], [0, 0, 1, 1], [], []>} : vector<128x128xbf16>, vector<128x128xbf16>, vector<128x128xf32> -> vector<128x128xf32>
    %c0_44 = arith.constant 0 : index
    %c0_45 = arith.constant 0 : index
    %87 = vector.load %arg6[%c0_44, %c0_45] : memref<1x128xf32, #tpu.memory_space<vmem>>, vector<1x128xf32>
    %88 = vector.broadcast %87 : vector<1x128xf32> to vector<128x128xf32>
    %89 = arith.addf %86, %88 : vector<128x128xf32>
    %c0_46 = arith.constant 0 : index
    %c0_47 = arith.constant 0 : index
    %c0_48 = arith.constant 0 : index
    %90 = vector.load %arg7[%c0_46, %c0_47, %c0_48] : memref<1x128x128xf32, #tpu.memory_space<vmem>>, vector<1x128x128xf32>
    %91 = vector.shape_cast %90 : vector<1x128x128xf32> to vector<128x128xf32>
    %92 = vector.shape_cast %89 : vector<128x128xf32> to vector<1x128x128xf32>
    tpu.vector_store %arg7[%c0_46, %c0_47, %c0_48], %92 {strides = array<i32>} : memref<1x128x128xf32, #tpu.memory_space<vmem>>, vector<1x128x128xf32>,
    return
  }
  func.func @transform_0(%arg0: i32, %arg1: i32) -> (i32, i32, i32) {
    %c0_i32 = arith.constant 0 : i32
    %c0_i32_0 = arith.constant 0 : i32
    %c0_i32_1 = arith.constant 0 : i32
    return %arg0, %c0_i32, %c0_i32_0 : i32, i32, i32
  }
  func.func @transform_1(%arg0: i32, %arg1: i32) -> (i32, i32) {
    %c0_i32 = arith.constant 0 : i32
    %c0_i32_0 = arith.constant 0 : i32
    %c0_i32_1 = arith.constant 0 : i32
    return %c0_i32, %c0_i32_0 : i32, i32
  }
  func.func @transform_2(%arg0: i32, %arg1: i32) -> (i32, i32) {
    %c0_i32 = arith.constant 0 : i32
    %c0_i32_0 = arith.constant 0 : i32
    %c0_i32_1 = arith.constant 0 : i32
    return %c0_i32, %c0_i32_0 : i32, i32
  }
  func.func @transform_3(%arg0: i32, %arg1: i32) -> (i32, i32) {
    %c0_i32 = arith.constant 0 : i32
    %c0_i32_0 = arith.constant 0 : i32
    %c0_i32_1 = arith.constant 0 : i32
    return %c0_i32, %c0_i32_0 : i32, i32
  }
  func.func @transform_4(%arg0: i32, %arg1: i32) -> (i32, i32) {
    %c0_i32 = arith.constant 0 : i32
    %c0_i32_0 = arith.constant 0 : i32
    %c0_i32_1 = arith.constant 0 : i32
    return %c0_i32, %c0_i32_0 : i32, i32
  }
  func.func @transform_5(%arg0: i32, %arg1: i32) -> (i32, i32, i32) {
    %c0_i32 = arith.constant 0 : i32
    %c0_i32_0 = arith.constant 0 : i32
    return %arg0, %arg1, %c0_i32 : i32, i32, i32
  }
}

</mosaic_0001>

<llo_original>
// kernel: tpu_custom_call.1
$region0: #{tpu_custom_call.1}
  #allocation0 [shape = 'u32[]', space=smem, size = 0x4, offset = 0x4, fixed_abs, tag = 'smem constant byte address 0x4 - core index']
  #allocation1 [shape = 'u32[144,128]{1,0:T(1,128)}', space=vmem, size = 0x12000, scoped, tag = 'internal scratch']
  #allocation2 [shape = 'bf16[256,256]{1,0:T(8,128)(2,1)}', space=vmem, size = 0x20000, scoped, tag = 'scratch operand']
  #allocation3 [shape = 'f32[128,128]{1,0:T(8,128)}', space=vmem, size = 0x10000, scoped, tag = 'scratch operand']
  %s0 = inlined_call_operand.hbm [shape: f32[2,256,128], index: 0, kind: input, shape index: {}]
  %s1 = inlined_call_operand.hbm [shape: bf16[128,384], index: 1, kind: input, shape index: {}]
  %s2 = inlined_call_operand.vmem [shape: f32[1,384], index: 2, kind: input, shape index: {}]
  %s3 = inlined_call_operand.hbm [shape: bf16[128,128], index: 3, kind: input, shape index: {}]
  %s4 = inlined_call_operand.vmem [shape: f32[1,128], index: 4, kind: input, shape index: {}]
  %s5 = inlined_call_operand.hbm [shape: f32[2,256,128], index: 5, kind: output, shape index: {}]
  %s6 = sld [smem:[#allocation0]]
  $region69: #{tpu_custom_call.1} parent=0
    _
  %s8 = ssub.s32 1, %s6
  %s9 = scalar_select 0, %s8, %s6
  $region1: #{tpu_custom_call.1} parent=0
    #allocation4 [shape = 'u8[262144]{0}', space=vmem, size = 0x40000, scoped, tag = 'input window, operand 0']
    #allocation5 [shape = 's32[2]{0}', space=sflag, size = 0x8, scoped, tag = 'scoped memory for tpu_custom_call.1']
    #allocation6 [shape = 's32[2]{0}', space=sflag, size = 0x8, scoped, tag = 'scoped memory for tpu_custom_call.1']
    #allocation7 [shape = 'u8[98304]{0}', space=vmem, size = 0x18000, scoped, tag = 'input window, operand 1, single buffered']
    #allocation8 [shape = 's32[1]{0}', space=sflag, size = 0x4, scoped, tag = 'scoped memory for tpu_custom_call.1']
    #allocation9 [shape = 'u8[32768]{0}', space=vmem, size = 0x8000, scoped, tag = 'input window, operand 3, single buffered']
    #allocation10 [shape = 'u8[131072]{0}', space=vmem, size = 0x20000, scoped, tag = 'output window, operand 0']
    %10 = vsyncpa [#allocation5], 0
    %s11 = scalar_lea.sflag [#allocation5], 1
    %12 = vsyncpa %s11, 0
    %13 = vsyncpa [#allocation8], 0
    %14 = vsyncpa [#allocation6], 0
    %s15 = scalar_lea.sflag [#allocation6], 1
    %16 = vsyncpa %s15, 0
    loop: start=0, step=1, limit=6
    $region2: #{tpu_custom_call.1} parent=1 // loop_pre_header
      _
    $region3: #{tpu_custom_call.1} parent=1 // loop_header
      %s18 = sphi 0, %s22
      %p19 = scmp.ge.s32.totalorder %s18, 6
      %s25 = sphi 0, %s37
      %s26 = sphi 0, %s33
      %s27 = sphi 0, %s25
      %s28 = sphi 0, %s26
      %s29 = sphi 0, %s27
      %s30 = sphi 0, %s28
      %s40 = sphi 0, %s42
      %s43 = sphi 0, %s40
      %s44 = sphi 0, %s43
      %s60 = sphi 0, %s44
      %s64 = sphi 0, %s64
      %s66 = sphi 0, %s64
      %s67 = sphi 0, %s66
      %s81 = sphi 0, %s67
      %s85 = sphi 0, %s85
      %s87 = sphi 0, %s85
      %s88 = sphi 0, %s87
      %s102 = sphi 0, %s88
      %s106 = sphi 0, %s106
      %s108 = sphi 0, %s106
      %s109 = sphi 0, %s108
      %s123 = sphi 0, %s109
      %s127 = sphi 0, %s127
      %s129 = sphi 0, %s127
      %s130 = sphi 0, %s129
      %s144 = sphi 0, %s130
      %s152 = sphi 0, %s154
      %s155 = sphi 0, %s152
      %s156 = sphi 0, %s155
      %s172 = sphi 0, %s156
    $region4: #{tpu_custom_call.1} parent=1 // loop_header_branch
      %21 = sbr.rel (%p19) target = $region8
    $region5: #{tpu_custom_call.1} parent=1 // loop_body
      %s23 = ssub.s32 %s18, 1
      %s24 = ssub.s32 %s18, 2
      %s31 = sadd.s32 1, %s26
      %p32 = scmp.ge.s32.totalorder %s31, 2
      %s33 = scalar_select %p32, 0, %s31
      %s34 = sadd.s32 1, %s25
      %s35 = scalar_select %p32, %s34, %s25
      %p36 = scmp.ge.s32.totalorder %s35, 2
      %s37 = scalar_select %p36, 0, %s35
      %s38 = ssub.s32 %s25, %s37
      %p39 = scmp.eq.s32.totalorder %s38, 0
      %s41 = sadd.s32 %s40, 1
      %s42 = scalar_select %p39, %s40, %s41
      %p45 = pneg %p39
      %p46 = scmp.eq.s32.totalorder %s18, 3
      %p47 = por %p45, %p46
      %p48 = scmp.ne.s32.totalorder %s40, %s43
      %p49 = scmp.eq.s32.totalorder %s18, 0
      %p50 = por %p48, %p49
      %p51 = scmp.ne.s32.totalorder %s40, %s43
      %p52 = scmp.eq.s32.totalorder %s23, 3
      %p53 = por %p51, %p52
      %p54 = scmp.ne.s32.totalorder %s43, %s44
      %p55 = scmp.eq.s32.totalorder %s23, 0
      %p56 = por %p54, %p55
      %p57 = scmp.ne.s32.totalorder %s43, %s44
      %p58 = scmp.eq.s32.totalorder %s24, 3
      %p59 = por %p57, %p58
      %p61 = scmp.ne.s32.totalorder %s44, %s60
      %p62 = scmp.eq.s32.totalorder %s24, 0
      %p63 = por %p61, %p62
      %s65 = sadd.s32 %s64, 1
      %p68 = scmp.eq.s32.totalorder %s18, 3
      %p69 = scmp.ne.s32.totalorder %s64, %s66
      %p70 = scmp.eq.s32.totalorder %s18, 0
      %p71 = por %p69, %p70
      %p72 = scmp.ne.s32.totalorder %s64, %s66
      %p73 = scmp.eq.s32.totalorder %s23, 3
      %p74 = por %p72, %p73
      %p75 = scmp.ne.s32.totalorder %s66, %s67
      %p76 = scmp.eq.s32.totalorder %s23, 0
      %p77 = por %p75, %p76
      %p78 = scmp.ne.s32.totalorder %s66, %s67
      %p79 = scmp.eq.s32.totalorder %s24, 3
      %p80 = por %p78, %p79
      %p82 = scmp.ne.s32.totalorder %s67, %s81
      %p83 = scmp.eq.s32.totalorder %s24, 0
      %p84 = por %p82, %p83
      %s86 = sadd.s32 %s85, 1
      %p89 = scmp.eq.s32.totalorder %s18, 3
      %p90 = scmp.ne.s32.totalorder %s85, %s87
      %p91 = scmp.eq.s32.totalorder %s18, 0
      %p92 = por %p90, %p91
      %p93 = scmp.ne.s32.totalorder %s85, %s87
      %p94 = scmp.eq.s32.totalorder %s23, 3
      %p95 = por %p93, %p94
      %p96 = scmp.ne.s32.totalorder %s87, %s88
      %p97 = scmp.eq.s32.totalorder %s23, 0
      %p98 = por %p96, %p97
      %p99 = scmp.ne.s32.totalorder %s87, %s88
      %p100 = scmp.eq.s32.totalorder %s24, 3
      %p101 = por %p99, %p100
      %p103 = scmp.ne.s32.totalorder %s88, %s102
      %p104 = scmp.eq.s32.totalorder %s24, 0
      %p105 = por %p103, %p104
      %s107 = sadd.s32 %s106, 1
      %p110 = scmp.eq.s32.totalorder %s18, 3
      %p111 = scmp.ne.s32.totalorder %s106, %s108
      %p112 = scmp.eq.s32.totalorder %s18, 0
      %p113 = por %p111, %p112
      %p114 = scmp.ne.s32.totalorder %s106, %s108
      %p115 = scmp.eq.s32.totalorder %s23, 3
      %p116 = por %p114, %p115
      %p117 = scmp.ne.s32.totalorder %s108, %s109
      %p118 = scmp.eq.s32.totalorder %s23, 0
      %p119 = por %p117, %p118
      %p120 = scmp.ne.s32.totalorder %s108, %s109
      %p121 = scmp.eq.s32.totalorder %s24, 3
      %p122 = por %p120, %p121
      %p124 = scmp.ne.s32.totalorder %s109, %s123
      %p125 = scmp.eq.s32.totalorder %s24, 0
      %p126 = por %p124, %p125
      %s128 = sadd.s32 %s127, 1
      %p131 = scmp.eq.s32.totalorder %s18, 3
      %p132 = scmp.ne.s32.totalorder %s127, %s129
      %p133 = scmp.eq.s32.totalorder %s18, 0
      %p134 = por %p132, %p133
      %p135 = scmp.ne.s32.totalorder %s127, %s129
      %p136 = scmp.eq.s32.totalorder %s23, 3
      %p137 = por %p135, %p136
      %p138 = scmp.ne.s32.totalorder %s129, %s130
      %p139 = scmp.eq.s32.totalorder %s23, 0
      %p140 = por %p138, %p139
      %p141 = scmp.ne.s32.totalorder %s129, %s130
      %p142 = scmp.eq.s32.totalorder %s24, 3
      %p143 = por %p141, %p142
      %p145 = scmp.ne.s32.totalorder %s130, %s144
      %p146 = scmp.eq.s32.totalorder %s24, 0
      %p147 = por %p145, %p146
      %s148 = ssub.s32 %s25, %s37
      %s149 = ssub.s32 %s26, %s33
      %s150 = sor.u32 %s148, %s149
      %p151 = scmp.eq.s32.totalorder %s150, 0
      %s153 = sadd.s32 %s152, 1
      %s154 = scalar_select %p151, %s152, %s153
      %p157 = pneg %p151
      %p158 = scmp.eq.s32.totalorder %s18, 3
      %p159 = por %p157, %p158
      %p160 = scmp.ne.s32.totalorder %s152, %s155
      %p161 = scmp.eq.s32.totalorder %s18, 0
      %p162 = por %p160, %p161
      %p163 = scmp.ne.s32.totalorder %s152, %s155
      %p164 = scmp.eq.s32.totalorder %s23, 3
      %p165 = por %p163, %p164
      %p166 = scmp.ne.s32.totalorder %s155, %s156
      %p167 = scmp.eq.s32.totalorder %s23, 0
      %p168 = por %p166, %p167
      %p169 = scmp.ne.s32.totalorder %s155, %s156
      %p170 = scmp.eq.s32.totalorder %s24, 3
      %p171 = por %p169, %p170
      %p173 = scmp.ne.s32.totalorder %s156, %s172
      %p174 = scmp.eq.s32.totalorder %s24, 0
      %p175 = por %p173, %p174
      %p176 = scmp.le.s32.totalorder 1, %s18
      %p177 = scmp.lt.s32.totalorder %s18, 5
      %p178 = pnand %p176, %p177
      %p179 = pneg %p178
      // Predicated region
      $region9: #{tpu_custom_call.1} parent=5 // pred_check
        _
      $region10: #{tpu_custom_call.1} parent=5 // pred_check_branch
        %181 = sbr.rel (%p178) target = $region12
      $region11: #{tpu_custom_call.1} parent=5 // pred_region
        %s182 = ssub.s32 %s18, 1
        // Predicated region
        $region13: #{tpu_custom_call.1} parent=11 // pred_check
          %p183 = pneg %p77
        $region14: #{tpu_custom_call.1} parent=11 // pred_check_branch
          %185 = sbr.rel (%p183) target = $region16
        $region15: #{tpu_custom_call.1} parent=11 // pred_region
          %s187 = ssub.s32 3072, 3072
          %188 = vsyncadd [#allocation8], %s187
          %s189 = sshll.u32 [#allocation7], 4
          %s190 = int_to_ptr.vmem [resolvable:$true] %s189
          %195 = dma.hbm_to_vmem [thread:$0]  %s1, 3072, %s190, [#allocation8], 192, 192, 12
        $region16: #{tpu_custom_call.1} parent=11 // pred_fallthru
          _
        // Predicated region
        $region17: #{tpu_custom_call.1} parent=11 // pred_check
          %p196 = pneg %p98
        $region18: #{tpu_custom_call.1} parent=11 // pred_check_branch
          %198 = sbr.rel (%p196) target = $region20
        $region19: #{tpu_custom_call.1} parent=11 // pred_region
          _
        $region20: #{tpu_custom_call.1} parent=11 // pred_fallthru
          _
        // Predicated region
        $region21: #{tpu_custom_call.1} parent=11 // pred_check
          %p199 = pneg %p119
        $region22: #{tpu_custom_call.1} parent=11 // pred_check_branch
          %201 = sbr.rel (%p199) target = $region24
        $region23: #{tpu_custom_call.1} parent=11 // pred_region
          %s203 = ssub.s32 1024, 1024
          %204 = vsyncadd [#allocation8], %s203
          %s205 = sshll.u32 [#allocation9], 4
          %s206 = int_to_ptr.vmem [resolvable:$true] %s205
          %211 = dma.hbm_to_vmem [thread:$0]  %s3, 1024, %s206, [#allocation8], 64, 64, 4
        $region24: #{tpu_custom_call.1} parent=11 // pred_fallthru
          _
        // Predicated region
        $region25: #{tpu_custom_call.1} parent=11 // pred_check
          %p212 = pneg %p140
        $region26: #{tpu_custom_call.1} parent=11 // pred_check_branch
          %214 = sbr.rel (%p212) target = $region28
        $region27: #{tpu_custom_call.1} parent=11 // pred_region
          _
        $region28: #{tpu_custom_call.1} parent=11 // pred_fallthru
          _
      $region12: #{tpu_custom_call.1} parent=5 // pred_fallthru
        _
      %p215 = scmp.lt.s32.totalorder %s18, 4
      // Predicated region
      $region29: #{tpu_custom_call.1} parent=5 // pred_check
        %p216 = pneg %p215
      $region30: #{tpu_custom_call.1} parent=5 // pred_check_branch
        %218 = sbr.rel (%p216) target = $region32
      $region31: #{tpu_custom_call.1} parent=5 // pred_region
        // Predicated region
        $region33: #{tpu_custom_call.1} parent=31 // pred_check
          %p219 = pneg %p50
        $region34: #{tpu_custom_call.1} parent=31 // pred_check_branch
          %221 = sbr.rel (%p219) target = $region36
        $region35: #{tpu_custom_call.1} parent=31 // pred_region
          %s222 = sand.u32 %s40, 1
          %s223 = scalar_lea.sflag [#allocation5], %s222
          %s224 = sand.u32 %s40, 1
          %s225 = smul.addr %s224, 256
          %s226 = scalar_lea.vmem [#allocation4], %s225
          %s228 = ssub.s32 4096, 4096
          %229 = vsyncadd %s223, %s228
          %s230 = smul.addr %s25, 32
          %s231 = smul.addr %s230, 128
          %s232 = scalar_lea.hbm %s0, %s231
          %s233 = sshll.u32 %s226, 4
          %s234 = int_to_ptr.vmem [resolvable:$true] %s233
          %239 = dma.hbm_to_vmem [thread:$0]  %s232, 4096, %s234, %s223, 128, 128, 8
        $region36: #{tpu_custom_call.1} parent=31 // pred_fallthru
          _
      $region32: #{tpu_custom_call.1} parent=5 // pred_fallthru
        _
      %p240 = scmp.le.s32.totalorder 1, %s18
      %p241 = scmp.lt.s32.totalorder %s18, 5
      %p242 = pnand %p240, %p241
      %p243 = pneg %p242
      // Predicated region
      $region37: #{tpu_custom_call.1} parent=5 // pred_check
        _
      $region38: #{tpu_custom_call.1} parent=5 // pred_check_branch
        %245 = sbr.rel (%p242) target = $region40
      $region39: #{tpu_custom_call.1} parent=5 // pred_region
        %s246 = ssub.s32 %s18, 1
        %s247 = sand.u32 %s43, 1
        %s248 = scalar_lea.sflag [#allocation5], %s247
        %s249 = sand.u32 %s43, 1
        %s250 = smul.addr %s249, 256
        %s251 = scalar_lea.vmem [#allocation4], %s250
        // Predicated region
        $region41: #{tpu_custom_call.1} parent=39 // pred_check
          %p252 = pneg %p56
        $region42: #{tpu_custom_call.1} parent=39 // pred_check_branch
          %254 = sbr.rel (%p252) target = $region44
        $region43: #{tpu_custom_call.1} parent=39 // pred_region
          %255 = dma.done %s248, 4096
        $region44: #{tpu_custom_call.1} parent=39 // pred_fallthru
          _
        // Predicated region
        $region45: #{tpu_custom_call.1} parent=39 // pred_check
          %p256 = pneg %p77
        $region46: #{tpu_custom_call.1} parent=39 // pred_check_branch
          %258 = sbr.rel (%p256) target = $region48
        $region47: #{tpu_custom_call.1} parent=39 // pred_region
          %259 = dma.done [#allocation8], 3072
        $region48: #{tpu_custom_call.1} parent=39 // pred_fallthru
          _
        // Predicated region
        $region49: #{tpu_custom_call.1} parent=39 // pred_check
          %p260 = pneg %p119
        $region50: #{tpu_custom_call.1} parent=39 // pred_check_branch
          %262 = sbr.rel (%p260) target = $region52
        $region51: #{tpu_custom_call.1} parent=39 // pred_region
          %263 = dma.done [#allocation8], 1024
        $region52: #{tpu_custom_call.1} parent=39 // pred_fallthru
          _
        %s264 = sand.u32 %s43, 1
        %s265 = scalar_lea.sflag [#allocation5], %s264
        %s266 = sand.u32 %s43, 1
        %s267 = smul.addr %s266, 256
        %s268 = scalar_lea.vmem [#allocation4], %s267
        %p269 = pneg %p56
        %p270 = pneg %p53
        %p271 = pneg %p77
        %p272 = pneg %p74
        %p273 = pneg %p98
        %p274 = pneg %p95
        %p275 = pneg %p119
        %p276 = pneg %p116
        %p277 = pneg %p140
        %p278 = pneg %p137
        %p279 = pneg %p168
        %p280 = pneg %p165
        %s281 = sand.u32 %s155, 1
        %s282 = scalar_lea.sflag [#allocation6], %s281
        %s283 = sand.u32 %s155, 1
        %s284 = smul.addr %s283, 128
        %s285 = scalar_lea.vmem [#allocation10], %s284
        %s286 = smul.u32 16, %s28
        %p288 = scmp.eq.s32.totalorder %s28, 0
        // Predicated region
        $region53: #{tpu_custom_call.1} parent=39 // pred_check
          %p289 = pneg %p288
        $region54: #{tpu_custom_call.1} parent=39 // pred_check_branch
          %291 = sbr.rel (%p289) target = $region56
        $region55: #{tpu_custom_call.1} parent=39 // pred_region
          %v292 = vld [vmem:[%s251] sm:$0xff]
          %v293 = vld [vmem:[%s251 + $0x8] sm:$0xff]
          %v294 = vld [vmem:[%s251 + $0x10] sm:$0xff]
          %v295 = vld [vmem:[%s251 + $0x18] sm:$0xff]
          %v296 = vld [vmem:[%s251 + $0x20] sm:$0xff]
          %v297 = vld [vmem:[%s251 + $0x28] sm:$0xff]
          %v298 = vld [vmem:[%s251 + $0x30] sm:$0xff]
          %v299 = vld [vmem:[%s251 + $0x38] sm:$0xff]
          %v300 = vld [vmem:[%s251 + $0x40] sm:$0xff]
          %v301 = vld [vmem:[%s251 + $0x48] sm:$0xff]
          %v302 = vld [vmem:[%s251 + $0x50] sm:$0xff]
          %v303 = vld [vmem:[%s251 + $0x58] sm:$0xff]
          %v304 = vld [vmem:[%s251 + $0x60] sm:$0xff]
          %v305 = vld [vmem:[%s251 + $0x68] sm:$0xff]
          %v306 = vld [vmem:[%s251 + $0x70] sm:$0xff]
          %v307 = vld [vmem:[%s251 + $0x78] sm:$0xff]
          %v308 = vld [vmem:[%s251 + $0x80] sm:$0xff]
          %v309 = vld [vmem:[%s251 + $0x88] sm:$0xff]
          %v310 = vld [vmem:[%s251 + $0x90] sm:$0xff]
          %v311 = vld [vmem:[%s251 + $0x98] sm:$0xff]
          %v312 = vld [vmem:[%s251 + $0xa0] sm:$0xff]
          %v313 = vld [vmem:[%s251 + $0xa8] sm:$0xff]
          %v314 = vld [vmem:[%s251 + $0xb0] sm:$0xff]
          %v315 = vld [vmem:[%s251 + $0xb8] sm:$0xff]
          %v316 = vld [vmem:[%s251 + $0xc0] sm:$0xff]
          %v317 = vld [vmem:[%s251 + $0xc8] sm:$0xff]
          %v318 = vld [vmem:[%s251 + $0xd0] sm:$0xff]
          %v319 = vld [vmem:[%s251 + $0xd8] sm:$0xff]
          %v320 = vld [vmem:[%s251 + $0xe0] sm:$0xff]
          %v321 = vld [vmem:[%s251 + $0xe8] sm:$0xff]
          %v322 = vld [vmem:[%s251 + $0xf0] sm:$0xff]
          %v323 = vld [vmem:[%s251 + $0xf8] sm:$0xff]
          %v324 = vpack.c.bf16 %v293, %v292
          %v325 = vpack.c.bf16 %v295, %v294
          %v326 = vpack.c.bf16 %v297, %v296
          %v327 = vpack.c.bf16 %v299, %v298
          %v328 = vpack.c.bf16 %v301, %v300
          %v329 = vpack.c.bf16 %v303, %v302
          %v330 = vpack.c.bf16 %v305, %v304
          %v331 = vpack.c.bf16 %v307, %v306
          %v332 = vpack.c.bf16 %v309, %v308
          %v333 = vpack.c.bf16 %v311, %v310
          %v334 = vpack.c.bf16 %v313, %v312
          %v335 = vpack.c.bf16 %v315, %v314
          %v336 = vpack.c.bf16 %v317, %v316
          %v337 = vpack.c.bf16 %v319, %v318
          %v338 = vpack.c.bf16 %v321, %v320
          %v339 = vpack.c.bf16 %v323, %v322
          %v340 = vld [vmem:[#allocation7 + $0x4] sm:$0xff]
          %v341 = vld [vmem:[#allocation7 + $0x10] sm:$0xff]
          %v342 = vld [vmem:[#allocation7 + $0x1c] sm:$0xff]
          %v343 = vld [vmem:[#allocation7 + $0x28] sm:$0xff]
          %v344 = vld [vmem:[#allocation7 + $0x34] sm:$0xff]
          %v345 = vld [vmem:[#allocation7 + $0x40] sm:$0xff]
          %v346 = vld [vmem:[#allocation7 + $0x4c] sm:$0xff]
          %v347 = vld [vmem:[#allocation7 + $0x58] sm:$0xff]
          %v348 = vld [vmem:[#allocation7 + $0x64] sm:$0xff]
          %v349 = vld [vmem:[#allocation7 + $0x70] sm:$0xff]
          %v350 = vld [vmem:[#allocation7 + $0x7c] sm:$0xff]
          %v351 = vld [vmem:[#allocation7 + $0x88] sm:$0xff]
          %v352 = vld [vmem:[#allocation7 + $0x94] sm:$0xff]
          %v353 = vld [vmem:[#allocation7 + $0xa0] sm:$0xff]
          %v354 = vld [vmem:[#allocation7 + $0xac] sm:$0xff]
          %v355 = vld [vmem:[#allocation7 + $0xb8] sm:$0xff]
          %v356 = vld [vmem:[%s2 + $0x1] sm:$0x3]
          %v358 = vlaneseq
          %v359 = vshrl.u32 %v358, 7
          %v360 = vsub.s32 0, %v359
          %v361 = vrot.slane %v356, %v360
          %v362 = vlaneseq
          %v363 = vshrl.u32 %v362, 7
          %v364 = vsub.s32 1, %v363
          %v365 = vrot.slane %v356, %v364
          %v384 = vunpack.c.l.b16 %v340
          %v385 = vunpack.c.h.b16 %v340
          %v386 = vunpack.c.l.b16 %v341
          %v387 = vunpack.c.h.b16 %v341
          %v388 = vunpack.c.l.b16 %v342
          %v389 = vunpack.c.h.b16 %v342
          %v390 = vunpack.c.l.b16 %v343
          %v391 = vunpack.c.h.b16 %v343
          %v392 = vunpack.c.l.b16 %v344
          %v393 = vunpack.c.h.b16 %v344
          %v394 = vunpack.c.l.b16 %v345
          %v395 = vunpack.c.h.b16 %v345
          %v396 = vunpack.c.l.b16 %v346
          %v397 = vunpack.c.h.b16 %v346
          %v398 = vunpack.c.l.b16 %v347
          %v399 = vunpack.c.h.b16 %v347
          %v400 = vunpack.c.l.b16 %v348
          %v401 = vunpack.c.h.b16 %v348
          %v402 = vunpack.c.l.b16 %v349
          %v403 = vunpack.c.h.b16 %v349
          %v404 = vunpack.c.l.b16 %v350
          %v405 = vunpack.c.h.b16 %v350
          %v406 = vunpack.c.l.b16 %v351
          %v407 = vunpack.c.h.b16 %v351
          %v408 = vunpack.c.l.b16 %v352
          %v409 = vunpack.c.h.b16 %v352
          %v410 = vunpack.c.l.b16 %v353
          %v411 = vunpack.c.h.b16 %v353
          %v412 = vunpack.c.l.b16 %v354
          %v413 = vunpack.c.h.b16 %v354
          %v414 = vunpack.c.l.b16 %v355
          %v415 = vunpack.c.h.b16 %v355
          %v416 = vpack.c.b16 %v386, %v384
          %v417 = vpack.c.b16 %v387, %v385
          %v418 = vpack.c.b16 %v390, %v388
          %v419 = vpack.c.b16 %v391, %v389
          %v420 = vpack.c.b16 %v394, %v392
          %v421 = vpack.c.b16 %v395, %v393
          %v422 = vpack.c.b16 %v398, %v396
          %v423 = vpack.c.b16 %v399, %v397
          %v424 = vpack.c.b16 %v402, %v400
          %v425 = vpack.c.b16 %v403, %v401
          %v426 = vpack.c.b16 %v406, %v404
          %v427 = vpack.c.b16 %v407, %v405
          %v428 = vpack.c.b16 %v410, %v408
          %v429 = vpack.c.b16 %v411, %v409
          %v430 = vpack.c.b16 %v414, %v412
          %v431 = vpack.c.b16 %v415, %v413
          %448 = vmatprep.subr.bf16.mxu0 %v431
          %449 = vmatpush1.bf16.msra.mxu0 %v430
          %450 = vmatprep.subr.bf16.mxu0 %v429
          %451 = vmatpush1.bf16.msra.mxu0 %v428
          %452 = vmatprep.subr.bf16.mxu0 %v427
          %453 = vmatpush1.bf16.msra.mxu0 %v426
          %454 = vmatprep.subr.bf16.mxu0 %v425
          %455 = vmatpush1.bf16.msra.mxu0 %v424
          %456 = vmatprep.subr.bf16.mxu0 %v423
          %457 = vmatpush1.bf16.msra.mxu0 %v422
          %458 = vmatprep.subr.bf16.mxu0 %v421
          %459 = vmatpush1.bf16.msra.mxu0 %v420
          %460 = vmatprep.subr.bf16.mxu0 %v419
          %461 = vmatpush1.bf16.msra.mxu0 %v418
          %462 = vmatprep.subr.bf16.mxu0 %v417
          %463 = vmatpush1.bf16.msra.mxu0 %v416
          %464 = vmatprep.subr.bf16.mxu0 0
          %465 = vmatpush2.bf16.msra.mxu0 0
          %466 = vmatprep.subr.bf16.mxu0 0
          %467 = vmatpush2.bf16.msra.mxu0 0
          %468 = vmatprep.subr.bf16.mxu0 0
          %469 = vmatpush2.bf16.msra.mxu0 0
          %470 = vmatprep.subr.bf16.mxu0 0
          %471 = vmatpush2.bf16.msra.mxu0 0
          %472 = vmatprep.subr.bf16.mxu0 0
          %473 = vmatpush2.bf16.msra.mxu0 0
          %474 = vmatprep.subr.bf16.mxu0 0
          %475 = vmatpush2.bf16.msra.mxu0 0
          %476 = vmatprep.subr.bf16.mxu0 0
          %477 = vmatpush2.bf16.msra.mxu0 0
          %478 = vmatprep.subr.bf16.mxu0 0
          %479 = vmatpush2.bf16.msra.mxu0 0
          %480 = vmatprep.mubr.bf16.mxu0 0
          %481 = vmatmul.mubr.bf16.gmra.mxu0 %v324
          %v482 = vpop.f32.mrf.mxu0
          %v483 = vadd.f32 %v361, %v482
          %v484 = vpop.f32.mrf.mxu0
          %v485 = vadd.f32 %v365, %v484
          %v486 = vpop.f32.mrf.mxu0
          %v487 = vadd.f32 %v361, %v486
          %v488 = vpop.f32.mrf.mxu0
          %v489 = vadd.f32 %v365, %v488
          %490 = vmatprep.mubr.bf16.mxu0 0
          %491 = vmatmul.mubr.bf16.gmra.mxu0 %v325
          %v492 = vpop.f32.mrf.mxu0
          %v493 = vadd.f32 %v361, %v492
          %v494 = vpop.f32.mrf.mxu0
          %v495 = vadd.f32 %v365, %v494
          %v496 = vpop.f32.mrf.mxu0
          %v497 = vadd.f32 %v361, %v496
          %v498 = vpop.f32.mrf.mxu0
          %v499 = vadd.f32 %v365, %v498
          %500 = vmatprep.mubr.bf16.mxu0 0
          %501 = vmatmul.mubr.bf16.gmra.mxu0 %v326
          %v502 = vpop.f32.mrf.mxu0
          %v503 = vadd.f32 %v361, %v502
          %v504 = vpop.f32.mrf.mxu0
          %v505 = vadd.f32 %v365, %v504
          %v506 = vpop.f32.mrf.mxu0
          %v507 = vadd.f32 %v361, %v506
          %v508 = vpop.f32.mrf.mxu0
          %v509 = vadd.f32 %v365, %v508
          %510 = vmatprep.mubr.bf16.mxu0 0
          %511 = vmatmul.mubr.bf16.gmra.mxu0 %v327
          %v512 = vpop.f32.mrf.mxu0
          %v513 = vadd.f32 %v361, %v512
          %v514 = vpop.f32.mrf.mxu0
          %v515 = vadd.f32 %v365, %v514
          %v516 = vpop.f32.mrf.mxu0
          %v517 = vadd.f32 %v361, %v516
          %v518 = vpop.f32.mrf.mxu0
          %v519 = vadd.f32 %v365, %v518
          %520 = vmatprep.mubr.bf16.mxu0 0
          %521 = vmatmul.mubr.bf16.gmra.mxu0 %v328
          %v522 = vpop.f32.mrf.mxu0
          %v523 = vadd.f32 %v361, %v522
          %v524 = vpop.f32.mrf.mxu0
          %v525 = vadd.f32 %v365, %v524
          %v526 = vpop.f32.mrf.mxu0
          %v527 = vadd.f32 %v361, %v526
          %v528 = vpop.f32.mrf.mxu0
          %v529 = vadd.f32 %v365, %v528
          %530 = vmatprep.mubr.bf16.mxu0 0
          %531 = vmatmul.mubr.bf16.gmra.mxu0 %v329
          %v532 = vpop.f32.mrf.mxu0
          %v533 = vadd.f32 %v361, %v532
          %v534 = vpop.f32.mrf.mxu0
          %v535 = vadd.f32 %v365, %v534
          %v536 = vpop.f32.mrf.mxu0
          %v537 = vadd.f32 %v361, %v536
          %v538 = vpop.f32.mrf.mxu0
          %v539 = vadd.f32 %v365, %v538
          %540 = vmatprep.mubr.bf16.mxu0 0
          %541 = vmatmul.mubr.bf16.gmra.mxu0 %v330
          %v542 = vpop.f32.mrf.mxu0
          %v543 = vadd.f32 %v361, %v542
          %v544 = vpop.f32.mrf.mxu0
          %v545 = vadd.f32 %v365, %v544
          %v546 = vpop.f32.mrf.mxu0
          %v547 = vadd.f32 %v361, %v546
          %v548 = vpop.f32.mrf.mxu0
          %v549 = vadd.f32 %v365, %v548
          %550 = vmatprep.mubr.bf16.mxu0 0
          %551 = vmatmul.mubr.bf16.gmra.mxu0 %v331
          %v552 = vpop.f32.mrf.mxu0
          %v553 = vadd.f32 %v361, %v552
          %v554 = vpop.f32.mrf.mxu0
          %v555 = vadd.f32 %v365, %v554
          %v556 = vpop.f32.mrf.mxu0
          %v557 = vadd.f32 %v361, %v556
          %v558 = vpop.f32.mrf.mxu0
          %v559 = vadd.f32 %v365, %v558
          %560 = vmatprep.mubr.bf16.mxu0 0
          %561 = vmatmul.mubr.bf16.gmra.mxu0 %v332
          %v562 = vpop.f32.mrf.mxu0
          %v563 = vadd.f32 %v361, %v562
          %v564 = vpop.f32.mrf.mxu0
          %v565 = vadd.f32 %v365, %v564
          %v566 = vpop.f32.mrf.mxu0
          %v567 = vadd.f32 %v361, %v566
          %v568 = vpop.f32.mrf.mxu0
          %v569 = vadd.f32 %v365, %v568
          %570 = vmatprep.mubr.bf16.mxu0 0
          %571 = vmatmul.mubr.bf16.gmra.mxu0 %v333
          %v572 = vpop.f32.mrf.mxu0
          %v573 = vadd.f32 %v361, %v572
          %v574 = vpop.f32.mrf.mxu0
          %v575 = vadd.f32 %v365, %v574
          %v576 = vpop.f32.mrf.mxu0
          %v577 = vadd.f32 %v361, %v576
          %v578 = vpop.f32.mrf.mxu0
          %v579 = vadd.f32 %v365, %v578
          %580 = vmatprep.mubr.bf16.mxu0 0
          %581 = vmatmul.mubr.bf16.gmra.mxu0 %v334
          %v582 = vpop.f32.mrf.mxu0
          %v583 = vadd.f32 %v361, %v582
          %v584 = vpop.f32.mrf.mxu0
          %v585 = vadd.f32 %v365, %v584
          %v586 = vpop.f32.mrf.mxu0
          %v587 = vadd.f32 %v361, %v586
          %v588 = vpop.f32.mrf.mxu0
          %v589 = vadd.f32 %v365, %v588
          %590 = vmatprep.mubr.bf16.mxu0 0
          %591 = vmatmul.mubr.bf16.gmra.mxu0 %v335
          %v592 = vpop.f32.mrf.mxu0
          %v593 = vadd.f32 %v361, %v592
          %v594 = vpop.f32.mrf.mxu0
          %v595 = vadd.f32 %v365, %v594
          %v596 = vpop.f32.mrf.mxu0
          %v597 = vadd.f32 %v361, %v596
          %v598 = vpop.f32.mrf.mxu0
          %v599 = vadd.f32 %v365, %v598
          %600 = vmatprep.mubr.bf16.mxu0 0
          %601 = vmatmul.mubr.bf16.gmra.mxu0 %v336
          %v602 = vpop.f32.mrf.mxu0
          %v603 = vadd.f32 %v361, %v602
          %v604 = vpop.f32.mrf.mxu0
          %v605 = vadd.f32 %v365, %v604
          %v606 = vpop.f32.mrf.mxu0
          %v607 = vadd.f32 %v361, %v606
          %v608 = vpop.f32.mrf.mxu0
          %v609 = vadd.f32 %v365, %v608
          %610 = vmatprep.mubr.bf16.mxu0 0
          %611 = vmatmul.mubr.bf16.gmra.mxu0 %v337
          %v612 = vpop.f32.mrf.mxu0
          %v613 = vadd.f32 %v361, %v612
          %v614 = vpop.f32.mrf.mxu0
          %v615 = vadd.f32 %v365, %v614
          %v616 = vpop.f32.mrf.mxu0
          %v617 = vadd.f32 %v361, %v616
          %v618 = vpop.f32.mrf.mxu0
          %v619 = vadd.f32 %v365, %v618
          %620 = vmatprep.mubr.bf16.mxu0 0
          %621 = vmatmul.mubr.bf16.gmra.mxu0 %v338
          %v622 = vpop.f32.mrf.mxu0
          %v623 = vadd.f32 %v361, %v622
          %v624 = vpop.f32.mrf.mxu0
          %v625 = vadd.f32 %v365, %v624
          %v626 = vpop.f32.mrf.mxu0
          %v627 = vadd.f32 %v361, %v626
          %v628 = vpop.f32.mrf.mxu0
          %v629 = vadd.f32 %v365, %v628
          %630 = vmatprep.mubr.bf16.mxu0 0
          %631 = vmatmul.mubr.bf16.gmra.mxu0 %v339
          %v632 = vpop.f32.mrf.mxu0
          %v633 = vadd.f32 %v361, %v632
          %v634 = vpop.f32.mrf.mxu0
          %v635 = vadd.f32 %v365, %v634
          %v636 = vpop.f32.mrf.mxu0
          %v637 = vadd.f32 %v361, %v636
          %v638 = vpop.f32.mrf.mxu0
          %v639 = vadd.f32 %v365, %v638
          %640 = vdwg.mxu0
          %v641 = vpack.c.bf16 %v487, %v483
          %v642 = vpack.c.bf16 %v489, %v485
          %v643 = vpack.c.bf16 %v497, %v493
          %v644 = vpack.c.bf16 %v499, %v495
          %v645 = vpack.c.bf16 %v507, %v503
          %v646 = vpack.c.bf16 %v509, %v505
          %v647 = vpack.c.bf16 %v517, %v513
          %v648 = vpack.c.bf16 %v519, %v515
          %v649 = vpack.c.bf16 %v527, %v523
          %v650 = vpack.c.bf16 %v529, %v525
          %v651 = vpack.c.bf16 %v537, %v533
          %v652 = vpack.c.bf16 %v539, %v535
          %v653 = vpack.c.bf16 %v547, %v543
          %v654 = vpack.c.bf16 %v549, %v545
          %v655 = vpack.c.bf16 %v557, %v553
          %v656 = vpack.c.bf16 %v559, %v555
          %v657 = vpack.c.bf16 %v567, %v563
          %v658 = vpack.c.bf16 %v569, %v565
          %v659 = vpack.c.bf16 %v577, %v573
          %v660 = vpack.c.bf16 %v579, %v575
          %v661 = vpack.c.bf16 %v587, %v583
          %v662 = vpack.c.bf16 %v589, %v585
          %v663 = vpack.c.bf16 %v597, %v593
          %v664 = vpack.c.bf16 %v599, %v595
          %v665 = vpack.c.bf16 %v607, %v603
          %v666 = vpack.c.bf16 %v609, %v605
          %v667 = vpack.c.bf16 %v617, %v613
          %v668 = vpack.c.bf16 %v619, %v615
          %v669 = vpack.c.bf16 %v627, %v623
          %v670 = vpack.c.bf16 %v629, %v625
          %v671 = vpack.c.bf16 %v637, %v633
          %v672 = vpack.c.bf16 %v639, %v635
          %v705 = vunpack.c.l.b16 %v641
          %v706 = vunpack.c.l.b16 %v642
          %v707 = vunpack.c.h.b16 %v641
          %v708 = vunpack.c.h.b16 %v642
          %v709 = vunpack.c.l.b16 %v643
          %v710 = vunpack.c.l.b16 %v644
          %v711 = vunpack.c.h.b16 %v643
          %v712 = vunpack.c.h.b16 %v644
          %v713 = vunpack.c.l.b16 %v645
          %v714 = vunpack.c.l.b16 %v646
          %v715 = vunpack.c.h.b16 %v645
          %v716 = vunpack.c.h.b16 %v646
          %v717 = vunpack.c.l.b16 %v647
          %v718 = vunpack.c.l.b16 %v648
          %v719 = vunpack.c.h.b16 %v647
          %v720 = vunpack.c.h.b16 %v648
          %v721 = vunpack.c.l.b16 %v649
          %v722 = vunpack.c.l.b16 %v650
          %v723 = vunpack.c.h.b16 %v649
          %v724 = vunpack.c.h.b16 %v650
          %v725 = vunpack.c.l.b16 %v651
          %v726 = vunpack.c.l.b16 %v652
          %v727 = vunpack.c.h.b16 %v651
          %v728 = vunpack.c.h.b16 %v652
          %v729 = vunpack.c.l.b16 %v653
          %v730 = vunpack.c.l.b16 %v654
          %v731 = vunpack.c.h.b16 %v653
          %v732 = vunpack.c.h.b16 %v654
          %v733 = vunpack.c.l.b16 %v655
          %v734 = vunpack.c.l.b16 %v656
          %v735 = vunpack.c.h.b16 %v655
          %v736 = vunpack.c.h.b16 %v656
          %v737 = vunpack.c.l.b16 %v657
          %v738 = vunpack.c.l.b16 %v658
          %v739 = vunpack.c.h.b16 %v657
          %v740 = vunpack.c.h.b16 %v658
          %v741 = vunpack.c.l.b16 %v659
          %v742 = vunpack.c.l.b16 %v660
          %v743 = vunpack.c.h.b16 %v659
          %v744 = vunpack.c.h.b16 %v660
          %v745 = vunpack.c.l.b16 %v661
          %v746 = vunpack.c.l.b16 %v662
          %v747 = vunpack.c.h.b16 %v661
          %v748 = vunpack.c.h.b16 %v662
          %v749 = vunpack.c.l.b16 %v663
          %v750 = vunpack.c.l.b16 %v664
          %v751 = vunpack.c.h.b16 %v663
          %v752 = vunpack.c.h.b16 %v664
          %v753 = vunpack.c.l.b16 %v665
          %v754 = vunpack.c.l.b16 %v666
          %v755 = vunpack.c.h.b16 %v665
          %v756 = vunpack.c.h.b16 %v666
          %v757 = vunpack.c.l.b16 %v667
          %v758 = vunpack.c.l.b16 %v668
          %v759 = vunpack.c.h.b16 %v667
          %v760 = vunpack.c.h.b16 %v668
          %v761 = vunpack.c.l.b16 %v669
          %v762 = vunpack.c.l.b16 %v670
          %v763 = vunpack.c.h.b16 %v669
          %v764 = vunpack.c.h.b16 %v670
          %v765 = vunpack.c.l.b16 %v671
          %v766 = vunpack.c.l.b16 %v672
          %v767 = vunpack.c.h.b16 %v671
          %v768 = vunpack.c.h.b16 %v672
          %v769 = vpack.c.b16 %v706, %v705
          %v770 = vpack.c.b16 %v708, %v707
          %v771 = vpack.c.b16 %v710, %v709
          %v772 = vpack.c.b16 %v712, %v711
          %v773 = vpack.c.b16 %v714, %v713
          %v774 = vpack.c.b16 %v716, %v715
          %v775 = vpack.c.b16 %v718, %v717
          %v776 = vpack.c.b16 %v720, %v719
          %v777 = vpack.c.b16 %v722, %v721
          %v778 = vpack.c.b16 %v724, %v723
          %v779 = vpack.c.b16 %v726, %v725
          %v780 = vpack.c.b16 %v728, %v727
          %v781 = vpack.c.b16 %v730, %v729
          %v782 = vpack.c.b16 %v732, %v731
          %v783 = vpack.c.b16 %v734, %v733
          %v784 = vpack.c.b16 %v736, %v735
          %v785 = vpack.c.b16 %v738, %v737
          %v786 = vpack.c.b16 %v740, %v739
          %v787 = vpack.c.b16 %v742, %v741
          %v788 = vpack.c.b16 %v744, %v743
          %v789 = vpack.c.b16 %v746, %v745
          %v790 = vpack.c.b16 %v748, %v747
          %v791 = vpack.c.b16 %v750, %v749
          %v792 = vpack.c.b16 %v752, %v751
          %v793 = vpack.c.b16 %v754, %v753
          %v794 = vpack.c.b16 %v756, %v755
          %v795 = vpack.c.b16 %v758, %v757
          %v796 = vpack.c.b16 %v760, %v759
          %v797 = vpack.c.b16 %v762, %v761
          %v798 = vpack.c.b16 %v764, %v763
          %v799 = vpack.c.b16 %v766, %v765
          %v800 = vpack.c.b16 %v768, %v767
          %833 = vst [vmem:[#allocation2] sm:$0xff] %v769
          %834 = vst [vmem:[#allocation2 + $0x8] sm:$0xff] %v770
          %835 = vst [vmem:[#allocation2 + $0x10] sm:$0xff] %v771
          %836 = vst [vmem:[#allocation2 + $0x18] sm:$0xff] %v772
          %837 = vst [vmem:[#allocation2 + $0x20] sm:$0xff] %v773
          %838 = vst [vmem:[#allocation2 + $0x28] sm:$0xff] %v774
          %839 = vst [vmem:[#allocation2 + $0x30] sm:$0xff] %v775
          %840 = vst [vmem:[#allocation2 + $0x38] sm:$0xff] %v776
          %841 = vst [vmem:[#allocation2 + $0x40] sm:$0xff] %v777
          %842 = vst [vmem:[#allocation2 + $0x48] sm:$0xff] %v778
          %843 = vst [vmem:[#allocation2 + $0x50] sm:$0xff] %v779
          %844 = vst [vmem:[#allocation2 + $0x58] sm:$0xff] %v780
          %845 = vst [vmem:[#allocation2 + $0x60] sm:$0xff] %v781
          %846 = vst [vmem:[#allocation2 + $0x68] sm:$0xff] %v782
          %847 = vst [vmem:[#allocation2 + $0x70] sm:$0xff] %v783
          %848 = vst [vmem:[#allocation2 + $0x78] sm:$0xff] %v784
          %849 = vst [vmem:[#allocation2 + $0x80] sm:$0xff] %v785
          %850 = vst [vmem:[#allocation2 + $0x88] sm:$0xff] %v786
          %851 = vst [vmem:[#allocation2 + $0x90] sm:$0xff] %v787
          %852 = vst [vmem:[#allocation2 + $0x98] sm:$0xff] %v788
          %853 = vst [vmem:[#allocation2 + $0xa0] sm:$0xff] %v789
          %854 = vst [vmem:[#allocation2 + $0xa8] sm:$0xff] %v790
          %855 = vst [vmem:[#allocation2 + $0xb0] sm:$0xff] %v791
          %856 = vst [vmem:[#allocation2 + $0xb8] sm:$0xff] %v792
          %857 = vst [vmem:[#allocation2 + $0xc0] sm:$0xff] %v793
          %858 = vst [vmem:[#allocation2 + $0xc8] sm:$0xff] %v794
          %859 = vst [vmem:[#allocation2 + $0xd0] sm:$0xff] %v795
          %860 = vst [vmem:[#allocation2 + $0xd8] sm:$0xff] %v796
          %861 = vst [vmem:[#allocation2 + $0xe0] sm:$0xff] %v797
          %862 = vst [vmem:[#allocation2 + $0xe8] sm:$0xff] %v798
          %863 = vst [vmem:[#allocation2 + $0xf0] sm:$0xff] %v799
          %864 = vst [vmem:[#allocation2 + $0xf8] sm:$0xff] %v800
        $region56: #{tpu_custom_call.1} parent=39 // pred_fallthru
          _
        %s865 = smul.u32 %s28, 128
        %s866 = scalar_lea.vmem %s251, %s865 [#allocation4]
        %v867 = vld [vmem:[%s866] sm:$0xff]
        %v868 = vld [vmem:[%s866 + $0x8] sm:$0xff]
        %v869 = vld [vmem:[%s866 + $0x10] sm:$0xff]
        %v870 = vld [vmem:[%s866 + $0x18] sm:$0xff]
        %v871 = vld [vmem:[%s866 + $0x20] sm:$0xff]
        %v872 = vld [vmem:[%s866 + $0x28] sm:$0xff]
        %v873 = vld [vmem:[%s866 + $0x30] sm:$0xff]
        %v874 = vld [vmem:[%s866 + $0x38] sm:$0xff]
        %v875 = vld [vmem:[%s866 + $0x40] sm:$0xff]
        %v876 = vld [vmem:[%s866 + $0x48] sm:$0xff]
        %v877 = vld [vmem:[%s866 + $0x50] sm:$0xff]
        %v878 = vld [vmem:[%s866 + $0x58] sm:$0xff]
        %v879 = vld [vmem:[%s866 + $0x60] sm:$0xff]
        %v880 = vld [vmem:[%s866 + $0x68] sm:$0xff]
        %v881 = vld [vmem:[%s866 + $0x70] sm:$0xff]
        %v882 = vld [vmem:[%s866 + $0x78] sm:$0xff]
        %v883 = vpack.c.bf16 %v868, %v867
        %v884 = vpack.c.bf16 %v870, %v869
        %v885 = vpack.c.bf16 %v872, %v871
        %v886 = vpack.c.bf16 %v874, %v873
        %v887 = vpack.c.bf16 %v876, %v875
        %v888 = vpack.c.bf16 %v878, %v877
        %v889 = vpack.c.bf16 %v880, %v879
        %v890 = vpack.c.bf16 %v882, %v881
        %v891 = vld [vmem:[#allocation7] sm:$0xf]
        %v892 = vld [vmem:[#allocation7 + $0xc] sm:$0xf]
        %v893 = vld [vmem:[#allocation7 + $0x18] sm:$0xf]
        %v894 = vld [vmem:[#allocation7 + $0x24] sm:$0xf]
        %v895 = vld [vmem:[#allocation7 + $0x30] sm:$0xf]
        %v896 = vld [vmem:[#allocation7 + $0x3c] sm:$0xf]
        %v897 = vld [vmem:[#allocation7 + $0x48] sm:$0xf]
        %v898 = vld [vmem:[#allocation7 + $0x54] sm:$0xf]
        %v899 = vld [vmem:[#allocation7 + $0x60] sm:$0xf]
        %v900 = vld [vmem:[#allocation7 + $0x6c] sm:$0xf]
        %v901 = vld [vmem:[#allocation7 + $0x78] sm:$0xf]
        %v902 = vld [vmem:[#allocation7 + $0x84] sm:$0xf]
        %v903 = vld [vmem:[#allocation7 + $0x90] sm:$0xf]
        %v904 = vld [vmem:[#allocation7 + $0x9c] sm:$0xf]
        %v905 = vld [vmem:[#allocation7 + $0xa8] sm:$0xf]
        %v906 = vld [vmem:[#allocation7 + $0xb4] sm:$0xf]
        %v907 = vld [vmem:[%s2] sm:$0x1]
        %v909 = vlaneseq
        %v910 = vshrl.u32 %v909, 7
        %v911 = vsub.s32 0, %v910
        %v912 = vrot.slane %v907, %v911
        %v930 = vunpack.c.l.b16 %v891
        %v931 = vunpack.c.l.b16 %v892
        %v932 = vunpack.c.l.b16 %v893
        %v933 = vunpack.c.l.b16 %v894
        %v934 = vunpack.c.l.b16 %v895
        %v935 = vunpack.c.l.b16 %v896
        %v936 = vunpack.c.l.b16 %v897
        %v937 = vunpack.c.l.b16 %v898
        %v938 = vunpack.c.l.b16 %v899
        %v939 = vunpack.c.l.b16 %v900
        %v940 = vunpack.c.l.b16 %v901
        %v941 = vunpack.c.l.b16 %v902
        %v942 = vunpack.c.l.b16 %v903
        %v943 = vunpack.c.l.b16 %v904
        %v944 = vunpack.c.l.b16 %v905
        %v945 = vunpack.c.l.b16 %v906
        %v946 = vpack.c.b16 %v931, %v930
        %v947 = vpack.c.b16 %v933, %v932
        %v948 = vpack.c.b16 %v935, %v934
        %v949 = vpack.c.b16 %v937, %v936
        %v950 = vpack.c.b16 %v939, %v938
        %v951 = vpack.c.b16 %v941, %v940
        %v952 = vpack.c.b16 %v943, %v942
        %v953 = vpack.c.b16 %v945, %v944
        %962 = vmatprep.subr.bf16.mxu0 0
        %963 = vmatpush1.bf16.msra.mxu0 %v953
        %964 = vmatprep.subr.bf16.mxu0 0
        %965 = vmatpush1.bf16.msra.mxu0 %v952
        %966 = vmatprep.subr.bf16.mxu0 0
        %967 = vmatpush1.bf16.msra.mxu0 %v951
        %968 = vmatprep.subr.bf16.mxu0 0
        %969 = vmatpush1.bf16.msra.mxu0 %v950
        %970 = vmatprep.subr.bf16.mxu0 0
        %971 = vmatpush1.bf16.msra.mxu0 %v949
        %972 = vmatprep.subr.bf16.mxu0 0
        %973 = vmatpush1.bf16.msra.mxu0 %v948
        %974 = vmatprep.subr.bf16.mxu0 0
        %975 = vmatpush1.bf16.msra.mxu0 %v947
        %976 = vmatprep.subr.bf16.mxu0 0
        %977 = vmatpush1.bf16.msra.mxu0 %v946
        %978 = vmatprep.subr.bf16.mxu0 0
        %979 = vmatpush2.bf16.msra.mxu0 0
        %980 = vmatprep.subr.bf16.mxu0 0
        %981 = vmatpush2.bf16.msra.mxu0 0
        %982 = vmatprep.subr.bf16.mxu0 0
        %983 = vmatpush2.bf16.msra.mxu0 0
        %984 = vmatprep.subr.bf16.mxu0 0
        %985 = vmatpush2.bf16.msra.mxu0 0
        %986 = vmatprep.subr.bf16.mxu0 0
        %987 = vmatpush2.bf16.msra.mxu0 0
        %988 = vmatprep.subr.bf16.mxu0 0
        %989 = vmatpush2.bf16.msra.mxu0 0
        %990 = vmatprep.subr.bf16.mxu0 0
        %991 = vmatpush2.bf16.msra.mxu0 0
        %992 = vmatprep.subr.bf16.mxu0 0
        %993 = vmatpush2.bf16.msra.mxu0 0
        %994 = vmatprep.mubr.bf16.mxu0 0
        %995 = vmatmul.mubr.bf16.gmra.mxu0 %v883
        %v996 = vpop.f32.mrf.mxu0
        %v997 = vadd.f32 %v912, %v996
        %v998 = vpop.f32.mrf.mxu0
        %v999 = vpop.f32.mrf.mxu0
        %v1000 = vadd.f32 %v912, %v999
        %v1001 = vpop.f32.mrf.mxu0
        %1002 = vmatprep.mubr.bf16.mxu0 0
        %1003 = vmatmul.mubr.bf16.gmra.mxu0 %v884
        %v1004 = vpop.f32.mrf.mxu0
        %v1005 = vadd.f32 %v912, %v1004
        %v1006 = vpop.f32.mrf.mxu0
        %v1007 = vpop.f32.mrf.mxu0
        %v1008 = vadd.f32 %v912, %v1007
        %v1009 = vpop.f32.mrf.mxu0
        %1010 = vmatprep.mubr.bf16.mxu0 0
        %1011 = vmatmul.mubr.bf16.gmra.mxu0 %v885
        %v1012 = vpop.f32.mrf.mxu0
        %v1013 = vadd.f32 %v912, %v1012
        %v1014 = vpop.f32.mrf.mxu0
        %v1015 = vpop.f32.mrf.mxu0
        %v1016 = vadd.f32 %v912, %v1015
        %v1017 = vpop.f32.mrf.mxu0
        %1018 = vmatprep.mubr.bf16.mxu0 0
        %1019 = vmatmul.mubr.bf16.gmra.mxu0 %v886
        %v1020 = vpop.f32.mrf.mxu0
        %v1021 = vadd.f32 %v912, %v1020
        %v1022 = vpop.f32.mrf.mxu0
        %v1023 = vpop.f32.mrf.mxu0
        %v1024 = vadd.f32 %v912, %v1023
        %v1025 = vpop.f32.mrf.mxu0
        %1026 = vmatprep.mubr.bf16.mxu0 0
        %1027 = vmatmul.mubr.bf16.gmra.mxu0 %v887
        %v1028 = vpop.f32.mrf.mxu0
        %v1029 = vadd.f32 %v912, %v1028
        %v1030 = vpop.f32.mrf.mxu0
        %v1031 = vpop.f32.mrf.mxu0
        %v1032 = vadd.f32 %v912, %v1031
        %v1033 = vpop.f32.mrf.mxu0
        %1034 = vmatprep.mubr.bf16.mxu0 0
        %1035 = vmatmul.mubr.bf16.gmra.mxu0 %v888
        %v1036 = vpop.f32.mrf.mxu0
        %v1037 = vadd.f32 %v912, %v1036
        %v1038 = vpop.f32.mrf.mxu0
        %v1039 = vpop.f32.mrf.mxu0
        %v1040 = vadd.f32 %v912, %v1039
        %v1041 = vpop.f32.mrf.mxu0
        %1042 = vmatprep.mubr.bf16.mxu0 0
        %1043 = vmatmul.mubr.bf16.gmra.mxu0 %v889
        %v1044 = vpop.f32.mrf.mxu0
        %v1045 = vadd.f32 %v912, %v1044
        %v1046 = vpop.f32.mrf.mxu0
        %v1047 = vpop.f32.mrf.mxu0
        %v1048 = vadd.f32 %v912, %v1047
        %v1049 = vpop.f32.mrf.mxu0
        %1050 = vmatprep.mubr.bf16.mxu0 0
        %1051 = vmatmul.mubr.bf16.gmra.mxu0 %v890
        %v1052 = vpop.f32.mrf.mxu0
        %v1053 = vadd.f32 %v912, %v1052
        %v1054 = vpop.f32.mrf.mxu0
        %v1055 = vpop.f32.mrf.mxu0
        %v1056 = vadd.f32 %v912, %v1055
        %v1057 = vpop.f32.mrf.mxu0
        %1058 = vdwg.mxu0
        %v1059 = vpack.c.bf16 %v1000, %v997
        %v1060 = vpack.c.bf16 %v1008, %v1005
        %v1061 = vpack.c.bf16 %v1016, %v1013
        %v1062 = vpack.c.bf16 %v1024, %v1021
        %v1063 = vpack.c.bf16 %v1032, %v1029
        %v1064 = vpack.c.bf16 %v1040, %v1037
        %v1065 = vpack.c.bf16 %v1048, %v1045
        %v1066 = vpack.c.bf16 %v1056, %v1053
        %v1067 = vld [vmem:[#allocation2] sm:$0xf]
        %v1068 = vld [vmem:[#allocation2 + $0x8] sm:$0xf]
        %v1069 = vld [vmem:[#allocation2 + $0x10] sm:$0xf]
        %v1070 = vld [vmem:[#allocation2 + $0x18] sm:$0xf]
        %v1071 = vld [vmem:[#allocation2 + $0x20] sm:$0xf]
        %v1072 = vld [vmem:[#allocation2 + $0x28] sm:$0xf]
        %v1073 = vld [vmem:[#allocation2 + $0x30] sm:$0xf]
        %v1074 = vld [vmem:[#allocation2 + $0x38] sm:$0xf]
        %v1075 = vld [vmem:[#allocation2 + $0x40] sm:$0xf]
        %v1076 = vld [vmem:[#allocation2 + $0x48] sm:$0xf]
        %v1077 = vld [vmem:[#allocation2 + $0x50] sm:$0xf]
        %v1078 = vld [vmem:[#allocation2 + $0x58] sm:$0xf]
        %v1079 = vld [vmem:[#allocation2 + $0x60] sm:$0xf]
        %v1080 = vld [vmem:[#allocation2 + $0x68] sm:$0xf]
        %v1081 = vld [vmem:[#allocation2 + $0x70] sm:$0xf]
        %v1082 = vld [vmem:[#allocation2 + $0x78] sm:$0xf]
        %v1083 = vld [vmem:[#allocation2 + $0x80] sm:$0xf]
        %v1084 = vld [vmem:[#allocation2 + $0x88] sm:$0xf]
        %v1085 = vld [vmem:[#allocation2 + $0x90] sm:$0xf]
        %v1086 = vld [vmem:[#allocation2 + $0x98] sm:$0xf]
        %v1087 = vld [vmem:[#allocation2 + $0xa0] sm:$0xf]
        %v1088 = vld [vmem:[#allocation2 + $0xa8] sm:$0xf]
        %v1089 = vld [vmem:[#allocation2 + $0xb0] sm:$0xf]
        %v1090 = vld [vmem:[#allocation2 + $0xb8] sm:$0xf]
        %v1091 = vld [vmem:[#allocation2 + $0xc0] sm:$0xf]
        %v1092 = vld [vmem:[#allocation2 + $0xc8] sm:$0xf]
        %v1093 = vld [vmem:[#allocation2 + $0xd0] sm:$0xf]
        %v1094 = vld [vmem:[#allocation2 + $0xd8] sm:$0xf]
        %v1095 = vld [vmem:[#allocation2 + $0xe0] sm:$0xf]
        %v1096 = vld [vmem:[#allocation2 + $0xe8] sm:$0xf]
        %v1097 = vld [vmem:[#allocation2 + $0xf0] sm:$0xf]
        %v1098 = vld [vmem:[#allocation2 + $0xf8] sm:$0xf]
        %v1099 = vld [vmem:[#allocation2 + $0x4] sm:$0xf]
        %v1100 = vld [vmem:[#allocation2 + $0xc] sm:$0xf]
        %v1101 = vld [vmem:[#allocation2 + $0x14] sm:$0xf]
        %v1102 = vld [vmem:[#allocation2 + $0x1c] sm:$0xf]
        %v1103 = vld [vmem:[#allocation2 + $0x24] sm:$0xf]
        %v1104 = vld [vmem:[#allocation2 + $0x2c] sm:$0xf]
        %v1105 = vld [vmem:[#allocation2 + $0x34] sm:$0xf]
        %v1106 = vld [vmem:[#allocation2 + $0x3c] sm:$0xf]
        %v1107 = vld [vmem:[#allocation2 + $0x44] sm:$0xf]
        %v1108 = vld [vmem:[#allocation2 + $0x4c] sm:$0xf]
        %v1109 = vld [vmem:[#allocation2 + $0x54] sm:$0xf]
        %v1110 = vld [vmem:[#allocation2 + $0x5c] sm:$0xf]
        %v1111 = vld [vmem:[#allocation2 + $0x64] sm:$0xf]
        %v1112 = vld [vmem:[#allocation2 + $0x6c] sm:$0xf]
        %v1113 = vld [vmem:[#allocation2 + $0x74] sm:$0xf]
        %v1114 = vld [vmem:[#allocation2 + $0x7c] sm:$0xf]
        %v1115 = vld [vmem:[#allocation2 + $0x84] sm:$0xf]
        %v1116 = vld [vmem:[#allocation2 + $0x8c] sm:$0xf]
        %v1117 = vld [vmem:[#allocation2 + $0x94] sm:$0xf]
        %v1118 = vld [vmem:[#allocation2 + $0x9c] sm:$0xf]
        %v1119 = vld [vmem:[#allocation2 + $0xa4] sm:$0xf]
        %v1120 = vld [vmem:[#allocation2 + $0xac] sm:$0xf]
        %v1121 = vld [vmem:[#allocation2 + $0xb4] sm:$0xf]
        %v1122 = vld [vmem:[#allocation2 + $0xbc] sm:$0xf]
        %v1123 = vld [vmem:[#allocation2 + $0xc4] sm:$0xf]
        %v1124 = vld [vmem:[#allocation2 + $0xcc] sm:$0xf]
        %v1125 = vld [vmem:[#allocation2 + $0xd4] sm:$0xf]
        %v1126 = vld [vmem:[#allocation2 + $0xdc] sm:$0xf]
        %v1127 = vld [vmem:[#allocation2 + $0xe4] sm:$0xf]
        %v1128 = vld [vmem:[#allocation2 + $0xec] sm:$0xf]
        %v1129 = vld [vmem:[#allocation2 + $0xf4] sm:$0xf]
        %v1130 = vld [vmem:[#allocation2 + $0xfc] sm:$0xf]
        %v1163 = vunpack.c.l.b16 %v1067
        %v1164 = vunpack.c.l.b16 %v1068
        %v1165 = vunpack.c.l.b16 %v1069
        %v1166 = vunpack.c.l.b16 %v1070
        %v1167 = vunpack.c.l.b16 %v1071
        %v1168 = vunpack.c.l.b16 %v1072
        %v1169 = vunpack.c.l.b16 %v1073
        %v1170 = vunpack.c.l.b16 %v1074
        %v1171 = vunpack.c.l.b16 %v1075
        %v1172 = vunpack.c.l.b16 %v1076
        %v1173 = vunpack.c.l.b16 %v1077
        %v1174 = vunpack.c.l.b16 %v1078
        %v1175 = vunpack.c.l.b16 %v1079
        %v1176 = vunpack.c.l.b16 %v1080
        %v1177 = vunpack.c.l.b16 %v1081
        %v1178 = vunpack.c.l.b16 %v1082
        %v1179 = vunpack.c.l.b16 %v1083
        %v1180 = vunpack.c.l.b16 %v1084
        %v1181 = vunpack.c.l.b16 %v1085
        %v1182 = vunpack.c.l.b16 %v1086
        %v1183 = vunpack.c.l.b16 %v1087
        %v1184 = vunpack.c.l.b16 %v1088
        %v1185 = vunpack.c.l.b16 %v1089
        %v1186 = vunpack.c.l.b16 %v1090
        %v1187 = vunpack.c.l.b16 %v1091
        %v1188 = vunpack.c.l.b16 %v1092
        %v1189 = vunpack.c.l.b16 %v1093
        %v1190 = vunpack.c.l.b16 %v1094
        %v1191 = vunpack.c.l.b16 %v1095
        %v1192 = vunpack.c.l.b16 %v1096
        %v1193 = vunpack.c.l.b16 %v1097
        %v1194 = vunpack.c.l.b16 %v1098
        %v1195 = vpack.c.b16 %v1164, %v1163
        %v1196 = vpack.c.b16 %v1166, %v1165
        %v1197 = vpack.c.b16 %v1168, %v1167
        %v1198 = vpack.c.b16 %v1170, %v1169
        %v1199 = vpack.c.b16 %v1172, %v1171
        %v1200 = vpack.c.b16 %v1174, %v1173
        %v1201 = vpack.c.b16 %v1176, %v1175
        %v1202 = vpack.c.b16 %v1178, %v1177
        %v1203 = vpack.c.b16 %v1180, %v1179
        %v1204 = vpack.c.b16 %v1182, %v1181
        %v1205 = vpack.c.b16 %v1184, %v1183
        %v1206 = vpack.c.b16 %v1186, %v1185
        %v1207 = vpack.c.b16 %v1188, %v1187
        %v1208 = vpack.c.b16 %v1190, %v1189
        %v1209 = vpack.c.b16 %v1192, %v1191
        %v1210 = vpack.c.b16 %v1194, %v1193
        %vm1211 = vcmask 261120
        %v1213 = vsel %vm1211, %v1059, 0
        %v1216 = vsel %vm1211, %v1060, 0
        %v1219 = vsel %vm1211, %v1061, 0
        %v1222 = vsel %vm1211, %v1062, 0
        %v1225 = vsel %vm1211, %v1063, 0
        %v1228 = vsel %vm1211, %v1064, 0
        %v1231 = vsel %vm1211, %v1065, 0
        %v1234 = vsel %vm1211, %v1066, 0
        %v1237 = vsel %vm1211, %v1195, 0
        %v1240 = vsel %vm1211, %v1196, 0
        %v1243 = vsel %vm1211, %v1197, 0
        %v1246 = vsel %vm1211, %v1198, 0
        %v1249 = vsel %vm1211, %v1199, 0
        %v1252 = vsel %vm1211, %v1200, 0
        %v1255 = vsel %vm1211, %v1201, 0
        %v1258 = vsel %vm1211, %v1202, 0
        %v1261 = vsel %vm1211, %v1203, 0
        %v1264 = vsel %vm1211, %v1204, 0
        %v1267 = vsel %vm1211, %v1205, 0
        %v1270 = vsel %vm1211, %v1206, 0
        %v1273 = vsel %vm1211, %v1207, 0
        %v1276 = vsel %vm1211, %v1208, 0
        %v1279 = vsel %vm1211, %v1209, 0
        %v1282 = vsel %vm1211, %v1210, 0
        %1284 = vmatprep.subr.bf16.mxu0 0
        %1285 = vmatpush1.bf16.xpose.msra.mxu0 %v1258
        %1286 = vmatprep.subr.bf16.mxu0 0
        %1287 = vmatpush1.bf16.xpose.msra.mxu0 %v1255
        %1288 = vmatprep.subr.bf16.mxu0 0
        %1289 = vmatpush1.bf16.xpose.msra.mxu0 %v1252
        %1290 = vmatprep.subr.bf16.mxu0 0
        %1291 = vmatpush1.bf16.xpose.msra.mxu0 %v1249
        %1292 = vmatprep.subr.bf16.mxu0 0
        %1293 = vmatpush1.bf16.xpose.msra.mxu0 %v1246
        %1294 = vmatprep.subr.bf16.mxu0 0
        %1295 = vmatpush1.bf16.xpose.msra.mxu0 %v1243
        %1296 = vmatprep.subr.bf16.mxu0 0
        %1297 = vmatpush1.bf16.xpose.msra.mxu0 %v1240
        %1298 = vmatprep.subr.bf16.mxu0 0
        %1299 = vmatpush1.bf16.xpose.msra.mxu0 %v1237
        %1300 = vmatprep.subr.bf16.mxu0 0
        %1301 = vmatpush2.bf16.xpose.msra.mxu0 %v1282
        %1302 = vmatprep.subr.bf16.mxu0 0
        %1303 = vmatpush2.bf16.xpose.msra.mxu0 %v1279
        %1304 = vmatprep.subr.bf16.mxu0 0
        %1305 = vmatpush2.bf16.xpose.msra.mxu0 %v1276
        %1306 = vmatprep.subr.bf16.mxu0 0
        %1307 = vmatpush2.bf16.xpose.msra.mxu0 %v1273
        %1308 = vmatprep.subr.bf16.mxu0 0
        %1309 = vmatpush2.bf16.xpose.msra.mxu0 %v1270
        %1310 = vmatprep.subr.bf16.mxu0 0
        %1311 = vmatpush2.bf16.xpose.msra.mxu0 %v1267
        %1312 = vmatprep.subr.bf16.mxu0 0
        %1313 = vmatpush2.bf16.xpose.msra.mxu0 %v1264
        %1314 = vmatprep.subr.bf16.mxu0 0
        %1315 = vmatpush2.bf16.xpose.msra.mxu0 %v1261
        %1316 = vmatprep.mubr.bf16.mxu0 0
        %1317 = vmatmul.mubr.bf16.gmra.mxu0 %v1213
        %v1318 = vpop.f32.mrf.mxu0
        %v1319 = vadd.f32 0.0, %v1318
        %v1320 = vpop.f32.mrf.mxu0
        %v1321 = vadd.f32 0.0, %v1320
        %v1322 = vpop.f32.mrf.mxu0
        %v1323 = vadd.f32 0.0, %v1322
        %v1324 = vpop.f32.mrf.mxu0
        %v1325 = vadd.f32 0.0, %v1324
        %1326 = vmatprep.mubr.bf16.mxu0 0
        %1327 = vmatmul.mubr.bf16.gmra.mxu0 %v1216
        %v1328 = vpop.f32.mrf.mxu0
        %v1329 = vadd.f32 0.0, %v1328
        %v1330 = vpop.f32.mrf.mxu0
        %v1331 = vadd.f32 0.0, %v1330
        %v1332 = vpop.f32.mrf.mxu0
        %v1333 = vadd.f32 0.0, %v1332
        %v1334 = vpop.f32.mrf.mxu0
        %v1335 = vadd.f32 0.0, %v1334
        %1336 = vmatprep.mubr.bf16.mxu0 0
        %1337 = vmatmul.mubr.bf16.gmra.mxu0 %v1219
        %v1338 = vpop.f32.mrf.mxu0
        %v1339 = vadd.f32 0.0, %v1338
        %v1340 = vpop.f32.mrf.mxu0
        %v1341 = vadd.f32 0.0, %v1340
        %v1342 = vpop.f32.mrf.mxu0
        %v1343 = vadd.f32 0.0, %v1342
        %v1344 = vpop.f32.mrf.mxu0
        %v1345 = vadd.f32 0.0, %v1344
        %1346 = vmatprep.mubr.bf16.mxu0 0
        %1347 = vmatmul.mubr.bf16.gmra.mxu0 %v1222
        %v1348 = vpop.f32.mrf.mxu0
        %v1349 = vadd.f32 0.0, %v1348
        %v1350 = vpop.f32.mrf.mxu0
        %v1351 = vadd.f32 0.0, %v1350
        %v1352 = vpop.f32.mrf.mxu0
        %v1353 = vadd.f32 0.0, %v1352
        %v1354 = vpop.f32.mrf.mxu0
        %v1355 = vadd.f32 0.0, %v1354
        %1356 = vmatprep.mubr.bf16.mxu0 0
        %1357 = vmatmul.mubr.bf16.gmra.mxu0 %v1225
        %v1358 = vpop.f32.mrf.mxu0
        %v1359 = vadd.f32 0.0, %v1358
        %v1360 = vpop.f32.mrf.mxu0
        %v1361 = vadd.f32 0.0, %v1360
        %v1362 = vpop.f32.mrf.mxu0
        %v1363 = vadd.f32 0.0, %v1362
        %v1364 = vpop.f32.mrf.mxu0
        %v1365 = vadd.f32 0.0, %v1364
        %1366 = vmatprep.mubr.bf16.mxu0 0
        %1367 = vmatmul.mubr.bf16.gmra.mxu0 %v1228
        %v1368 = vpop.f32.mrf.mxu0
        %v1369 = vadd.f32 0.0, %v1368
        %v1370 = vpop.f32.mrf.mxu0
        %v1371 = vadd.f32 0.0, %v1370
        %v1372 = vpop.f32.mrf.mxu0
        %v1373 = vadd.f32 0.0, %v1372
        %v1374 = vpop.f32.mrf.mxu0
        %v1375 = vadd.f32 0.0, %v1374
        %1376 = vmatprep.mubr.bf16.mxu0 0
        %1377 = vmatmul.mubr.bf16.gmra.mxu0 %v1231
        %v1378 = vpop.f32.mrf.mxu0
        %v1379 = vadd.f32 0.0, %v1378
        %v1380 = vpop.f32.mrf.mxu0
        %v1381 = vadd.f32 0.0, %v1380
        %v1382 = vpop.f32.mrf.mxu0
        %v1383 = vadd.f32 0.0, %v1382
        %v1384 = vpop.f32.mrf.mxu0
        %v1385 = vadd.f32 0.0, %v1384
        %1386 = vmatprep.mubr.bf16.mxu0 0
        %1387 = vmatmul.mubr.bf16.gmra.mxu0 %v1234
        %v1388 = vpop.f32.mrf.mxu0
        %v1389 = vadd.f32 0.0, %v1388
        %v1390 = vpop.f32.mrf.mxu0
        %v1391 = vadd.f32 0.0, %v1390
        %v1392 = vpop.f32.mrf.mxu0
        %v1393 = vadd.f32 0.0, %v1392
        %v1394 = vpop.f32.mrf.mxu0
        %v1395 = vadd.f32 0.0, %v1394
        %1396 = vdwg.mxu0
        %v1397 = vmax.f32 %v1319, %v1321
        %1398 = vmax.xlane.f32.xlu0 %v1397
        %v1399 = vpop.xlane.xlu0 %1398
        %v1400 = vmax.f32 %v1323, %v1325
        %1401 = vmax.xlane.f32.xlu0 %v1400
        %v1402 = vpop.xlane.xlu0 %1401
        %v1403 = vmax.f32 %v1329, %v1331
        %1404 = vmax.xlane.f32.xlu0 %v1403
        %v1405 = vpop.xlane.xlu0 %1404
        %v1406 = vmax.f32 %v1333, %v1335
        %1407 = vmax.xlane.f32.xlu0 %v1406
        %v1408 = vpop.xlane.xlu0 %1407
        %v1409 = vmax.f32 %v1339, %v1341
        %1410 = vmax.xlane.f32.xlu0 %v1409
        %v1411 = vpop.xlane.xlu0 %1410
        %v1412 = vmax.f32 %v1343, %v1345
        %1413 = vmax.xlane.f32.xlu0 %v1412
        %v1414 = vpop.xlane.xlu0 %1413
        %v1415 = vmax.f32 %v1349, %v1351
        %1416 = vmax.xlane.f32.xlu0 %v1415
        %v1417 = vpop.xlane.xlu0 %1416
        %v1418 = vmax.f32 %v1353, %v1355
        %1419 = vmax.xlane.f32.xlu0 %v1418
        %v1420 = vpop.xlane.xlu0 %1419
        %v1421 = vmax.f32 %v1359, %v1361
        %1422 = vmax.xlane.f32.xlu0 %v1421
        %v1423 = vpop.xlane.xlu0 %1422
        %v1424 = vmax.f32 %v1363, %v1365
        %1425 = vmax.xlane.f32.xlu0 %v1424
        %v1426 = vpop.xlane.xlu0 %1425
        %v1427 = vmax.f32 %v1369, %v1371
        %1428 = vmax.xlane.f32.xlu0 %v1427
        %v1429 = vpop.xlane.xlu0 %1428
        %v1430 = vmax.f32 %v1373, %v1375
        %1431 = vmax.xlane.f32.xlu0 %v1430
        %v1432 = vpop.xlane.xlu0 %1431
        %v1433 = vmax.f32 %v1379, %v1381
        %1434 = vmax.xlane.f32.xlu0 %v1433
        %v1435 = vpop.xlane.xlu0 %1434
        %v1436 = vmax.f32 %v1383, %v1385
        %1437 = vmax.xlane.f32.xlu0 %v1436
        %v1438 = vpop.xlane.xlu0 %1437
        %v1439 = vmax.f32 %v1389, %v1391
        %1440 = vmax.xlane.f32.xlu0 %v1439
        %v1441 = vpop.xlane.xlu0 %1440
        %v1442 = vmax.f32 %v1393, %v1395
        %1443 = vmax.xlane.f32.xlu0 %v1442
        %v1444 = vpop.xlane.xlu0 %1443
        %v1445 = vsub.f32 %v1319, %v1399
        %v1446 = vsub.f32 %v1321, %v1399
        %v1447 = vsub.f32 %v1323, %v1402
        %v1448 = vsub.f32 %v1325, %v1402
        %v1449 = vsub.f32 %v1329, %v1405
        %v1450 = vsub.f32 %v1331, %v1405
        %v1451 = vsub.f32 %v1333, %v1408
        %v1452 = vsub.f32 %v1335, %v1408
        %v1453 = vsub.f32 %v1339, %v1411
        %v1454 = vsub.f32 %v1341, %v1411
        %v1455 = vsub.f32 %v1343, %v1414
        %v1456 = vsub.f32 %v1345, %v1414
        %v1457 = vsub.f32 %v1349, %v1417
        %v1458 = vsub.f32 %v1351, %v1417
        %v1459 = vsub.f32 %v1353, %v1420
        %v1460 = vsub.f32 %v1355, %v1420
        %v1461 = vsub.f32 %v1359, %v1423
        %v1462 = vsub.f32 %v1361, %v1423
        %v1463 = vsub.f32 %v1363, %v1426
        %v1464 = vsub.f32 %v1365, %v1426
        %v1465 = vsub.f32 %v1369, %v1429
        %v1466 = vsub.f32 %v1371, %v1429
        %v1467 = vsub.f32 %v1373, %v1432
        %v1468 = vsub.f32 %v1375, %v1432
        %v1469 = vsub.f32 %v1379, %v1435
        %v1470 = vsub.f32 %v1381, %v1435
        %v1471 = vsub.f32 %v1383, %v1438
        %v1472 = vsub.f32 %v1385, %v1438
        %v1473 = vsub.f32 %v1389, %v1441
        %v1474 = vsub.f32 %v1391, %v1441
        %v1475 = vsub.f32 %v1393, %v1444
        %v1476 = vsub.f32 %v1395, %v1444
        %v1477 = vmul.f32 %v1445, 1.442695
        %v1478 = vpow.pop %v1477
        %v1479 = vmul.f32 %v1446, 1.442695
        %v1480 = vpow.pop %v1479
        %v1481 = vmul.f32 %v1447, 1.442695
        %v1482 = vpow.pop %v1481
        %v1483 = vmul.f32 %v1448, 1.442695
        %v1484 = vpow.pop %v1483
        %v1485 = vmul.f32 %v1449, 1.442695
        %v1486 = vpow.pop %v1485
        %v1487 = vmul.f32 %v1450, 1.442695
        %v1488 = vpow.pop %v1487
        %v1489 = vmul.f32 %v1451, 1.442695
        %v1490 = vpow.pop %v1489
        %v1491 = vmul.f32 %v1452, 1.442695
        %v1492 = vpow.pop %v1491
        %v1493 = vmul.f32 %v1453, 1.442695
        %v1494 = vpow.pop %v1493
        %v1495 = vmul.f32 %v1454, 1.442695
        %v1496 = vpow.pop %v1495
        %v1497 = vmul.f32 %v1455, 1.442695
        %v1498 = vpow.pop %v1497
        %v1499 = vmul.f32 %v1456, 1.442695
        %v1500 = vpow.pop %v1499
        %v1501 = vmul.f32 %v1457, 1.442695
        %v1502 = vpow.pop %v1501
        %v1503 = vmul.f32 %v1458, 1.442695
        %v1504 = vpow.pop %v1503
        %v1505 = vmul.f32 %v1459, 1.442695
        %v1506 = vpow.pop %v1505
        %v1507 = vmul.f32 %v1460, 1.442695
        %v1508 = vpow.pop %v1507
        %v1509 = vmul.f32 %v1461, 1.442695
        %v1510 = vpow.pop %v1509
        %v1511 = vmul.f32 %v1462, 1.442695
        %v1512 = vpow.pop %v1511
        %v1513 = vmul.f32 %v1463, 1.442695
        %v1514 = vpow.pop %v1513
        %v1515 = vmul.f32 %v1464, 1.442695
        %v1516 = vpow.pop %v1515
        %v1517 = vmul.f32 %v1465, 1.442695
        %v1518 = vpow.pop %v1517
        %v1519 = vmul.f32 %v1466, 1.442695
        %v1520 = vpow.pop %v1519
        %v1521 = vmul.f32 %v1467, 1.442695
        %v1522 = vpow.pop %v1521
        %v1523 = vmul.f32 %v1468, 1.442695
        %v1524 = vpow.pop %v1523
        %v1525 = vmul.f32 %v1469, 1.442695
        %v1526 = vpow.pop %v1525
        %v1527 = vmul.f32 %v1470, 1.442695
        %v1528 = vpow.pop %v1527
        %v1529 = vmul.f32 %v1471, 1.442695
        %v1530 = vpow.pop %v1529
        %v1531 = vmul.f32 %v1472, 1.442695
        %v1532 = vpow.pop %v1531
        %v1533 = vmul.f32 %v1473, 1.442695
        %v1534 = vpow.pop %v1533
        %v1535 = vmul.f32 %v1474, 1.442695
        %v1536 = vpow.pop %v1535
        %v1537 = vmul.f32 %v1475, 1.442695
        %v1538 = vpow.pop %v1537
        %v1539 = vmul.f32 %v1476, 1.442695
        %v1540 = vpow.pop %v1539
        %v1541 = vadd.f32 %v1478, %v1480
        %1542 = vadd.xlane.f32.xlu0 %v1541
        %v1543 = vpop.xlane.xlu0 %1542
        %v1544 = vadd.f32 %v1482, %v1484
        %1545 = vadd.xlane.f32.xlu0 %v1544
        %v1546 = vpop.xlane.xlu0 %1545
        %v1547 = vadd.f32 %v1486, %v1488
        %1548 = vadd.xlane.f32.xlu0 %v1547
        %v1549 = vpop.xlane.xlu0 %1548
        %v1550 = vadd.f32 %v1490, %v1492
        %1551 = vadd.xlane.f32.xlu0 %v1550
        %v1552 = vpop.xlane.xlu0 %1551
        %v1553 = vadd.f32 %v1494, %v1496
        %1554 = vadd.xlane.f32.xlu0 %v1553
        %v1555 = vpop.xlane.xlu0 %1554
        %v1556 = vadd.f32 %v1498, %v1500
        %1557 = vadd.xlane.f32.xlu0 %v1556
        %v1558 = vpop.xlane.xlu0 %1557
        %v1559 = vadd.f32 %v1502, %v1504
        %1560 = vadd.xlane.f32.xlu0 %v1559
        %v1561 = vpop.xlane.xlu0 %1560
        %v1562 = vadd.f32 %v1506, %v1508
        %1563 = vadd.xlane.f32.xlu0 %v1562
        %v1564 = vpop.xlane.xlu0 %1563
        %v1565 = vadd.f32 %v1510, %v1512
        %1566 = vadd.xlane.f32.xlu0 %v1565
        %v1567 = vpop.xlane.xlu0 %1566
        %v1568 = vadd.f32 %v1514, %v1516
        %1569 = vadd.xlane.f32.xlu0 %v1568
        %v1570 = vpop.xlane.xlu0 %1569
        %v1571 = vadd.f32 %v1518, %v1520
        %1572 = vadd.xlane.f32.xlu0 %v1571
        %v1573 = vpop.xlane.xlu0 %1572
        %v1574 = vadd.f32 %v1522, %v1524
        %1575 = vadd.xlane.f32.xlu0 %v1574
        %v1576 = vpop.xlane.xlu0 %1575
        %v1577 = vadd.f32 %v1526, %v1528
        %1578 = vadd.xlane.f32.xlu0 %v1577
        %v1579 = vpop.xlane.xlu0 %1578
        %v1580 = vadd.f32 %v1530, %v1532
        %1581 = vadd.xlane.f32.xlu0 %v1580
        %v1582 = vpop.xlane.xlu0 %1581
        %v1583 = vadd.f32 %v1534, %v1536
        %1584 = vadd.xlane.f32.xlu0 %v1583
        %v1585 = vpop.xlane.xlu0 %1584
        %v1586 = vadd.f32 %v1538, %v1540
        %1587 = vadd.xlane.f32.xlu0 %v1586
        %v1588 = vpop.xlane.xlu0 %1587
        %v1589 = vpack.c.bf16 %v1482, %v1478
        %v1590 = vpack.c.bf16 %v1484, %v1480
        %v1591 = vpack.c.bf16 %v1490, %v1486
        %v1592 = vpack.c.bf16 %v1492, %v1488
        %v1593 = vpack.c.bf16 %v1498, %v1494
        %v1594 = vpack.c.bf16 %v1500, %v1496
        %v1595 = vpack.c.bf16 %v1506, %v1502
        %v1596 = vpack.c.bf16 %v1508, %v1504
        %v1597 = vpack.c.bf16 %v1514, %v1510
        %v1598 = vpack.c.bf16 %v1516, %v1512
        %v1599 = vpack.c.bf16 %v1522, %v1518
        %v1600 = vpack.c.bf16 %v1524, %v1520
        %v1601 = vpack.c.bf16 %v1530, %v1526
        %v1602 = vpack.c.bf16 %v1532, %v1528
        %v1603 = vpack.c.bf16 %v1538, %v1534
        %v1604 = vpack.c.bf16 %v1540, %v1536
        %v1637 = vunpack.c.l.b16 %v1099
        %v1638 = vunpack.c.l.b16 %v1100
        %v1639 = vunpack.c.l.b16 %v1101
        %v1640 = vunpack.c.l.b16 %v1102
        %v1641 = vunpack.c.l.b16 %v1103
        %v1642 = vunpack.c.l.b16 %v1104
        %v1643 = vunpack.c.l.b16 %v1105
        %v1644 = vunpack.c.l.b16 %v1106
        %v1645 = vunpack.c.l.b16 %v1107
        %v1646 = vunpack.c.l.b16 %v1108
        %v1647 = vunpack.c.l.b16 %v1109
        %v1648 = vunpack.c.l.b16 %v1110
        %v1649 = vunpack.c.l.b16 %v1111
        %v1650 = vunpack.c.l.b16 %v1112
        %v1651 = vunpack.c.l.b16 %v1113
        %v1652 = vunpack.c.l.b16 %v1114
        %v1653 = vunpack.c.l.b16 %v1115
        %v1654 = vunpack.c.l.b16 %v1116
        %v1655 = vunpack.c.l.b16 %v1117
        %v1656 = vunpack.c.l.b16 %v1118
        %v1657 = vunpack.c.l.b16 %v1119
        %v1658 = vunpack.c.l.b16 %v1120
        %v1659 = vunpack.c.l.b16 %v1121
        %v1660 = vunpack.c.l.b16 %v1122
        %v1661 = vunpack.c.l.b16 %v1123
        %v1662 = vunpack.c.l.b16 %v1124
        %v1663 = vunpack.c.l.b16 %v1125
        %v1664 = vunpack.c.l.b16 %v1126
        %v1665 = vunpack.c.l.b16 %v1127
        %v1666 = vunpack.c.l.b16 %v1128
        %v1667 = vunpack.c.l.b16 %v1129
        %v1668 = vunpack.c.l.b16 %v1130
        %v1669 = vpack.c.b16 %v1638, %v1637
        %v1670 = vpack.c.b16 %v1640, %v1639
        %v1671 = vpack.c.b16 %v1642, %v1641
        %v1672 = vpack.c.b16 %v1644, %v1643
        %v1673 = vpack.c.b16 %v1646, %v1645
        %v1674 = vpack.c.b16 %v1648, %v1647
        %v1675 = vpack.c.b16 %v1650, %v1649
        %v1676 = vpack.c.b16 %v1652, %v1651
        %v1677 = vpack.c.b16 %v1654, %v1653
        %v1678 = vpack.c.b16 %v1656, %v1655
        %v1679 = vpack.c.b16 %v1658, %v1657
        %v1680 = vpack.c.b16 %v1660, %v1659
        %v1681 = vpack.c.b16 %v1662, %v1661
        %v1682 = vpack.c.b16 %v1664, %v1663
        %v1683 = vpack.c.b16 %v1666, %v1665
        %v1684 = vpack.c.b16 %v1668, %v1667
        %1701 = vmatprep.subr.bf16.mxu0 0
        %1702 = vmatpush1.bf16.msra.mxu0 %v1676
        %1703 = vmatprep.subr.bf16.mxu0 0
        %1704 = vmatpush1.bf16.msra.mxu0 %v1675
        %1705 = vmatprep.subr.bf16.mxu0 0
        %1706 = vmatpush1.bf16.msra.mxu0 %v1674
        %1707 = vmatprep.subr.bf16.mxu0 0
        %1708 = vmatpush1.bf16.msra.mxu0 %v1673
        %1709 = vmatprep.subr.bf16.mxu0 0
        %1710 = vmatpush1.bf16.msra.mxu0 %v1672
        %1711 = vmatprep.subr.bf16.mxu0 0
        %1712 = vmatpush1.bf16.msra.mxu0 %v1671
        %1713 = vmatprep.subr.bf16.mxu0 0
        %1714 = vmatpush1.bf16.msra.mxu0 %v1670
        %1715 = vmatprep.subr.bf16.mxu0 0
        %1716 = vmatpush1.bf16.msra.mxu0 %v1669
        %1717 = vmatprep.subr.bf16.mxu0 0
        %1718 = vmatpush2.bf16.msra.mxu0 %v1684
        %1719 = vmatprep.subr.bf16.mxu0 0
        %1720 = vmatpush2.bf16.msra.mxu0 %v1683
        %1721 = vmatprep.subr.bf16.mxu0 0
        %1722 = vmatpush2.bf16.msra.mxu0 %v1682
        %1723 = vmatprep.subr.bf16.mxu0 0
        %1724 = vmatpush2.bf16.msra.mxu0 %v1681
        %1725 = vmatprep.subr.bf16.mxu0 0
        %1726 = vmatpush2.bf16.msra.mxu0 %v1680
        %1727 = vmatprep.subr.bf16.mxu0 0
        %1728 = vmatpush2.bf16.msra.mxu0 %v1679
        %1729 = vmatprep.subr.bf16.mxu0 0
        %1730 = vmatpush2.bf16.msra.mxu0 %v1678
        %1731 = vmatprep.subr.bf16.mxu0 0
        %1732 = vmatpush2.bf16.msra.mxu0 %v1677
        %1733 = vmatprep.mubr.bf16.mxu0 %v1590
        %1734 = vmatmul.mubr.bf16.gmra.mxu0 %v1589
        %v1735 = vpop.f32.mrf.mxu0
        %v1736 = vadd.f32 0.0, %v1735
        %v1737 = vpop.f32.mrf.mxu0
        %v1738 = vpop.f32.mrf.mxu0
        %v1739 = vadd.f32 0.0, %v1738
        %v1740 = vpop.f32.mrf.mxu0
        %1741 = vmatprep.mubr.bf16.mxu0 %v1592
        %1742 = vmatmul.mubr.bf16.gmra.mxu0 %v1591
        %v1743 = vpop.f32.mrf.mxu0
        %v1744 = vadd.f32 0.0, %v1743
        %v1745 = vpop.f32.mrf.mxu0
        %v1746 = vpop.f32.mrf.mxu0
        %v1747 = vadd.f32 0.0, %v1746
        %v1748 = vpop.f32.mrf.mxu0
        %1749 = vmatprep.mubr.bf16.mxu0 %v1594
        %1750 = vmatmul.mubr.bf16.gmra.mxu0 %v1593
        %v1751 = vpop.f32.mrf.mxu0
        %v1752 = vadd.f32 0.0, %v1751
        %v1753 = vpop.f32.mrf.mxu0
        %v1754 = vpop.f32.mrf.mxu0
        %v1755 = vadd.f32 0.0, %v1754
        %v1756 = vpop.f32.mrf.mxu0
        %1757 = vmatprep.mubr.bf16.mxu0 %v1596
        %1758 = vmatmul.mubr.bf16.gmra.mxu0 %v1595
        %v1759 = vpop.f32.mrf.mxu0
        %v1760 = vadd.f32 0.0, %v1759
        %v1761 = vpop.f32.mrf.mxu0
        %v1762 = vpop.f32.mrf.mxu0
        %v1763 = vadd.f32 0.0, %v1762
        %v1764 = vpop.f32.mrf.mxu0
        %1765 = vmatprep.mubr.bf16.mxu0 %v1598
        %1766 = vmatmul.mubr.bf16.gmra.mxu0 %v1597
        %v1767 = vpop.f32.mrf.mxu0
        %v1768 = vadd.f32 0.0, %v1767
        %v1769 = vpop.f32.mrf.mxu0
        %v1770 = vpop.f32.mrf.mxu0
        %v1771 = vadd.f32 0.0, %v1770
        %v1772 = vpop.f32.mrf.mxu0
        %1773 = vmatprep.mubr.bf16.mxu0 %v1600
        %1774 = vmatmul.mubr.bf16.gmra.mxu0 %v1599
        %v1775 = vpop.f32.mrf.mxu0
        %v1776 = vadd.f32 0.0, %v1775
        %v1777 = vpop.f32.mrf.mxu0
        %v1778 = vpop.f32.mrf.mxu0
        %v1779 = vadd.f32 0.0, %v1778
        %v1780 = vpop.f32.mrf.mxu0
        %1781 = vmatprep.mubr.bf16.mxu0 %v1602
        %1782 = vmatmul.mubr.bf16.gmra.mxu0 %v1601
        %v1783 = vpop.f32.mrf.mxu0
        %v1784 = vadd.f32 0.0, %v1783
        %v1785 = vpop.f32.mrf.mxu0
        %v1786 = vpop.f32.mrf.mxu0
        %v1787 = vadd.f32 0.0, %v1786
        %v1788 = vpop.f32.mrf.mxu0
        %1789 = vmatprep.mubr.bf16.mxu0 %v1604
        %1790 = vmatmul.mubr.bf16.gmra.mxu0 %v1603
        %v1791 = vpop.f32.mrf.mxu0
        %v1792 = vadd.f32 0.0, %v1791
        %v1793 = vpop.f32.mrf.mxu0
        %v1794 = vpop.f32.mrf.mxu0
        %v1795 = vadd.f32 0.0, %v1794
        %v1796 = vpop.f32.mrf.mxu0
        %1797 = vdwg.mxu0
        %v1798 = vrcp.pop %v1543
        %v1799 = vrcp.pop %v1546
        %v1800 = vrcp.pop %v1549
        %v1801 = vrcp.pop %v1552
        %v1802 = vrcp.pop %v1555
        %v1803 = vrcp.pop %v1558
        %v1804 = vrcp.pop %v1561
        %v1805 = vrcp.pop %v1564
        %v1806 = vrcp.pop %v1567
        %v1807 = vrcp.pop %v1570
        %v1808 = vrcp.pop %v1573
        %v1809 = vrcp.pop %v1576
        %v1810 = vrcp.pop %v1579
        %v1811 = vrcp.pop %v1582
        %v1812 = vrcp.pop %v1585
        %v1813 = vrcp.pop %v1588
        %v1814 = vmul.f32 %v1736, %v1798
        %v1815 = vmul.f32 %v1739, %v1799
        %v1816 = vmul.f32 %v1744, %v1800
        %v1817 = vmul.f32 %v1747, %v1801
        %v1818 = vmul.f32 %v1752, %v1802
        %v1819 = vmul.f32 %v1755, %v1803
        %v1820 = vmul.f32 %v1760, %v1804
        %v1821 = vmul.f32 %v1763, %v1805
        %v1822 = vmul.f32 %v1768, %v1806
        %v1823 = vmul.f32 %v1771, %v1807
        %v1824 = vmul.f32 %v1776, %v1808
        %v1825 = vmul.f32 %v1779, %v1809
        %v1826 = vmul.f32 %v1784, %v1810
        %v1827 = vmul.f32 %v1787, %v1811
        %v1828 = vmul.f32 %v1792, %v1812
        %v1829 = vmul.f32 %v1795, %v1813
        %1830 = vst.msk [vmem:[#allocation3] sm:$0xff] %vm1211, %v1814
        %1831 = vst.msk [vmem:[#allocation3 + $0x8] sm:$0xff] %vm1211, %v1815
        %1832 = vst.msk [vmem:[#allocation3 + $0x10] sm:$0xff] %vm1211, %v1816
        %1833 = vst.msk [vmem:[#allocation3 + $0x18] sm:$0xff] %vm1211, %v1817
        %1834 = vst.msk [vmem:[#allocation3 + $0x20] sm:$0xff] %vm1211, %v1818
        %1835 = vst.msk [vmem:[#allocation3 + $0x28] sm:$0xff] %vm1211, %v1819
        %1836 = vst.msk [vmem:[#allocation3 + $0x30] sm:$0xff] %vm1211, %v1820
        %1837 = vst.msk [vmem:[#allocation3 + $0x38] sm:$0xff] %vm1211, %v1821
        %1838 = vst.msk [vmem:[#allocation3 + $0x40] sm:$0xff] %vm1211, %v1822
        %1839 = vst.msk [vmem:[#allocation3 + $0x48] sm:$0xff] %vm1211, %v1823
        %1840 = vst.msk [vmem:[#allocation3 + $0x50] sm:$0xff] %vm1211, %v1824
        %1841 = vst.msk [vmem:[#allocation3 + $0x58] sm:$0xff] %vm1211, %v1825
        %1842 = vst.msk [vmem:[#allocation3 + $0x60] sm:$0xff] %vm1211, %v1826
        %1843 = vst.msk [vmem:[#allocation3 + $0x68] sm:$0xff] %vm1211, %v1827
        %1844 = vst.msk [vmem:[#allocation3 + $0x70] sm:$0xff] %vm1211, %v1828
        %1845 = vst.msk [vmem:[#allocation3 + $0x78] sm:$0xff] %vm1211, %v1829
        %v1846 = vld [vmem:[#allocation2] sm:$0xf]
        %v1847 = vld [vmem:[#allocation2 + $0x8] sm:$0xf]
        %v1848 = vld [vmem:[#allocation2 + $0x10] sm:$0xf]
        %v1849 = vld [vmem:[#allocation2 + $0x18] sm:$0xf]
        %v1850 = vld [vmem:[#allocation2 + $0x20] sm:$0xf]
        %v1851 = vld [vmem:[#allocation2 + $0x28] sm:$0xf]
        %v1852 = vld [vmem:[#allocation2 + $0x30] sm:$0xf]
        %v1853 = vld [vmem:[#allocation2 + $0x38] sm:$0xf]
        %v1854 = vld [vmem:[#allocation2 + $0x40] sm:$0xf]
        %v1855 = vld [vmem:[#allocation2 + $0x48] sm:$0xf]
        %v1856 = vld [vmem:[#allocation2 + $0x50] sm:$0xf]
        %v1857 = vld [vmem:[#allocation2 + $0x58] sm:$0xf]
        %v1858 = vld [vmem:[#allocation2 + $0x60] sm:$0xf]
        %v1859 = vld [vmem:[#allocation2 + $0x68] sm:$0xf]
        %v1860 = vld [vmem:[#allocation2 + $0x70] sm:$0xf]
        %v1861 = vld [vmem:[#allocation2 + $0x78] sm:$0xf]
        %v1862 = vld [vmem:[#allocation2 + $0x80] sm:$0xf]
        %v1863 = vld [vmem:[#allocation2 + $0x88] sm:$0xf]
        %v1864 = vld [vmem:[#allocation2 + $0x90] sm:$0xf]
        %v1865 = vld [vmem:[#allocation2 + $0x98] sm:$0xf]
        %v1866 = vld [vmem:[#allocation2 + $0xa0] sm:$0xf]
        %v1867 = vld [vmem:[#allocation2 + $0xa8] sm:$0xf]
        %v1868 = vld [vmem:[#allocation2 + $0xb0] sm:$0xf]
        %v1869 = vld [vmem:[#allocation2 + $0xb8] sm:$0xf]
        %v1870 = vld [vmem:[#allocation2 + $0xc0] sm:$0xf]
        %v1871 = vld [vmem:[#allocation2 + $0xc8] sm:$0xf]
        %v1872 = vld [vmem:[#allocation2 + $0xd0] sm:$0xf]
        %v1873 = vld [vmem:[#allocation2 + $0xd8] sm:$0xf]
        %v1874 = vld [vmem:[#allocation2 + $0xe0] sm:$0xf]
        %v1875 = vld [vmem:[#allocation2 + $0xe8] sm:$0xf]
        %v1876 = vld [vmem:[#allocation2 + $0xf0] sm:$0xf]
        %v1877 = vld [vmem:[#allocation2 + $0xf8] sm:$0xf]
        %v1878 = vld [vmem:[#allocation2 + $0x4] sm:$0xf]
        %v1879 = vld [vmem:[#allocation2 + $0xc] sm:$0xf]
        %v1880 = vld [vmem:[#allocation2 + $0x14] sm:$0xf]
        %v1881 = vld [vmem:[#allocation2 + $0x1c] sm:$0xf]
        %v1882 = vld [vmem:[#allocation2 + $0x24] sm:$0xf]
        %v1883 = vld [vmem:[#allocation2 + $0x2c] sm:$0xf]
        %v1884 = vld [vmem:[#allocation2 + $0x34] sm:$0xf]
        %v1885 = vld [vmem:[#allocation2 + $0x3c] sm:$0xf]
        %v1886 = vld [vmem:[#allocation2 + $0x44] sm:$0xf]
        %v1887 = vld [vmem:[#allocation2 + $0x4c] sm:$0xf]
        %v1888 = vld [vmem:[#allocation2 + $0x54] sm:$0xf]
        %v1889 = vld [vmem:[#allocation2 + $0x5c] sm:$0xf]
        %v1890 = vld [vmem:[#allocation2 + $0x64] sm:$0xf]
        %v1891 = vld [vmem:[#allocation2 + $0x6c] sm:$0xf]
        %v1892 = vld [vmem:[#allocation2 + $0x74] sm:$0xf]
        %v1893 = vld [vmem:[#allocation2 + $0x7c] sm:$0xf]
        %v1894 = vld [vmem:[#allocation2 + $0x84] sm:$0xf]
        %v1895 = vld [vmem:[#allocation2 + $0x8c] sm:$0xf]
        %v1896 = vld [vmem:[#allocation2 + $0x94] sm:$0xf]
        %v1897 = vld [vmem:[#allocation2 + $0x9c] sm:$0xf]
        %v1898 = vld [vmem:[#allocation2 + $0xa4] sm:$0xf]
        %v1899 = vld [vmem:[#allocation2 + $0xac] sm:$0xf]
        %v1900 = vld [vmem:[#allocation2 + $0xb4] sm:$0xf]
        %v1901 = vld [vmem:[#allocation2 + $0xbc] sm:$0xf]
        %v1902 = vld [vmem:[#allocation2 + $0xc4] sm:$0xf]
        %v1903 = vld [vmem:[#allocation2 + $0xcc] sm:$0xf]
        %v1904 = vld [vmem:[#allocation2 + $0xd4] sm:$0xf]
        %v1905 = vld [vmem:[#allocation2 + $0xdc] sm:$0xf]
        %v1906 = vld [vmem:[#allocation2 + $0xe4] sm:$0xf]
        %v1907 = vld [vmem:[#allocation2 + $0xec] sm:$0xf]
        %v1908 = vld [vmem:[#allocation2 + $0xf4] sm:$0xf]
        %v1909 = vld [vmem:[#allocation2 + $0xfc] sm:$0xf]
        %1918 = vrot.lane.b32.xlu0 %v1059, 96
        %v1919 = vpop.permute.xlu0 %1918
        %1920 = vrot.lane.b32.xlu0 %v1060, 96
        %v1921 = vpop.permute.xlu0 %1920
        %1922 = vrot.lane.b32.xlu0 %v1061, 96
        %v1923 = vpop.permute.xlu0 %1922
        %1924 = vrot.lane.b32.xlu0 %v1062, 96
        %v1925 = vpop.permute.xlu0 %1924
        %1926 = vrot.lane.b32.xlu0 %v1063, 96
        %v1927 = vpop.permute.xlu0 %1926
        %1928 = vrot.lane.b32.xlu0 %v1064, 96
        %v1929 = vpop.permute.xlu0 %1928
        %1930 = vrot.lane.b32.xlu0 %v1065, 96
        %v1931 = vpop.permute.xlu0 %1930
        %1932 = vrot.lane.b32.xlu0 %v1066, 96
        %v1933 = vpop.permute.xlu0 %1932
        %v1966 = vunpack.c.l.b16 %v1846
        %v1967 = vunpack.c.l.b16 %v1847
        %v1968 = vunpack.c.l.b16 %v1848
        %v1969 = vunpack.c.l.b16 %v1849
        %v1970 = vunpack.c.l.b16 %v1850
        %v1971 = vunpack.c.l.b16 %v1851
        %v1972 = vunpack.c.l.b16 %v1852
        %v1973 = vunpack.c.l.b16 %v1853
        %v1974 = vunpack.c.l.b16 %v1854
        %v1975 = vunpack.c.l.b16 %v1855
        %v1976 = vunpack.c.l.b16 %v1856
        %v1977 = vunpack.c.l.b16 %v1857
        %v1978 = vunpack.c.l.b16 %v1858
        %v1979 = vunpack.c.l.b16 %v1859
        %v1980 = vunpack.c.l.b16 %v1860
        %v1981 = vunpack.c.l.b16 %v1861
        %v1982 = vunpack.c.l.b16 %v1862
        %v1983 = vunpack.c.l.b16 %v1863
        %v1984 = vunpack.c.l.b16 %v1864
        %v1985 = vunpack.c.l.b16 %v1865
        %v1986 = vunpack.c.l.b16 %v1866
        %v1987 = vunpack.c.l.b16 %v1867
        %v1988 = vunpack.c.l.b16 %v1868
        %v1989 = vunpack.c.l.b16 %v1869
        %v1990 = vunpack.c.l.b16 %v1870
        %v1991 = vunpack.c.l.b16 %v1871
        %v1992 = vunpack.c.l.b16 %v1872
        %v1993 = vunpack.c.l.b16 %v1873
        %v1994 = vunpack.c.l.b16 %v1874
        %v1995 = vunpack.c.l.b16 %v1875
        %v1996 = vunpack.c.l.b16 %v1876
        %v1997 = vunpack.c.l.b16 %v1877
        %v1998 = vpack.c.b16 %v1967, %v1966
        %v1999 = vpack.c.b16 %v1969, %v1968
        %v2000 = vpack.c.b16 %v1971, %v1970
        %v2001 = vpack.c.b16 %v1973, %v1972
        %v2002 = vpack.c.b16 %v1975, %v1974
        %v2003 = vpack.c.b16 %v1977, %v1976
        %v2004 = vpack.c.b16 %v1979, %v1978
        %v2005 = vpack.c.b16 %v1981, %v1980
        %v2006 = vpack.c.b16 %v1983, %v1982
        %v2007 = vpack.c.b16 %v1985, %v1984
        %v2008 = vpack.c.b16 %v1987, %v1986
        %v2009 = vpack.c.b16 %v1989, %v1988
        %v2010 = vpack.c.b16 %v1991, %v1990
        %v2011 = vpack.c.b16 %v1993, %v1992
        %v2012 = vpack.c.b16 %v1995, %v1994
        %v2013 = vpack.c.b16 %v1997, %v1996
        %2014 = vrot.lane.b32.xlu0 %v1998, 96
        %v2015 = vpop.permute.xlu0 %2014
        %2016 = vrot.lane.b32.xlu0 %v1999, 96
        %v2017 = vpop.permute.xlu0 %2016
        %2018 = vrot.lane.b32.xlu0 %v2000, 96
        %v2019 = vpop.permute.xlu0 %2018
        %2020 = vrot.lane.b32.xlu0 %v2001, 96
        %v2021 = vpop.permute.xlu0 %2020
        %2022 = vrot.lane.b32.xlu0 %v2002, 96
        %v2023 = vpop.permute.xlu0 %2022
        %2024 = vrot.lane.b32.xlu0 %v2003, 96
        %v2025 = vpop.permute.xlu0 %2024
        %2026 = vrot.lane.b32.xlu0 %v2004, 96
        %v2027 = vpop.permute.xlu0 %2026
        %2028 = vrot.lane.b32.xlu0 %v2005, 96
        %v2029 = vpop.permute.xlu0 %2028
        %2030 = vrot.lane.b32.xlu0 %v2006, 96
        %v2031 = vpop.permute.xlu0 %2030
        %2032 = vrot.lane.b32.xlu0 %v2007, 96
        %v2033 = vpop.permute.xlu0 %2032
        %2034 = vrot.lane.b32.xlu0 %v2008, 96
        %v2035 = vpop.permute.xlu0 %2034
        %2036 = vrot.lane.b32.xlu0 %v2009, 96
        %v2037 = vpop.permute.xlu0 %2036
        %2038 = vrot.lane.b32.xlu0 %v2010, 96
        %v2039 = vpop.permute.xlu0 %2038
        %2040 = vrot.lane.b32.xlu0 %v2011, 96
        %v2041 = vpop.permute.xlu0 %2040
        %2042 = vrot.lane.b32.xlu0 %v2012, 96
        %v2043 = vpop.permute.xlu0 %2042
        %2044 = vrot.lane.b32.xlu0 %v2013, 96
        %v2045 = vpop.permute.xlu0 %2044
        %v2047 = vsel %vm1211, %v1919, 0
        %v2050 = vsel %vm1211, %v1921, 0
        %v2053 = vsel %vm1211, %v1923, 0
        %v2056 = vsel %vm1211, %v1925, 0
        %v2059 = vsel %vm1211, %v1927, 0
        %v2062 = vsel %vm1211, %v1929, 0
        %v2065 = vsel %vm1211, %v1931, 0
        %v2068 = vsel %vm1211, %v1933, 0
        %v2071 = vsel %vm1211, %v2015, 0
        %v2074 = vsel %vm1211, %v2017, 0
        %v2077 = vsel %vm1211, %v2019, 0
        %v2080 = vsel %vm1211, %v2021, 0
        %v2083 = vsel %vm1211, %v2023, 0
        %v2086 = vsel %vm1211, %v2025, 0
        %v2089 = vsel %vm1211, %v2027, 0
        %v2092 = vsel %vm1211, %v2029, 0
        %v2095 = vsel %vm1211, %v2031, 0
        %v2098 = vsel %vm1211, %v2033, 0
        %v2101 = vsel %vm1211, %v2035, 0
        %v2104 = vsel %vm1211, %v2037, 0
        %v2107 = vsel %vm1211, %v2039, 0
        %v2110 = vsel %vm1211, %v2041, 0
        %v2113 = vsel %vm1211, %v2043, 0
        %v2116 = vsel %vm1211, %v2045, 0
        %2118 = vmatprep.subr.bf16.mxu0 0
        %2119 = vmatpush1.bf16.xpose.msra.mxu0 %v2092
        %2120 = vmatprep.subr.bf16.mxu0 0
        %2121 = vmatpush1.bf16.xpose.msra.mxu0 %v2089
        %2122 = vmatprep.subr.bf16.mxu0 0
        %2123 = vmatpush1.bf16.xpose.msra.mxu0 %v2086
        %2124 = vmatprep.subr.bf16.mxu0 0
        %2125 = vmatpush1.bf16.xpose.msra.mxu0 %v2083
        %2126 = vmatprep.subr.bf16.mxu0 0
        %2127 = vmatpush1.bf16.xpose.msra.mxu0 %v2080
        %2128 = vmatprep.subr.bf16.mxu0 0
        %2129 = vmatpush1.bf16.xpose.msra.mxu0 %v2077
        %2130 = vmatprep.subr.bf16.mxu0 0
        %2131 = vmatpush1.bf16.xpose.msra.mxu0 %v2074
        %2132 = vmatprep.subr.bf16.mxu0 0
        %2133 = vmatpush1.bf16.xpose.msra.mxu0 %v2071
        %2134 = vmatprep.subr.bf16.mxu0 0
        %2135 = vmatpush2.bf16.xpose.msra.mxu0 %v2116
        %2136 = vmatprep.subr.bf16.mxu0 0
        %2137 = vmatpush2.bf16.xpose.msra.mxu0 %v2113
        %2138 = vmatprep.subr.bf16.mxu0 0
        %2139 = vmatpush2.bf16.xpose.msra.mxu0 %v2110
        %2140 = vmatprep.subr.bf16.mxu0 0
        %2141 = vmatpush2.bf16.xpose.msra.mxu0 %v2107
        %2142 = vmatprep.subr.bf16.mxu0 0
        %2143 = vmatpush2.bf16.xpose.msra.mxu0 %v2104
        %2144 = vmatprep.subr.bf16.mxu0 0
        %2145 = vmatpush2.bf16.xpose.msra.mxu0 %v2101
        %2146 = vmatprep.subr.bf16.mxu0 0
        %2147 = vmatpush2.bf16.xpose.msra.mxu0 %v2098
        %2148 = vmatprep.subr.bf16.mxu0 0
        %2149 = vmatpush2.bf16.xpose.msra.mxu0 %v2095
        %2150 = vmatprep.mubr.bf16.mxu0 0
        %2151 = vmatmul.mubr.bf16.gmra.mxu0 %v2047
        %v2152 = vpop.f32.mrf.mxu0
        %v2153 = vadd.f32 0.0, %v2152
        %v2154 = vpop.f32.mrf.mxu0
        %v2155 = vadd.f32 0.0, %v2154
        %v2156 = vpop.f32.mrf.mxu0
        %v2157 = vadd.f32 0.0, %v2156
        %v2158 = vpop.f32.mrf.mxu0
        %v2159 = vadd.f32 0.0, %v2158
        %2160 = vmatprep.mubr.bf16.mxu0 0
        %2161 = vmatmul.mubr.bf16.gmra.mxu0 %v2050
        %v2162 = vpop.f32.mrf.mxu0
        %v2163 = vadd.f32 0.0, %v2162
        %v2164 = vpop.f32.mrf.mxu0
        %v2165 = vadd.f32 0.0, %v2164
        %v2166 = vpop.f32.mrf.mxu0
        %v2167 = vadd.f32 0.0, %v2166
        %v2168 = vpop.f32.mrf.mxu0
        %v2169 = vadd.f32 0.0, %v2168
        %2170 = vmatprep.mubr.bf16.mxu0 0
        %2171 = vmatmul.mubr.bf16.gmra.mxu0 %v2053
        %v2172 = vpop.f32.mrf.mxu0
        %v2173 = vadd.f32 0.0, %v2172
        %v2174 = vpop.f32.mrf.mxu0
        %v2175 = vadd.f32 0.0, %v2174
        %v2176 = vpop.f32.mrf.mxu0
        %v2177 = vadd.f32 0.0, %v2176
        %v2178 = vpop.f32.mrf.mxu0
        %v2179 = vadd.f32 0.0, %v2178
        %2180 = vmatprep.mubr.bf16.mxu0 0
        %2181 = vmatmul.mubr.bf16.gmra.mxu0 %v2056
        %v2182 = vpop.f32.mrf.mxu0
        %v2183 = vadd.f32 0.0, %v2182
        %v2184 = vpop.f32.mrf.mxu0
        %v2185 = vadd.f32 0.0, %v2184
        %v2186 = vpop.f32.mrf.mxu0
        %v2187 = vadd.f32 0.0, %v2186
        %v2188 = vpop.f32.mrf.mxu0
        %v2189 = vadd.f32 0.0, %v2188
        %2190 = vmatprep.mubr.bf16.mxu0 0
        %2191 = vmatmul.mubr.bf16.gmra.mxu0 %v2059
        %v2192 = vpop.f32.mrf.mxu0
        %v2193 = vadd.f32 0.0, %v2192
        %v2194 = vpop.f32.mrf.mxu0
        %v2195 = vadd.f32 0.0, %v2194
        %v2196 = vpop.f32.mrf.mxu0
        %v2197 = vadd.f32 0.0, %v2196
        %v2198 = vpop.f32.mrf.mxu0
        %v2199 = vadd.f32 0.0, %v2198
        %2200 = vmatprep.mubr.bf16.mxu0 0
        %2201 = vmatmul.mubr.bf16.gmra.mxu0 %v2062
        %v2202 = vpop.f32.mrf.mxu0
        %v2203 = vadd.f32 0.0, %v2202
        %v2204 = vpop.f32.mrf.mxu0
        %v2205 = vadd.f32 0.0, %v2204
        %v2206 = vpop.f32.mrf.mxu0
        %v2207 = vadd.f32 0.0, %v2206
        %v2208 = vpop.f32.mrf.mxu0
        %v2209 = vadd.f32 0.0, %v2208
        %2210 = vmatprep.mubr.bf16.mxu0 0
        %2211 = vmatmul.mubr.bf16.gmra.mxu0 %v2065
        %v2212 = vpop.f32.mrf.mxu0
        %v2213 = vadd.f32 0.0, %v2212
        %v2214 = vpop.f32.mrf.mxu0
        %v2215 = vadd.f32 0.0, %v2214
        %v2216 = vpop.f32.mrf.mxu0
        %v2217 = vadd.f32 0.0, %v2216
        %v2218 = vpop.f32.mrf.mxu0
        %v2219 = vadd.f32 0.0, %v2218
        %2220 = vmatprep.mubr.bf16.mxu0 0
        %2221 = vmatmul.mubr.bf16.gmra.mxu0 %v2068
        %v2222 = vpop.f32.mrf.mxu0
        %v2223 = vadd.f32 0.0, %v2222
        %v2224 = vpop.f32.mrf.mxu0
        %v2225 = vadd.f32 0.0, %v2224
        %v2226 = vpop.f32.mrf.mxu0
        %v2227 = vadd.f32 0.0, %v2226
        %v2228 = vpop.f32.mrf.mxu0
        %v2229 = vadd.f32 0.0, %v2228
        %2230 = vdwg.mxu0
        %v2231 = vmax.f32 %v2153, %v2155
        %2232 = vmax.xlane.f32.xlu0 %v2231
        %v2233 = vpop.xlane.xlu0 %2232
        %v2234 = vmax.f32 %v2157, %v2159
        %2235 = vmax.xlane.f32.xlu0 %v2234
        %v2236 = vpop.xlane.xlu0 %2235
        %v2237 = vmax.f32 %v2163, %v2165
        %2238 = vmax.xlane.f32.xlu0 %v2237
        %v2239 = vpop.xlane.xlu0 %2238
        %v2240 = vmax.f32 %v2167, %v2169
        %2241 = vmax.xlane.f32.xlu0 %v2240
        %v2242 = vpop.xlane.xlu0 %2241
        %v2243 = vmax.f32 %v2173, %v2175
        %2244 = vmax.xlane.f32.xlu0 %v2243
        %v2245 = vpop.xlane.xlu0 %2244
        %v2246 = vmax.f32 %v2177, %v2179
        %2247 = vmax.xlane.f32.xlu0 %v2246
        %v2248 = vpop.xlane.xlu0 %2247
        %v2249 = vmax.f32 %v2183, %v2185
        %2250 = vmax.xlane.f32.xlu0 %v2249
        %v2251 = vpop.xlane.xlu0 %2250
        %v2252 = vmax.f32 %v2187, %v2189
        %2253 = vmax.xlane.f32.xlu0 %v2252
        %v2254 = vpop.xlane.xlu0 %2253
        %v2255 = vmax.f32 %v2193, %v2195
        %2256 = vmax.xlane.f32.xlu0 %v2255
        %v2257 = vpop.xlane.xlu0 %2256
        %v2258 = vmax.f32 %v2197, %v2199
        %2259 = vmax.xlane.f32.xlu0 %v2258
        %v2260 = vpop.xlane.xlu0 %2259
        %v2261 = vmax.f32 %v2203, %v2205
        %2262 = vmax.xlane.f32.xlu0 %v2261
        %v2263 = vpop.xlane.xlu0 %2262
        %v2264 = vmax.f32 %v2207, %v2209
        %2265 = vmax.xlane.f32.xlu0 %v2264
        %v2266 = vpop.xlane.xlu0 %2265
        %v2267 = vmax.f32 %v2213, %v2215
        %2268 = vmax.xlane.f32.xlu0 %v2267
        %v2269 = vpop.xlane.xlu0 %2268
        %v2270 = vmax.f32 %v2217, %v2219
        %2271 = vmax.xlane.f32.xlu0 %v2270
        %v2272 = vpop.xlane.xlu0 %2271
        %v2273 = vmax.f32 %v2223, %v2225
        %2274 = vmax.xlane.f32.xlu0 %v2273
        %v2275 = vpop.xlane.xlu0 %2274
        %v2276 = vmax.f32 %v2227, %v2229
        %2277 = vmax.xlane.f32.xlu0 %v2276
        %v2278 = vpop.xlane.xlu0 %2277
        %v2279 = vsub.f32 %v2153, %v2233
        %v2280 = vsub.f32 %v2155, %v2233
        %v2281 = vsub.f32 %v2157, %v2236
        %v2282 = vsub.f32 %v2159, %v2236
        %v2283 = vsub.f32 %v2163, %v2239
        %v2284 = vsub.f32 %v2165, %v2239
        %v2285 = vsub.f32 %v2167, %v2242
        %v2286 = vsub.f32 %v2169, %v2242
        %v2287 = vsub.f32 %v2173, %v2245
        %v2288 = vsub.f32 %v2175, %v2245
        %v2289 = vsub.f32 %v2177, %v2248
        %v2290 = vsub.f32 %v2179, %v2248
        %v2291 = vsub.f32 %v2183, %v2251
        %v2292 = vsub.f32 %v2185, %v2251
        %v2293 = vsub.f32 %v2187, %v2254
        %v2294 = vsub.f32 %v2189, %v2254
        %v2295 = vsub.f32 %v2193, %v2257
        %v2296 = vsub.f32 %v2195, %v2257
        %v2297 = vsub.f32 %v2197, %v2260
        %v2298 = vsub.f32 %v2199, %v2260
        %v2299 = vsub.f32 %v2203, %v2263
        %v2300 = vsub.f32 %v2205, %v2263
        %v2301 = vsub.f32 %v2207, %v2266
        %v2302 = vsub.f32 %v2209, %v2266
        %v2303 = vsub.f32 %v2213, %v2269
        %v2304 = vsub.f32 %v2215, %v2269
        %v2305 = vsub.f32 %v2217, %v2272
        %v2306 = vsub.f32 %v2219, %v2272
        %v2307 = vsub.f32 %v2223, %v2275
        %v2308 = vsub.f32 %v2225, %v2275
        %v2309 = vsub.f32 %v2227, %v2278
        %v2310 = vsub.f32 %v2229, %v2278
        %v2311 = vmul.f32 %v2279, 1.442695
        %v2312 = vpow.pop %v2311
        %v2313 = vmul.f32 %v2280, 1.442695
        %v2314 = vpow.pop %v2313
        %v2315 = vmul.f32 %v2281, 1.442695
        %v2316 = vpow.pop %v2315
        %v2317 = vmul.f32 %v2282, 1.442695
        %v2318 = vpow.pop %v2317
        %v2319 = vmul.f32 %v2283, 1.442695
        %v2320 = vpow.pop %v2319
        %v2321 = vmul.f32 %v2284, 1.442695
        %v2322 = vpow.pop %v2321
        %v2323 = vmul.f32 %v2285, 1.442695
        %v2324 = vpow.pop %v2323
        %v2325 = vmul.f32 %v2286, 1.442695
        %v2326 = vpow.pop %v2325
        %v2327 = vmul.f32 %v2287, 1.442695
        %v2328 = vpow.pop %v2327
        %v2329 = vmul.f32 %v2288, 1.442695
        %v2330 = vpow.pop %v2329
        %v2331 = vmul.f32 %v2289, 1.442695
        %v2332 = vpow.pop %v2331
        %v2333 = vmul.f32 %v2290, 1.442695
        %v2334 = vpow.pop %v2333
        %v2335 = vmul.f32 %v2291, 1.442695
        %v2336 = vpow.pop %v2335
        %v2337 = vmul.f32 %v2292, 1.442695
        %v2338 = vpow.pop %v2337
        %v2339 = vmul.f32 %v2293, 1.442695
        %v2340 = vpow.pop %v2339
        %v2341 = vmul.f32 %v2294, 1.442695
        %v2342 = vpow.pop %v2341
        %v2343 = vmul.f32 %v2295, 1.442695
        %v2344 = vpow.pop %v2343
        %v2345 = vmul.f32 %v2296, 1.442695
        %v2346 = vpow.pop %v2345
        %v2347 = vmul.f32 %v2297, 1.442695
        %v2348 = vpow.pop %v2347
        %v2349 = vmul.f32 %v2298, 1.442695
        %v2350 = vpow.pop %v2349
        %v2351 = vmul.f32 %v2299, 1.442695
        %v2352 = vpow.pop %v2351
        %v2353 = vmul.f32 %v2300, 1.442695
        %v2354 = vpow.pop %v2353
        %v2355 = vmul.f32 %v2301, 1.442695
        %v2356 = vpow.pop %v2355
        %v2357 = vmul.f32 %v2302, 1.442695
        %v2358 = vpow.pop %v2357
        %v2359 = vmul.f32 %v2303, 1.442695
        %v2360 = vpow.pop %v2359
        %v2361 = vmul.f32 %v2304, 1.442695
        %v2362 = vpow.pop %v2361
        %v2363 = vmul.f32 %v2305, 1.442695
        %v2364 = vpow.pop %v2363
        %v2365 = vmul.f32 %v2306, 1.442695
        %v2366 = vpow.pop %v2365
        %v2367 = vmul.f32 %v2307, 1.442695
        %v2368 = vpow.pop %v2367
        %v2369 = vmul.f32 %v2308, 1.442695
        %v2370 = vpow.pop %v2369
        %v2371 = vmul.f32 %v2309, 1.442695
        %v2372 = vpow.pop %v2371
        %v2373 = vmul.f32 %v2310, 1.442695
        %v2374 = vpow.pop %v2373
        %v2375 = vadd.f32 %v2312, %v2314
        %2376 = vadd.xlane.f32.xlu0 %v2375
        %v2377 = vpop.xlane.xlu0 %2376
        %v2378 = vadd.f32 %v2316, %v2318
        %2379 = vadd.xlane.f32.xlu0 %v2378
        %v2380 = vpop.xlane.xlu0 %2379
        %v2381 = vadd.f32 %v2320, %v2322
        %2382 = vadd.xlane.f32.xlu0 %v2381
        %v2383 = vpop.xlane.xlu0 %2382
        %v2384 = vadd.f32 %v2324, %v2326
        %2385 = vadd.xlane.f32.xlu0 %v2384
        %v2386 = vpop.xlane.xlu0 %2385
        %v2387 = vadd.f32 %v2328, %v2330
        %2388 = vadd.xlane.f32.xlu0 %v2387
        %v2389 = vpop.xlane.xlu0 %2388
        %v2390 = vadd.f32 %v2332, %v2334
        %2391 = vadd.xlane.f32.xlu0 %v2390
        %v2392 = vpop.xlane.xlu0 %2391
        %v2393 = vadd.f32 %v2336, %v2338
        %2394 = vadd.xlane.f32.xlu0 %v2393
        %v2395 = vpop.xlane.xlu0 %2394
        %v2396 = vadd.f32 %v2340, %v2342
        %2397 = vadd.xlane.f32.xlu0 %v2396
        %v2398 = vpop.xlane.xlu0 %2397
        %v2399 = vadd.f32 %v2344, %v2346
        %2400 = vadd.xlane.f32.xlu0 %v2399
        %v2401 = vpop.xlane.xlu0 %2400
        %v2402 = vadd.f32 %v2348, %v2350
        %2403 = vadd.xlane.f32.xlu0 %v2402
        %v2404 = vpop.xlane.xlu0 %2403
        %v2405 = vadd.f32 %v2352, %v2354
        %2406 = vadd.xlane.f32.xlu0 %v2405
        %v2407 = vpop.xlane.xlu0 %2406
        %v2408 = vadd.f32 %v2356, %v2358
        %2409 = vadd.xlane.f32.xlu0 %v2408
        %v2410 = vpop.xlane.xlu0 %2409
        %v2411 = vadd.f32 %v2360, %v2362
        %2412 = vadd.xlane.f32.xlu0 %v2411
        %v2413 = vpop.xlane.xlu0 %2412
        %v2414 = vadd.f32 %v2364, %v2366
        %2415 = vadd.xlane.f32.xlu0 %v2414
        %v2416 = vpop.xlane.xlu0 %2415
        %v2417 = vadd.f32 %v2368, %v2370
        %2418 = vadd.xlane.f32.xlu0 %v2417
        %v2419 = vpop.xlane.xlu0 %2418
        %v2420 = vadd.f32 %v2372, %v2374
        %2421 = vadd.xlane.f32.xlu0 %v2420
        %v2422 = vpop.xlane.xlu0 %2421
        %v2423 = vpack.c.bf16 %v2316, %v2312
        %v2424 = vpack.c.bf16 %v2318, %v2314
        %v2425 = vpack.c.bf16 %v2324, %v2320
        %v2426 = vpack.c.bf16 %v2326, %v2322
        %v2427 = vpack.c.bf16 %v2332, %v2328
        %v2428 = vpack.c.bf16 %v2334, %v2330
        %v2429 = vpack.c.bf16 %v2340, %v2336
        %v2430 = vpack.c.bf16 %v2342, %v2338
        %v2431 = vpack.c.bf16 %v2348, %v2344
        %v2432 = vpack.c.bf16 %v2350, %v2346
        %v2433 = vpack.c.bf16 %v2356, %v2352
        %v2434 = vpack.c.bf16 %v2358, %v2354
        %v2435 = vpack.c.bf16 %v2364, %v2360
        %v2436 = vpack.c.bf16 %v2366, %v2362
        %v2437 = vpack.c.bf16 %v2372, %v2368
        %v2438 = vpack.c.bf16 %v2374, %v2370
        %v2471 = vunpack.c.l.b16 %v1878
        %v2472 = vunpack.c.l.b16 %v1879
        %v2473 = vunpack.c.l.b16 %v1880
        %v2474 = vunpack.c.l.b16 %v1881
        %v2475 = vunpack.c.l.b16 %v1882
        %v2476 = vunpack.c.l.b16 %v1883
        %v2477 = vunpack.c.l.b16 %v1884
        %v2478 = vunpack.c.l.b16 %v1885
        %v2479 = vunpack.c.l.b16 %v1886
        %v2480 = vunpack.c.l.b16 %v1887
        %v2481 = vunpack.c.l.b16 %v1888
        %v2482 = vunpack.c.l.b16 %v1889
        %v2483 = vunpack.c.l.b16 %v1890
        %v2484 = vunpack.c.l.b16 %v1891
        %v2485 = vunpack.c.l.b16 %v1892
        %v2486 = vunpack.c.l.b16 %v1893
        %v2487 = vunpack.c.l.b16 %v1894
        %v2488 = vunpack.c.l.b16 %v1895
        %v2489 = vunpack.c.l.b16 %v1896
        %v2490 = vunpack.c.l.b16 %v1897
        %v2491 = vunpack.c.l.b16 %v1898
        %v2492 = vunpack.c.l.b16 %v1899
        %v2493 = vunpack.c.l.b16 %v1900
        %v2494 = vunpack.c.l.b16 %v1901
        %v2495 = vunpack.c.l.b16 %v1902
        %v2496 = vunpack.c.l.b16 %v1903
        %v2497 = vunpack.c.l.b16 %v1904
        %v2498 = vunpack.c.l.b16 %v1905
        %v2499 = vunpack.c.l.b16 %v1906
        %v2500 = vunpack.c.l.b16 %v1907
        %v2501 = vunpack.c.l.b16 %v1908
        %v2502 = vunpack.c.l.b16 %v1909
        %v2503 = vpack.c.b16 %v2472, %v2471
        %v2504 = vpack.c.b16 %v2474, %v2473
        %v2505 = vpack.c.b16 %v2476, %v2475
        %v2506 = vpack.c.b16 %v2478, %v2477
        %v2507 = vpack.c.b16 %v2480, %v2479
        %v2508 = vpack.c.b16 %v2482, %v2481
        %v2509 = vpack.c.b16 %v2484, %v2483
        %v2510 = vpack.c.b16 %v2486, %v2485
        %v2511 = vpack.c.b16 %v2488, %v2487
        %v2512 = vpack.c.b16 %v2490, %v2489
        %v2513 = vpack.c.b16 %v2492, %v2491
        %v2514 = vpack.c.b16 %v2494, %v2493
        %v2515 = vpack.c.b16 %v2496, %v2495
        %v2516 = vpack.c.b16 %v2498, %v2497
        %v2517 = vpack.c.b16 %v2500, %v2499
        %v2518 = vpack.c.b16 %v2502, %v2501
        %2519 = vrot.lane.b32.xlu0 %v2503, 96
        %v2520 = vpop.permute.xlu0 %2519
        %2521 = vrot.lane.b32.xlu0 %v2504, 96
        %v2522 = vpop.permute.xlu0 %2521
        %2523 = vrot.lane.b32.xlu0 %v2505, 96
        %v2524 = vpop.permute.xlu0 %2523
        %2525 = vrot.lane.b32.xlu0 %v2506, 96
        %v2526 = vpop.permute.xlu0 %2525
        %2527 = vrot.lane.b32.xlu0 %v2507, 96
        %v2528 = vpop.permute.xlu0 %2527
        %2529 = vrot.lane.b32.xlu0 %v2508, 96
        %v2530 = vpop.permute.xlu0 %2529
        %2531 = vrot.lane.b32.xlu0 %v2509, 96
        %v2532 = vpop.permute.xlu0 %2531
        %2533 = vrot.lane.b32.xlu0 %v2510, 96
        %v2534 = vpop.permute.xlu0 %2533
        %2535 = vrot.lane.b32.xlu0 %v2511, 96
        %v2536 = vpop.permute.xlu0 %2535
        %2537 = vrot.lane.b32.xlu0 %v2512, 96
        %v2538 = vpop.permute.xlu0 %2537
        %2539 = vrot.lane.b32.xlu0 %v2513, 96
        %v2540 = vpop.permute.xlu0 %2539
        %2541 = vrot.lane.b32.xlu0 %v2514, 96
        %v2542 = vpop.permute.xlu0 %2541
        %2543 = vrot.lane.b32.xlu0 %v2515, 96
        %v2544 = vpop.permute.xlu0 %2543
        %2545 = vrot.lane.b32.xlu0 %v2516, 96
        %v2546 = vpop.permute.xlu0 %2545
        %2547 = vrot.lane.b32.xlu0 %v2517, 96
        %v2548 = vpop.permute.xlu0 %2547
        %2549 = vrot.lane.b32.xlu0 %v2518, 96
        %v2550 = vpop.permute.xlu0 %2549
        %2567 = vmatprep.subr.bf16.mxu0 0
        %2568 = vmatpush1.bf16.msra.mxu0 %v2534
        %2569 = vmatprep.subr.bf16.mxu0 0
        %2570 = vmatpush1.bf16.msra.mxu0 %v2532
        %2571 = vmatprep.subr.bf16.mxu0 0
        %2572 = vmatpush1.bf16.msra.mxu0 %v2530
        %2573 = vmatprep.subr.bf16.mxu0 0
        %2574 = vmatpush1.bf16.msra.mxu0 %v2528
        %2575 = vmatprep.subr.bf16.mxu0 0
        %2576 = vmatpush1.bf16.msra.mxu0 %v2526
        %2577 = vmatprep.subr.bf16.mxu0 0
        %2578 = vmatpush1.bf16.msra.mxu0 %v2524
        %2579 = vmatprep.subr.bf16.mxu0 0
        %2580 = vmatpush1.bf16.msra.mxu0 %v2522
        %2581 = vmatprep.subr.bf16.mxu0 0
        %2582 = vmatpush1.bf16.msra.mxu0 %v2520
        %2583 = vmatprep.subr.bf16.mxu0 0
        %2584 = vmatpush2.bf16.msra.mxu0 %v2550
        %2585 = vmatprep.subr.bf16.mxu0 0
        %2586 = vmatpush2.bf16.msra.mxu0 %v2548
        %2587 = vmatprep.subr.bf16.mxu0 0
        %2588 = vmatpush2.bf16.msra.mxu0 %v2546
        %2589 = vmatprep.subr.bf16.mxu0 0
        %2590 = vmatpush2.bf16.msra.mxu0 %v2544
        %2591 = vmatprep.subr.bf16.mxu0 0
        %2592 = vmatpush2.bf16.msra.mxu0 %v2542
        %2593 = vmatprep.subr.bf16.mxu0 0
        %2594 = vmatpush2.bf16.msra.mxu0 %v2540
        %2595 = vmatprep.subr.bf16.mxu0 0
        %2596 = vmatpush2.bf16.msra.mxu0 %v2538
        %2597 = vmatprep.subr.bf16.mxu0 0
        %2598 = vmatpush2.bf16.msra.mxu0 %v2536
        %2599 = vmatprep.mubr.bf16.mxu0 %v2424
        %2600 = vmatmul.mubr.bf16.gmra.mxu0 %v2423
        %v2601 = vpop.f32.mrf.mxu0
        %v2602 = vadd.f32 0.0, %v2601
        %v2603 = vpop.f32.mrf.mxu0
        %v2604 = vpop.f32.mrf.mxu0
        %v2605 = vadd.f32 0.0, %v2604
        %v2606 = vpop.f32.mrf.mxu0
        %2607 = vmatprep.mubr.bf16.mxu0 %v2426
        %2608 = vmatmul.mubr.bf16.gmra.mxu0 %v2425
        %v2609 = vpop.f32.mrf.mxu0
        %v2610 = vadd.f32 0.0, %v2609
        %v2611 = vpop.f32.mrf.mxu0
        %v2612 = vpop.f32.mrf.mxu0
        %v2613 = vadd.f32 0.0, %v2612
        %v2614 = vpop.f32.mrf.mxu0
        %2615 = vmatprep.mubr.bf16.mxu0 %v2428
        %2616 = vmatmul.mubr.bf16.gmra.mxu0 %v2427
        %v2617 = vpop.f32.mrf.mxu0
        %v2618 = vadd.f32 0.0, %v2617
        %v2619 = vpop.f32.mrf.mxu0
        %v2620 = vpop.f32.mrf.mxu0
        %v2621 = vadd.f32 0.0, %v2620
        %v2622 = vpop.f32.mrf.mxu0
        %2623 = vmatprep.mubr.bf16.mxu0 %v2430
        %2624 = vmatmul.mubr.bf16.gmra.mxu0 %v2429
        %v2625 = vpop.f32.mrf.mxu0
        %v2626 = vadd.f32 0.0, %v2625
        %v2627 = vpop.f32.mrf.mxu0
        %v2628 = vpop.f32.mrf.mxu0
        %v2629 = vadd.f32 0.0, %v2628
        %v2630 = vpop.f32.mrf.mxu0
        %2631 = vmatprep.mubr.bf16.mxu0 %v2432
        %2632 = vmatmul.mubr.bf16.gmra.mxu0 %v2431
        %v2633 = vpop.f32.mrf.mxu0
        %v2634 = vadd.f32 0.0, %v2633
        %v2635 = vpop.f32.mrf.mxu0
        %v2636 = vpop.f32.mrf.mxu0
        %v2637 = vadd.f32 0.0, %v2636
        %v2638 = vpop.f32.mrf.mxu0
        %2639 = vmatprep.mubr.bf16.mxu0 %v2434
        %2640 = vmatmul.mubr.bf16.gmra.mxu0 %v2433
        %v2641 = vpop.f32.mrf.mxu0
        %v2642 = vadd.f32 0.0, %v2641
        %v2643 = vpop.f32.mrf.mxu0
        %v2644 = vpop.f32.mrf.mxu0
        %v2645 = vadd.f32 0.0, %v2644
        %v2646 = vpop.f32.mrf.mxu0
        %2647 = vmatprep.mubr.bf16.mxu0 %v2436
        %2648 = vmatmul.mubr.bf16.gmra.mxu0 %v2435
        %v2649 = vpop.f32.mrf.mxu0
        %v2650 = vadd.f32 0.0, %v2649
        %v2651 = vpop.f32.mrf.mxu0
        %v2652 = vpop.f32.mrf.mxu0
        %v2653 = vadd.f32 0.0, %v2652
        %v2654 = vpop.f32.mrf.mxu0
        %2655 = vmatprep.mubr.bf16.mxu0 %v2438
        %2656 = vmatmul.mubr.bf16.gmra.mxu0 %v2437
        %v2657 = vpop.f32.mrf.mxu0
        %v2658 = vadd.f32 0.0, %v2657
        %v2659 = vpop.f32.mrf.mxu0
        %v2660 = vpop.f32.mrf.mxu0
        %v2661 = vadd.f32 0.0, %v2660
        %v2662 = vpop.f32.mrf.mxu0
        %2663 = vdwg.mxu0
        %v2664 = vrcp.pop %v2377
        %v2665 = vrcp.pop %v2380
        %v2666 = vrcp.pop %v2383
        %v2667 = vrcp.pop %v2386
        %v2668 = vrcp.pop %v2389
        %v2669 = vrcp.pop %v2392
        %v2670 = vrcp.pop %v2395
        %v2671 = vrcp.pop %v2398
        %v2672 = vrcp.pop %v2401
        %v2673 = vrcp.pop %v2404
        %v2674 = vrcp.pop %v2407
        %v2675 = vrcp.pop %v2410
        %v2676 = vrcp.pop %v2413
        %v2677 = vrcp.pop %v2416
        %v2678 = vrcp.pop %v2419
        %v2679 = vrcp.pop %v2422
        %v2680 = vmul.f32 %v2602, %v2664
        %v2681 = vmul.f32 %v2605, %v2665
        %v2682 = vmul.f32 %v2610, %v2666
        %v2683 = vmul.f32 %v2613, %v2667
        %v2684 = vmul.f32 %v2618, %v2668
        %v2685 = vmul.f32 %v2621, %v2669
        %v2686 = vmul.f32 %v2626, %v2670
        %v2687 = vmul.f32 %v2629, %v2671
        %v2688 = vmul.f32 %v2634, %v2672
        %v2689 = vmul.f32 %v2637, %v2673
        %v2690 = vmul.f32 %v2642, %v2674
        %v2691 = vmul.f32 %v2645, %v2675
        %v2692 = vmul.f32 %v2650, %v2676
        %v2693 = vmul.f32 %v2653, %v2677
        %v2694 = vmul.f32 %v2658, %v2678
        %v2695 = vmul.f32 %v2661, %v2679
        %2712 = vrot.lane.b32.xlu0 %v2680, 32
        %v2713 = vpop.permute.xlu0 %2712
        %2714 = vrot.lane.b32.xlu0 %v2681, 32
        %v2715 = vpop.permute.xlu0 %2714
        %2716 = vrot.lane.b32.xlu0 %v2682, 32
        %v2717 = vpop.permute.xlu0 %2716
        %2718 = vrot.lane.b32.xlu0 %v2683, 32
        %v2719 = vpop.permute.xlu0 %2718
        %2720 = vrot.lane.b32.xlu0 %v2684, 32
        %v2721 = vpop.permute.xlu0 %2720
        %2722 = vrot.lane.b32.xlu0 %v2685, 32
        %v2723 = vpop.permute.xlu0 %2722
        %2724 = vrot.lane.b32.xlu0 %v2686, 32
        %v2725 = vpop.permute.xlu0 %2724
        %2726 = vrot.lane.b32.xlu0 %v2687, 32
        %v2727 = vpop.permute.xlu0 %2726
        %2728 = vrot.lane.b32.xlu0 %v2688, 32
        %v2729 = vpop.permute.xlu0 %2728
        %2730 = vrot.lane.b32.xlu0 %v2689, 32
        %v2731 = vpop.permute.xlu0 %2730
        %2732 = vrot.lane.b32.xlu0 %v2690, 32
        %v2733 = vpop.permute.xlu0 %2732
        %2734 = vrot.lane.b32.xlu0 %v2691, 32
        %v2735 = vpop.permute.xlu0 %2734
        %2736 = vrot.lane.b32.xlu0 %v2692, 32
        %v2737 = vpop.permute.xlu0 %2736
        %2738 = vrot.lane.b32.xlu0 %v2693, 32
        %v2739 = vpop.permute.xlu0 %2738
        %2740 = vrot.lane.b32.xlu0 %v2694, 32
        %v2741 = vpop.permute.xlu0 %2740
        %2742 = vrot.lane.b32.xlu0 %v2695, 32
        %v2743 = vpop.permute.xlu0 %2742
        %vm2760 = vcmask 523520
        %2761 = vst.msk [vmem:[#allocation3] sm:$0xff] %vm2760, %v2713
        %2762 = vst.msk [vmem:[#allocation3 + $0x8] sm:$0xff] %vm2760, %v2715
        %2763 = vst.msk [vmem:[#allocation3 + $0x10] sm:$0xff] %vm2760, %v2717
        %2764 = vst.msk [vmem:[#allocation3 + $0x18] sm:$0xff] %vm2760, %v2719
        %2765 = vst.msk [vmem:[#allocation3 + $0x20] sm:$0xff] %vm2760, %v2721
        %2766 = vst.msk [vmem:[#allocation3 + $0x28] sm:$0xff] %vm2760, %v2723
        %2767 = vst.msk [vmem:[#allocation3 + $0x30] sm:$0xff] %vm2760, %v2725
        %2768 = vst.msk [vmem:[#allocation3 + $0x38] sm:$0xff] %vm2760, %v2727
        %2769 = vst.msk [vmem:[#allocation3 + $0x40] sm:$0xff] %vm2760, %v2729
        %2770 = vst.msk [vmem:[#allocation3 + $0x48] sm:$0xff] %vm2760, %v2731
        %2771 = vst.msk [vmem:[#allocation3 + $0x50] sm:$0xff] %vm2760, %v2733
        %2772 = vst.msk [vmem:[#allocation3 + $0x58] sm:$0xff] %vm2760, %v2735
        %2773 = vst.msk [vmem:[#allocation3 + $0x60] sm:$0xff] %vm2760, %v2737
        %2774 = vst.msk [vmem:[#allocation3 + $0x68] sm:$0xff] %vm2760, %v2739
        %2775 = vst.msk [vmem:[#allocation3 + $0x70] sm:$0xff] %vm2760, %v2741
        %2776 = vst.msk [vmem:[#allocation3 + $0x78] sm:$0xff] %vm2760, %v2743
        %v2777 = vld [vmem:[#allocation2] sm:$0xf]
        %v2778 = vld [vmem:[#allocation2 + $0x8] sm:$0xf]
        %v2779 = vld [vmem:[#allocation2 + $0x10] sm:$0xf]
        %v2780 = vld [vmem:[#allocation2 + $0x18] sm:$0xf]
        %v2781 = vld [vmem:[#allocation2 + $0x20] sm:$0xf]
        %v2782 = vld [vmem:[#allocation2 + $0x28] sm:$0xf]
        %v2783 = vld [vmem:[#allocation2 + $0x30] sm:$0xf]
        %v2784 = vld [vmem:[#allocation2 + $0x38] sm:$0xf]
        %v2785 = vld [vmem:[#allocation2 + $0x40] sm:$0xf]
        %v2786 = vld [vmem:[#allocation2 + $0x48] sm:$0xf]
        %v2787 = vld [vmem:[#allocation2 + $0x50] sm:$0xf]
        %v2788 = vld [vmem:[#allocation2 + $0x58] sm:$0xf]
        %v2789 = vld [vmem:[#allocation2 + $0x60] sm:$0xf]
        %v2790 = vld [vmem:[#allocation2 + $0x68] sm:$0xf]
        %v2791 = vld [vmem:[#allocation2 + $0x70] sm:$0xf]
        %v2792 = vld [vmem:[#allocation2 + $0x78] sm:$0xf]
        %v2793 = vld [vmem:[#allocation2 + $0x80] sm:$0xf]
        %v2794 = vld [vmem:[#allocation2 + $0x88] sm:$0xf]
        %v2795 = vld [vmem:[#allocation2 + $0x90] sm:$0xf]
        %v2796 = vld [vmem:[#allocation2 + $0x98] sm:$0xf]
        %v2797 = vld [vmem:[#allocation2 + $0xa0] sm:$0xf]
        %v2798 = vld [vmem:[#allocation2 + $0xa8] sm:$0xf]
        %v2799 = vld [vmem:[#allocation2 + $0xb0] sm:$0xf]
        %v2800 = vld [vmem:[#allocation2 + $0xb8] sm:$0xf]
        %v2801 = vld [vmem:[#allocation2 + $0xc0] sm:$0xf]
        %v2802 = vld [vmem:[#allocation2 + $0xc8] sm:$0xf]
        %v2803 = vld [vmem:[#allocation2 + $0xd0] sm:$0xf]
        %v2804 = vld [vmem:[#allocation2 + $0xd8] sm:$0xf]
        %v2805 = vld [vmem:[#allocation2 + $0xe0] sm:$0xf]
        %v2806 = vld [vmem:[#allocation2 + $0xe8] sm:$0xf]
        %v2807 = vld [vmem:[#allocation2 + $0xf0] sm:$0xf]
        %v2808 = vld [vmem:[#allocation2 + $0xf8] sm:$0xf]
        %v2809 = vld [vmem:[#allocation2 + $0x4] sm:$0xf]
        %v2810 = vld [vmem:[#allocation2 + $0xc] sm:$0xf]
        %v2811 = vld [vmem:[#allocation2 + $0x14] sm:$0xf]
        %v2812 = vld [vmem:[#allocation2 + $0x1c] sm:$0xf]
        %v2813 = vld [vmem:[#allocation2 + $0x24] sm:$0xf]
        %v2814 = vld [vmem:[#allocation2 + $0x2c] sm:$0xf]
        %v2815 = vld [vmem:[#allocation2 + $0x34] sm:$0xf]
        %v2816 = vld [vmem:[#allocation2 + $0x3c] sm:$0xf]
        %v2817 = vld [vmem:[#allocation2 + $0x44] sm:$0xf]
        %v2818 = vld [vmem:[#allocation2 + $0x4c] sm:$0xf]
        %v2819 = vld [vmem:[#allocation2 + $0x54] sm:$0xf]
        %v2820 = vld [vmem:[#allocation2 + $0x5c] sm:$0xf]
        %v2821 = vld [vmem:[#allocation2 + $0x64] sm:$0xf]
        %v2822 = vld [vmem:[#allocation2 + $0x6c] sm:$0xf]
        %v2823 = vld [vmem:[#allocation2 + $0x74] sm:$0xf]
        %v2824 = vld [vmem:[#allocation2 + $0x7c] sm:$0xf]
        %v2825 = vld [vmem:[#allocation2 + $0x84] sm:$0xf]
        %v2826 = vld [vmem:[#allocation2 + $0x8c] sm:$0xf]
        %v2827 = vld [vmem:[#allocation2 + $0x94] sm:$0xf]
        %v2828 = vld [vmem:[#allocation2 + $0x9c] sm:$0xf]
        %v2829 = vld [vmem:[#allocation2 + $0xa4] sm:$0xf]
        %v2830 = vld [vmem:[#allocation2 + $0xac] sm:$0xf]
        %v2831 = vld [vmem:[#allocation2 + $0xb4] sm:$0xf]
        %v2832 = vld [vmem:[#allocation2 + $0xbc] sm:$0xf]
        %v2833 = vld [vmem:[#allocation2 + $0xc4] sm:$0xf]
        %v2834 = vld [vmem:[#allocation2 + $0xcc] sm:$0xf]
        %v2835 = vld [vmem:[#allocation2 + $0xd4] sm:$0xf]
        %v2836 = vld [vmem:[#allocation2 + $0xdc] sm:$0xf]
        %v2837 = vld [vmem:[#allocation2 + $0xe4] sm:$0xf]
        %v2838 = vld [vmem:[#allocation2 + $0xec] sm:$0xf]
        %v2839 = vld [vmem:[#allocation2 + $0xf4] sm:$0xf]
        %v2840 = vld [vmem:[#allocation2 + $0xfc] sm:$0xf]
        %2841 = vrot.lane.b32.xlu0 %v1059, 64
        %v2842 = vpop.permute.xlu0 %2841
        %2843 = vrot.lane.b32.xlu0 %v1060, 64
        %v2844 = vpop.permute.xlu0 %2843
        %2845 = vrot.lane.b32.xlu0 %v1061, 64
        %v2846 = vpop.permute.xlu0 %2845
        %2847 = vrot.lane.b32.xlu0 %v1062, 64
        %v2848 = vpop.permute.xlu0 %2847
        %2849 = vrot.lane.b32.xlu0 %v1063, 64
        %v2850 = vpop.permute.xlu0 %2849
        %2851 = vrot.lane.b32.xlu0 %v1064, 64
        %v2852 = vpop.permute.xlu0 %2851
        %2853 = vrot.lane.b32.xlu0 %v1065, 64
        %v2854 = vpop.permute.xlu0 %2853
        %2855 = vrot.lane.b32.xlu0 %v1066, 64
        %v2856 = vpop.permute.xlu0 %2855
        %v2889 = vunpack.c.l.b16 %v2777
        %v2890 = vunpack.c.l.b16 %v2778
        %v2891 = vunpack.c.l.b16 %v2779
        %v2892 = vunpack.c.l.b16 %v2780
        %v2893 = vunpack.c.l.b16 %v2781
        %v2894 = vunpack.c.l.b16 %v2782
        %v2895 = vunpack.c.l.b16 %v2783
        %v2896 = vunpack.c.l.b16 %v2784
        %v2897 = vunpack.c.l.b16 %v2785
        %v2898 = vunpack.c.l.b16 %v2786
        %v2899 = vunpack.c.l.b16 %v2787
        %v2900 = vunpack.c.l.b16 %v2788
        %v2901 = vunpack.c.l.b16 %v2789
        %v2902 = vunpack.c.l.b16 %v2790
        %v2903 = vunpack.c.l.b16 %v2791
        %v2904 = vunpack.c.l.b16 %v2792
        %v2905 = vunpack.c.l.b16 %v2793
        %v2906 = vunpack.c.l.b16 %v2794
        %v2907 = vunpack.c.l.b16 %v2795
        %v2908 = vunpack.c.l.b16 %v2796
        %v2909 = vunpack.c.l.b16 %v2797
        %v2910 = vunpack.c.l.b16 %v2798
        %v2911 = vunpack.c.l.b16 %v2799
        %v2912 = vunpack.c.l.b16 %v2800
        %v2913 = vunpack.c.l.b16 %v2801
        %v2914 = vunpack.c.l.b16 %v2802
        %v2915 = vunpack.c.l.b16 %v2803
        %v2916 = vunpack.c.l.b16 %v2804
        %v2917 = vunpack.c.l.b16 %v2805
        %v2918 = vunpack.c.l.b16 %v2806
        %v2919 = vunpack.c.l.b16 %v2807
        %v2920 = vunpack.c.l.b16 %v2808
        %v2921 = vpack.c.b16 %v2890, %v2889
        %v2922 = vpack.c.b16 %v2892, %v2891
        %v2923 = vpack.c.b16 %v2894, %v2893
        %v2924 = vpack.c.b16 %v2896, %v2895
        %v2925 = vpack.c.b16 %v2898, %v2897
        %v2926 = vpack.c.b16 %v2900, %v2899
        %v2927 = vpack.c.b16 %v2902, %v2901
        %v2928 = vpack.c.b16 %v2904, %v2903
        %v2929 = vpack.c.b16 %v2906, %v2905
        %v2930 = vpack.c.b16 %v2908, %v2907
        %v2931 = vpack.c.b16 %v2910, %v2909
        %v2932 = vpack.c.b16 %v2912, %v2911
        %v2933 = vpack.c.b16 %v2914, %v2913
        %v2934 = vpack.c.b16 %v2916, %v2915
        %v2935 = vpack.c.b16 %v2918, %v2917
        %v2936 = vpack.c.b16 %v2920, %v2919
        %2937 = vrot.lane.b32.xlu0 %v2921, 64
        %v2938 = vpop.permute.xlu0 %2937
        %2939 = vrot.lane.b32.xlu0 %v2922, 64
        %v2940 = vpop.permute.xlu0 %2939
        %2941 = vrot.lane.b32.xlu0 %v2923, 64
        %v2942 = vpop.permute.xlu0 %2941
        %2943 = vrot.lane.b32.xlu0 %v2924, 64
        %v2944 = vpop.permute.xlu0 %2943
        %2945 = vrot.lane.b32.xlu0 %v2925, 64
        %v2946 = vpop.permute.xlu0 %2945
        %2947 = vrot.lane.b32.xlu0 %v2926, 64
        %v2948 = vpop.permute.xlu0 %2947
        %2949 = vrot.lane.b32.xlu0 %v2927, 64
        %v2950 = vpop.permute.xlu0 %2949
        %2951 = vrot.lane.b32.xlu0 %v2928, 64
        %v2952 = vpop.permute.xlu0 %2951
        %2953 = vrot.lane.b32.xlu0 %v2929, 64
        %v2954 = vpop.permute.xlu0 %2953
        %2955 = vrot.lane.b32.xlu0 %v2930, 64
        %v2956 = vpop.permute.xlu0 %2955
        %2957 = vrot.lane.b32.xlu0 %v2931, 64
        %v2958 = vpop.permute.xlu0 %2957
        %2959 = vrot.lane.b32.xlu0 %v2932, 64
        %v2960 = vpop.permute.xlu0 %2959
        %2961 = vrot.lane.b32.xlu0 %v2933, 64
        %v2962 = vpop.permute.xlu0 %2961
        %2963 = vrot.lane.b32.xlu0 %v2934, 64
        %v2964 = vpop.permute.xlu0 %2963
        %2965 = vrot.lane.b32.xlu0 %v2935, 64
        %v2966 = vpop.permute.xlu0 %2965
        %2967 = vrot.lane.b32.xlu0 %v2936, 64
        %v2968 = vpop.permute.xlu0 %2967
        %v2970 = vsel %vm1211, %v2842, 0
        %v2973 = vsel %vm1211, %v2844, 0
        %v2976 = vsel %vm1211, %v2846, 0
        %v2979 = vsel %vm1211, %v2848, 0
        %v2982 = vsel %vm1211, %v2850, 0
        %v2985 = vsel %vm1211, %v2852, 0
        %v2988 = vsel %vm1211, %v2854, 0
        %v2991 = vsel %vm1211, %v2856, 0
        %v2994 = vsel %vm1211, %v2938, 0
        %v2997 = vsel %vm1211, %v2940, 0
        %v3000 = vsel %vm1211, %v2942, 0
        %v3003 = vsel %vm1211, %v2944, 0
        %v3006 = vsel %vm1211, %v2946, 0
        %v3009 = vsel %vm1211, %v2948, 0
        %v3012 = vsel %vm1211, %v2950, 0
        %v3015 = vsel %vm1211, %v2952, 0
        %v3018 = vsel %vm1211, %v2954, 0
        %v3021 = vsel %vm1211, %v2956, 0
        %v3024 = vsel %vm1211, %v2958, 0
        %v3027 = vsel %vm1211, %v2960, 0
        %v3030 = vsel %vm1211, %v2962, 0
        %v3033 = vsel %vm1211, %v2964, 0
        %v3036 = vsel %vm1211, %v2966, 0
        %v3039 = vsel %vm1211, %v2968, 0
        %3041 = vmatprep.subr.bf16.mxu0 0
        %3042 = vmatpush1.bf16.xpose.msra.mxu0 %v3015
        %3043 = vmatprep.subr.bf16.mxu0 0
        %3044 = vmatpush1.bf16.xpose.msra.mxu0 %v3012
        %3045 = vmatprep.subr.bf16.mxu0 0
        %3046 = vmatpush1.bf16.xpose.msra.mxu0 %v3009
        %3047 = vmatprep.subr.bf16.mxu0 0
        %3048 = vmatpush1.bf16.xpose.msra.mxu0 %v3006
        %3049 = vmatprep.subr.bf16.mxu0 0
        %3050 = vmatpush1.bf16.xpose.msra.mxu0 %v3003
        %3051 = vmatprep.subr.bf16.mxu0 0
        %3052 = vmatpush1.bf16.xpose.msra.mxu0 %v3000
        %3053 = vmatprep.subr.bf16.mxu0 0
        %3054 = vmatpush1.bf16.xpose.msra.mxu0 %v2997
        %3055 = vmatprep.subr.bf16.mxu0 0
        %3056 = vmatpush1.bf16.xpose.msra.mxu0 %v2994
        %3057 = vmatprep.subr.bf16.mxu0 0
        %3058 = vmatpush2.bf16.xpose.msra.mxu0 %v3039
        %3059 = vmatprep.subr.bf16.mxu0 0
        %3060 = vmatpush2.bf16.xpose.msra.mxu0 %v3036
        %3061 = vmatprep.subr.bf16.mxu0 0
        %3062 = vmatpush2.bf16.xpose.msra.mxu0 %v3033
        %3063 = vmatprep.subr.bf16.mxu0 0
        %3064 = vmatpush2.bf16.xpose.msra.mxu0 %v3030
        %3065 = vmatprep.subr.bf16.mxu0 0
        %3066 = vmatpush2.bf16.xpose.msra.mxu0 %v3027
        %3067 = vmatprep.subr.bf16.mxu0 0
        %3068 = vmatpush2.bf16.xpose.msra.mxu0 %v3024
        %3069 = vmatprep.subr.bf16.mxu0 0
        %3070 = vmatpush2.bf16.xpose.msra.mxu0 %v3021
        %3071 = vmatprep.subr.bf16.mxu0 0
        %3072 = vmatpush2.bf16.xpose.msra.mxu0 %v3018
        %3073 = vmatprep.mubr.bf16.mxu0 0
        %3074 = vmatmul.mubr.bf16.gmra.mxu0 %v2970
        %v3075 = vpop.f32.mrf.mxu0
        %v3076 = vadd.f32 0.0, %v3075
        %v3077 = vpop.f32.mrf.mxu0
        %v3078 = vadd.f32 0.0, %v3077
        %v3079 = vpop.f32.mrf.mxu0
        %v3080 = vadd.f32 0.0, %v3079
        %v3081 = vpop.f32.mrf.mxu0
        %v3082 = vadd.f32 0.0, %v3081
        %3083 = vmatprep.mubr.bf16.mxu0 0
        %3084 = vmatmul.mubr.bf16.gmra.mxu0 %v2973
        %v3085 = vpop.f32.mrf.mxu0
        %v3086 = vadd.f32 0.0, %v3085
        %v3087 = vpop.f32.mrf.mxu0
        %v3088 = vadd.f32 0.0, %v3087
        %v3089 = vpop.f32.mrf.mxu0
        %v3090 = vadd.f32 0.0, %v3089
        %v3091 = vpop.f32.mrf.mxu0
        %v3092 = vadd.f32 0.0, %v3091
        %3093 = vmatprep.mubr.bf16.mxu0 0
        %3094 = vmatmul.mubr.bf16.gmra.mxu0 %v2976
        %v3095 = vpop.f32.mrf.mxu0
        %v3096 = vadd.f32 0.0, %v3095
        %v3097 = vpop.f32.mrf.mxu0
        %v3098 = vadd.f32 0.0, %v3097
        %v3099 = vpop.f32.mrf.mxu0
        %v3100 = vadd.f32 0.0, %v3099
        %v3101 = vpop.f32.mrf.mxu0
        %v3102 = vadd.f32 0.0, %v3101
        %3103 = vmatprep.mubr.bf16.mxu0 0
        %3104 = vmatmul.mubr.bf16.gmra.mxu0 %v2979
        %v3105 = vpop.f32.mrf.mxu0
        %v3106 = vadd.f32 0.0, %v3105
        %v3107 = vpop.f32.mrf.mxu0
        %v3108 = vadd.f32 0.0, %v3107
        %v3109 = vpop.f32.mrf.mxu0
        %v3110 = vadd.f32 0.0, %v3109
        %v3111 = vpop.f32.mrf.mxu0
        %v3112 = vadd.f32 0.0, %v3111
        %3113 = vmatprep.mubr.bf16.mxu0 0
        %3114 = vmatmul.mubr.bf16.gmra.mxu0 %v2982
        %v3115 = vpop.f32.mrf.mxu0
        %v3116 = vadd.f32 0.0, %v3115
        %v3117 = vpop.f32.mrf.mxu0
        %v3118 = vadd.f32 0.0, %v3117
        %v3119 = vpop.f32.mrf.mxu0
        %v3120 = vadd.f32 0.0, %v3119
        %v3121 = vpop.f32.mrf.mxu0
        %v3122 = vadd.f32 0.0, %v3121
        %3123 = vmatprep.mubr.bf16.mxu0 0
        %3124 = vmatmul.mubr.bf16.gmra.mxu0 %v2985
        %v3125 = vpop.f32.mrf.mxu0
        %v3126 = vadd.f32 0.0, %v3125
        %v3127 = vpop.f32.mrf.mxu0
        %v3128 = vadd.f32 0.0, %v3127
        %v3129 = vpop.f32.mrf.mxu0
        %v3130 = vadd.f32 0.0, %v3129
        %v3131 = vpop.f32.mrf.mxu0
        %v3132 = vadd.f32 0.0, %v3131
        %3133 = vmatprep.mubr.bf16.mxu0 0
        %3134 = vmatmul.mubr.bf16.gmra.mxu0 %v2988
        %v3135 = vpop.f32.mrf.mxu0
        %v3136 = vadd.f32 0.0, %v3135
        %v3137 = vpop.f32.mrf.mxu0
        %v3138 = vadd.f32 0.0, %v3137
        %v3139 = vpop.f32.mrf.mxu0
        %v3140 = vadd.f32 0.0, %v3139
        %v3141 = vpop.f32.mrf.mxu0
        %v3142 = vadd.f32 0.0, %v3141
        %3143 = vmatprep.mubr.bf16.mxu0 0
        %3144 = vmatmul.mubr.bf16.gmra.mxu0 %v2991
        %v3145 = vpop.f32.mrf.mxu0
        %v3146 = vadd.f32 0.0, %v3145
        %v3147 = vpop.f32.mrf.mxu0
        %v3148 = vadd.f32 0.0, %v3147
        %v3149 = vpop.f32.mrf.mxu0
        %v3150 = vadd.f32 0.0, %v3149
        %v3151 = vpop.f32.mrf.mxu0
        %v3152 = vadd.f32 0.0, %v3151
        %3153 = vdwg.mxu0
        %v3154 = vmax.f32 %v3076, %v3078
        %3155 = vmax.xlane.f32.xlu0 %v3154
        %v3156 = vpop.xlane.xlu0 %3155
        %v3157 = vmax.f32 %v3080, %v3082
        %3158 = vmax.xlane.f32.xlu0 %v3157
        %v3159 = vpop.xlane.xlu0 %3158
        %v3160 = vmax.f32 %v3086, %v3088
        %3161 = vmax.xlane.f32.xlu0 %v3160
        %v3162 = vpop.xlane.xlu0 %3161
        %v3163 = vmax.f32 %v3090, %v3092
        %3164 = vmax.xlane.f32.xlu0 %v3163
        %v3165 = vpop.xlane.xlu0 %3164
        %v3166 = vmax.f32 %v3096, %v3098
        %3167 = vmax.xlane.f32.xlu0 %v3166
        %v3168 = vpop.xlane.xlu0 %3167
        %v3169 = vmax.f32 %v3100, %v3102
        %3170 = vmax.xlane.f32.xlu0 %v3169
        %v3171 = vpop.xlane.xlu0 %3170
        %v3172 = vmax.f32 %v3106, %v3108
        %3173 = vmax.xlane.f32.xlu0 %v3172
        %v3174 = vpop.xlane.xlu0 %3173
        %v3175 = vmax.f32 %v3110, %v3112
        %3176 = vmax.xlane.f32.xlu0 %v3175
        %v3177 = vpop.xlane.xlu0 %3176
        %v3178 = vmax.f32 %v3116, %v3118
        %3179 = vmax.xlane.f32.xlu0 %v3178
        %v3180 = vpop.xlane.xlu0 %3179
        %v3181 = vmax.f32 %v3120, %v3122
        %3182 = vmax.xlane.f32.xlu0 %v3181
        %v3183 = vpop.xlane.xlu0 %3182
        %v3184 = vmax.f32 %v3126, %v3128
        %3185 = vmax.xlane.f32.xlu0 %v3184
        %v3186 = vpop.xlane.xlu0 %3185
        %v3187 = vmax.f32 %v3130, %v3132
        %3188 = vmax.xlane.f32.xlu0 %v3187
        %v3189 = vpop.xlane.xlu0 %3188
        %v3190 = vmax.f32 %v3136, %v3138
        %3191 = vmax.xlane.f32.xlu0 %v3190
        %v3192 = vpop.xlane.xlu0 %3191
        %v3193 = vmax.f32 %v3140, %v3142
        %3194 = vmax.xlane.f32.xlu0 %v3193
        %v3195 = vpop.xlane.xlu0 %3194
        %v3196 = vmax.f32 %v3146, %v3148
        %3197 = vmax.xlane.f32.xlu0 %v3196
        %v3198 = vpop.xlane.xlu0 %3197
        %v3199 = vmax.f32 %v3150, %v3152
        %3200 = vmax.xlane.f32.xlu0 %v3199
        %v3201 = vpop.xlane.xlu0 %3200
        %v3202 = vsub.f32 %v3076, %v3156
        %v3203 = vsub.f32 %v3078, %v3156
        %v3204 = vsub.f32 %v3080, %v3159
        %v3205 = vsub.f32 %v3082, %v3159
        %v3206 = vsub.f32 %v3086, %v3162
        %v3207 = vsub.f32 %v3088, %v3162
        %v3208 = vsub.f32 %v3090, %v3165
        %v3209 = vsub.f32 %v3092, %v3165
        %v3210 = vsub.f32 %v3096, %v3168
        %v3211 = vsub.f32 %v3098, %v3168
        %v3212 = vsub.f32 %v3100, %v3171
        %v3213 = vsub.f32 %v3102, %v3171
        %v3214 = vsub.f32 %v3106, %v3174
        %v3215 = vsub.f32 %v3108, %v3174
        %v3216 = vsub.f32 %v3110, %v3177
        %v3217 = vsub.f32 %v3112, %v3177
        %v3218 = vsub.f32 %v3116, %v3180
        %v3219 = vsub.f32 %v3118, %v3180
        %v3220 = vsub.f32 %v3120, %v3183
        %v3221 = vsub.f32 %v3122, %v3183
        %v3222 = vsub.f32 %v3126, %v3186
        %v3223 = vsub.f32 %v3128, %v3186
        %v3224 = vsub.f32 %v3130, %v3189
        %v3225 = vsub.f32 %v3132, %v3189
        %v3226 = vsub.f32 %v3136, %v3192
        %v3227 = vsub.f32 %v3138, %v3192
        %v3228 = vsub.f32 %v3140, %v3195
        %v3229 = vsub.f32 %v3142, %v3195
        %v3230 = vsub.f32 %v3146, %v3198
        %v3231 = vsub.f32 %v3148, %v3198
        %v3232 = vsub.f32 %v3150, %v3201
        %v3233 = vsub.f32 %v3152, %v3201
        %v3234 = vmul.f32 %v3202, 1.442695
        %v3235 = vpow.pop %v3234
        %v3236 = vmul.f32 %v3203, 1.442695
        %v3237 = vpow.pop %v3236
        %v3238 = vmul.f32 %v3204, 1.442695
        %v3239 = vpow.pop %v3238
        %v3240 = vmul.f32 %v3205, 1.442695
        %v3241 = vpow.pop %v3240
        %v3242 = vmul.f32 %v3206, 1.442695
        %v3243 = vpow.pop %v3242
        %v3244 = vmul.f32 %v3207, 1.442695
        %v3245 = vpow.pop %v3244
        %v3246 = vmul.f32 %v3208, 1.442695
        %v3247 = vpow.pop %v3246
        %v3248 = vmul.f32 %v3209, 1.442695
        %v3249 = vpow.pop %v3248
        %v3250 = vmul.f32 %v3210, 1.442695
        %v3251 = vpow.pop %v3250
        %v3252 = vmul.f32 %v3211, 1.442695
        %v3253 = vpow.pop %v3252
        %v3254 = vmul.f32 %v3212, 1.442695
        %v3255 = vpow.pop %v3254
        %v3256 = vmul.f32 %v3213, 1.442695
        %v3257 = vpow.pop %v3256
        %v3258 = vmul.f32 %v3214, 1.442695
        %v3259 = vpow.pop %v3258
        %v3260 = vmul.f32 %v3215, 1.442695
        %v3261 = vpow.pop %v3260
        %v3262 = vmul.f32 %v3216, 1.442695
        %v3263 = vpow.pop %v3262
        %v3264 = vmul.f32 %v3217, 1.442695
        %v3265 = vpow.pop %v3264
        %v3266 = vmul.f32 %v3218, 1.442695
        %v3267 = vpow.pop %v3266
        %v3268 = vmul.f32 %v3219, 1.442695
        %v3269 = vpow.pop %v3268
        %v3270 = vmul.f32 %v3220, 1.442695
        %v3271 = vpow.pop %v3270
        %v3272 = vmul.f32 %v3221, 1.442695
        %v3273 = vpow.pop %v3272
        %v3274 = vmul.f32 %v3222, 1.442695
        %v3275 = vpow.pop %v3274
        %v3276 = vmul.f32 %v3223, 1.442695
        %v3277 = vpow.pop %v3276
        %v3278 = vmul.f32 %v3224, 1.442695
        %v3279 = vpow.pop %v3278
        %v3280 = vmul.f32 %v3225, 1.442695
        %v3281 = vpow.pop %v3280
        %v3282 = vmul.f32 %v3226, 1.442695
        %v3283 = vpow.pop %v3282
        %v3284 = vmul.f32 %v3227, 1.442695
        %v3285 = vpow.pop %v3284
        %v3286 = vmul.f32 %v3228, 1.442695
        %v3287 = vpow.pop %v3286
        %v3288 = vmul.f32 %v3229, 1.442695
        %v3289 = vpow.pop %v3288
        %v3290 = vmul.f32 %v3230, 1.442695
        %v3291 = vpow.pop %v3290
        %v3292 = vmul.f32 %v3231, 1.442695
        %v3293 = vpow.pop %v3292
        %v3294 = vmul.f32 %v3232, 1.442695
        %v3295 = vpow.pop %v3294
        %v3296 = vmul.f32 %v3233, 1.442695
        %v3297 = vpow.pop %v3296
        %v3298 = vadd.f32 %v3235, %v3237
        %3299 = vadd.xlane.f32.xlu0 %v3298
        %v3300 = vpop.xlane.xlu0 %3299
        %v3301 = vadd.f32 %v3239, %v3241
        %3302 = vadd.xlane.f32.xlu0 %v3301
        %v3303 = vpop.xlane.xlu0 %3302
        %v3304 = vadd.f32 %v3243, %v3245
        %3305 = vadd.xlane.f32.xlu0 %v3304
        %v3306 = vpop.xlane.xlu0 %3305
        %v3307 = vadd.f32 %v3247, %v3249
        %3308 = vadd.xlane.f32.xlu0 %v3307
        %v3309 = vpop.xlane.xlu0 %3308
        %v3310 = vadd.f32 %v3251, %v3253
        %3311 = vadd.xlane.f32.xlu0 %v3310
        %v3312 = vpop.xlane.xlu0 %3311
        %v3313 = vadd.f32 %v3255, %v3257
        %3314 = vadd.xlane.f32.xlu0 %v3313
        %v3315 = vpop.xlane.xlu0 %3314
        %v3316 = vadd.f32 %v3259, %v3261
        %3317 = vadd.xlane.f32.xlu0 %v3316
        %v3318 = vpop.xlane.xlu0 %3317
        %v3319 = vadd.f32 %v3263, %v3265
        %3320 = vadd.xlane.f32.xlu0 %v3319
        %v3321 = vpop.xlane.xlu0 %3320
        %v3322 = vadd.f32 %v3267, %v3269
        %3323 = vadd.xlane.f32.xlu0 %v3322
        %v3324 = vpop.xlane.xlu0 %3323
        %v3325 = vadd.f32 %v3271, %v3273
        %3326 = vadd.xlane.f32.xlu0 %v3325
        %v3327 = vpop.xlane.xlu0 %3326
        %v3328 = vadd.f32 %v3275, %v3277
        %3329 = vadd.xlane.f32.xlu0 %v3328
        %v3330 = vpop.xlane.xlu0 %3329
        %v3331 = vadd.f32 %v3279, %v3281
        %3332 = vadd.xlane.f32.xlu0 %v3331
        %v3333 = vpop.xlane.xlu0 %3332
        %v3334 = vadd.f32 %v3283, %v3285
        %3335 = vadd.xlane.f32.xlu0 %v3334
        %v3336 = vpop.xlane.xlu0 %3335
        %v3337 = vadd.f32 %v3287, %v3289
        %3338 = vadd.xlane.f32.xlu0 %v3337
        %v3339 = vpop.xlane.xlu0 %3338
        %v3340 = vadd.f32 %v3291, %v3293
        %3341 = vadd.xlane.f32.xlu0 %v3340
        %v3342 = vpop.xlane.xlu0 %3341
        %v3343 = vadd.f32 %v3295, %v3297
        %3344 = vadd.xlane.f32.xlu0 %v3343
        %v3345 = vpop.xlane.xlu0 %3344
        %v3346 = vpack.c.bf16 %v3239, %v3235
        %v3347 = vpack.c.bf16 %v3241, %v3237
        %v3348 = vpack.c.bf16 %v3247, %v3243
        %v3349 = vpack.c.bf16 %v3249, %v3245
        %v3350 = vpack.c.bf16 %v3255, %v3251
        %v3351 = vpack.c.bf16 %v3257, %v3253
        %v3352 = vpack.c.bf16 %v3263, %v3259
        %v3353 = vpack.c.bf16 %v3265, %v3261
        %v3354 = vpack.c.bf16 %v3271, %v3267
        %v3355 = vpack.c.bf16 %v3273, %v3269
        %v3356 = vpack.c.bf16 %v3279, %v3275
        %v3357 = vpack.c.bf16 %v3281, %v3277
        %v3358 = vpack.c.bf16 %v3287, %v3283
        %v3359 = vpack.c.bf16 %v3289, %v3285
        %v3360 = vpack.c.bf16 %v3295, %v3291
        %v3361 = vpack.c.bf16 %v3297, %v3293
        %v3394 = vunpack.c.l.b16 %v2809
        %v3395 = vunpack.c.l.b16 %v2810
        %v3396 = vunpack.c.l.b16 %v2811
        %v3397 = vunpack.c.l.b16 %v2812
        %v3398 = vunpack.c.l.b16 %v2813
        %v3399 = vunpack.c.l.b16 %v2814
        %v3400 = vunpack.c.l.b16 %v2815
        %v3401 = vunpack.c.l.b16 %v2816
        %v3402 = vunpack.c.l.b16 %v2817
        %v3403 = vunpack.c.l.b16 %v2818
        %v3404 = vunpack.c.l.b16 %v2819
        %v3405 = vunpack.c.l.b16 %v2820
        %v3406 = vunpack.c.l.b16 %v2821
        %v3407 = vunpack.c.l.b16 %v2822
        %v3408 = vunpack.c.l.b16 %v2823
        %v3409 = vunpack.c.l.b16 %v2824
        %v3410 = vunpack.c.l.b16 %v2825
        %v3411 = vunpack.c.l.b16 %v2826
        %v3412 = vunpack.c.l.b16 %v2827
        %v3413 = vunpack.c.l.b16 %v2828
        %v3414 = vunpack.c.l.b16 %v2829
        %v3415 = vunpack.c.l.b16 %v2830
        %v3416 = vunpack.c.l.b16 %v2831
        %v3417 = vunpack.c.l.b16 %v2832
        %v3418 = vunpack.c.l.b16 %v2833
        %v3419 = vunpack.c.l.b16 %v2834
        %v3420 = vunpack.c.l.b16 %v2835
        %v3421 = vunpack.c.l.b16 %v2836
        %v3422 = vunpack.c.l.b16 %v2837
        %v3423 = vunpack.c.l.b16 %v2838
        %v3424 = vunpack.c.l.b16 %v2839
        %v3425 = vunpack.c.l.b16 %v2840
        %v3426 = vpack.c.b16 %v3395, %v3394
        %v3427 = vpack.c.b16 %v3397, %v3396
        %v3428 = vpack.c.b16 %v3399, %v3398
        %v3429 = vpack.c.b16 %v3401, %v3400
        %v3430 = vpack.c.b16 %v3403, %v3402
        %v3431 = vpack.c.b16 %v3405, %v3404
        %v3432 = vpack.c.b16 %v3407, %v3406
        %v3433 = vpack.c.b16 %v3409, %v3408
        %v3434 = vpack.c.b16 %v3411, %v3410
        %v3435 = vpack.c.b16 %v3413, %v3412
        %v3436 = vpack.c.b16 %v3415, %v3414
        %v3437 = vpack.c.b16 %v3417, %v3416
        %v3438 = vpack.c.b16 %v3419, %v3418
        %v3439 = vpack.c.b16 %v3421, %v3420
        %v3440 = vpack.c.b16 %v3423, %v3422
        %v3441 = vpack.c.b16 %v3425, %v3424
        %3442 = vrot.lane.b32.xlu0 %v3426, 64
        %v3443 = vpop.permute.xlu0 %3442
        %3444 = vrot.lane.b32.xlu0 %v3427, 64
        %v3445 = vpop.permute.xlu0 %3444
        %3446 = vrot.lane.b32.xlu0 %v3428, 64
        %v3447 = vpop.permute.xlu0 %3446
        %3448 = vrot.lane.b32.xlu0 %v3429, 64
        %v3449 = vpop.permute.xlu0 %3448
        %3450 = vrot.lane.b32.xlu0 %v3430, 64
        %v3451 = vpop.permute.xlu0 %3450
        %3452 = vrot.lane.b32.xlu0 %v3431, 64
        %v3453 = vpop.permute.xlu0 %3452
        %3454 = vrot.lane.b32.xlu0 %v3432, 64
        %v3455 = vpop.permute.xlu0 %3454
        %3456 = vrot.lane.b32.xlu0 %v3433, 64
        %v3457 = vpop.permute.xlu0 %3456
        %3458 = vrot.lane.b32.xlu0 %v3434, 64
        %v3459 = vpop.permute.xlu0 %3458
        %3460 = vrot.lane.b32.xlu0 %v3435, 64
        %v3461 = vpop.permute.xlu0 %3460
        %3462 = vrot.lane.b32.xlu0 %v3436, 64
        %v3463 = vpop.permute.xlu0 %3462
        %3464 = vrot.lane.b32.xlu0 %v3437, 64
        %v3465 = vpop.permute.xlu0 %3464
        %3466 = vrot.lane.b32.xlu0 %v3438, 64
        %v3467 = vpop.permute.xlu0 %3466
        %3468 = vrot.lane.b32.xlu0 %v3439, 64
        %v3469 = vpop.permute.xlu0 %3468
        %3470 = vrot.lane.b32.xlu0 %v3440, 64
        %v3471 = vpop.permute.xlu0 %3470
        %3472 = vrot.lane.b32.xlu0 %v3441, 64
        %v3473 = vpop.permute.xlu0 %3472
        %3490 = vmatprep.subr.bf16.mxu0 0
        %3491 = vmatpush1.bf16.msra.mxu0 %v3457
        %3492 = vmatprep.subr.bf16.mxu0 0
        %3493 = vmatpush1.bf16.msra.mxu0 %v3455
        %3494 = vmatprep.subr.bf16.mxu0 0
        %3495 = vmatpush1.bf16.msra.mxu0 %v3453
        %3496 = vmatprep.subr.bf16.mxu0 0
        %3497 = vmatpush1.bf16.msra.mxu0 %v3451
        %3498 = vmatprep.subr.bf16.mxu0 0
        %3499 = vmatpush1.bf16.msra.mxu0 %v3449
        %3500 = vmatprep.subr.bf16.mxu0 0
        %3501 = vmatpush1.bf16.msra.mxu0 %v3447
        %3502 = vmatprep.subr.bf16.mxu0 0
        %3503 = vmatpush1.bf16.msra.mxu0 %v3445
        %3504 = vmatprep.subr.bf16.mxu0 0
        %3505 = vmatpush1.bf16.msra.mxu0 %v3443
        %3506 = vmatprep.subr.bf16.mxu0 0
        %3507 = vmatpush2.bf16.msra.mxu0 %v3473
        %3508 = vmatprep.subr.bf16.mxu0 0
        %3509 = vmatpush2.bf16.msra.mxu0 %v3471
        %3510 = vmatprep.subr.bf16.mxu0 0
        %3511 = vmatpush2.bf16.msra.mxu0 %v3469
        %3512 = vmatprep.subr.bf16.mxu0 0
        %3513 = vmatpush2.bf16.msra.mxu0 %v3467
        %3514 = vmatprep.subr.bf16.mxu0 0
        %3515 = vmatpush2.bf16.msra.mxu0 %v3465
        %3516 = vmatprep.subr.bf16.mxu0 0
        %3517 = vmatpush2.bf16.msra.mxu0 %v3463
        %3518 = vmatprep.subr.bf16.mxu0 0
        %3519 = vmatpush2.bf16.msra.mxu0 %v3461
        %3520 = vmatprep.subr.bf16.mxu0 0
        %3521 = vmatpush2.bf16.msra.mxu0 %v3459
        %3522 = vmatprep.mubr.bf16.mxu0 %v3347
        %3523 = vmatmul.mubr.bf16.gmra.mxu0 %v3346
        %v3524 = vpop.f32.mrf.mxu0
        %v3525 = vadd.f32 0.0, %v3524
        %v3526 = vpop.f32.mrf.mxu0
        %v3527 = vpop.f32.mrf.mxu0
        %v3528 = vadd.f32 0.0, %v3527
        %v3529 = vpop.f32.mrf.mxu0
        %3530 = vmatprep.mubr.bf16.mxu0 %v3349
        %3531 = vmatmul.mubr.bf16.gmra.mxu0 %v3348
        %v3532 = vpop.f32.mrf.mxu0
        %v3533 = vadd.f32 0.0, %v3532
        %v3534 = vpop.f32.mrf.mxu0
        %v3535 = vpop.f32.mrf.mxu0
        %v3536 = vadd.f32 0.0, %v3535
        %v3537 = vpop.f32.mrf.mxu0
        %3538 = vmatprep.mubr.bf16.mxu0 %v3351
        %3539 = vmatmul.mubr.bf16.gmra.mxu0 %v3350
        %v3540 = vpop.f32.mrf.mxu0
        %v3541 = vadd.f32 0.0, %v3540
        %v3542 = vpop.f32.mrf.mxu0
        %v3543 = vpop.f32.mrf.mxu0
        %v3544 = vadd.f32 0.0, %v3543
        %v3545 = vpop.f32.mrf.mxu0
        %3546 = vmatprep.mubr.bf16.mxu0 %v3353
        %3547 = vmatmul.mubr.bf16.gmra.mxu0 %v3352
        %v3548 = vpop.f32.mrf.mxu0
        %v3549 = vadd.f32 0.0, %v3548
        %v3550 = vpop.f32.mrf.mxu0
        %v3551 = vpop.f32.mrf.mxu0
        %v3552 = vadd.f32 0.0, %v3551
        %v3553 = vpop.f32.mrf.mxu0
        %3554 = vmatprep.mubr.bf16.mxu0 %v3355
        %3555 = vmatmul.mubr.bf16.gmra.mxu0 %v3354
        %v3556 = vpop.f32.mrf.mxu0
        %v3557 = vadd.f32 0.0, %v3556
        %v3558 = vpop.f32.mrf.mxu0
        %v3559 = vpop.f32.mrf.mxu0
        %v3560 = vadd.f32 0.0, %v3559
        %v3561 = vpop.f32.mrf.mxu0
        %3562 = vmatprep.mubr.bf16.mxu0 %v3357
        %3563 = vmatmul.mubr.bf16.gmra.mxu0 %v3356
        %v3564 = vpop.f32.mrf.mxu0
        %v3565 = vadd.f32 0.0, %v3564
        %v3566 = vpop.f32.mrf.mxu0
        %v3567 = vpop.f32.mrf.mxu0
        %v3568 = vadd.f32 0.0, %v3567
        %v3569 = vpop.f32.mrf.mxu0
        %3570 = vmatprep.mubr.bf16.mxu0 %v3359
        %3571 = vmatmul.mubr.bf16.gmra.mxu0 %v3358
        %v3572 = vpop.f32.mrf.mxu0
        %v3573 = vadd.f32 0.0, %v3572
        %v3574 = vpop.f32.mrf.mxu0
        %v3575 = vpop.f32.mrf.mxu0
        %v3576 = vadd.f32 0.0, %v3575
        %v3577 = vpop.f32.mrf.mxu0
        %3578 = vmatprep.mubr.bf16.mxu0 %v3361
        %3579 = vmatmul.mubr.bf16.gmra.mxu0 %v3360
        %v3580 = vpop.f32.mrf.mxu0
        %v3581 = vadd.f32 0.0, %v3580
        %v3582 = vpop.f32.mrf.mxu0
        %v3583 = vpop.f32.mrf.mxu0
        %v3584 = vadd.f32 0.0, %v3583
        %v3585 = vpop.f32.mrf.mxu0
        %3586 = vdwg.mxu0
        %v3587 = vrcp.pop %v3300
        %v3588 = vrcp.pop %v3303
        %v3589 = vrcp.pop %v3306
        %v3590 = vrcp.pop %v3309
        %v3591 = vrcp.pop %v3312
        %v3592 = vrcp.pop %v3315
        %v3593 = vrcp.pop %v3318
        %v3594 = vrcp.pop %v3321
        %v3595 = vrcp.pop %v3324
        %v3596 = vrcp.pop %v3327
        %v3597 = vrcp.pop %v3330
        %v3598 = vrcp.pop %v3333
        %v3599 = vrcp.pop %v3336
        %v3600 = vrcp.pop %v3339
        %v3601 = vrcp.pop %v3342
        %v3602 = vrcp.pop %v3345
        %v3603 = vmul.f32 %v3525, %v3587
        %v3604 = vmul.f32 %v3528, %v3588
        %v3605 = vmul.f32 %v3533, %v3589
        %v3606 = vmul.f32 %v3536, %v3590
        %v3607 = vmul.f32 %v3541, %v3591
        %v3608 = vmul.f32 %v3544, %v3592
        %v3609 = vmul.f32 %v3549, %v3593
        %v3610 = vmul.f32 %v3552, %v3594
        %v3611 = vmul.f32 %v3557, %v3595
        %v3612 = vmul.f32 %v3560, %v3596
        %v3613 = vmul.f32 %v3565, %v3597
        %v3614 = vmul.f32 %v3568, %v3598
        %v3615 = vmul.f32 %v3573, %v3599
        %v3616 = vmul.f32 %v3576, %v3600
        %v3617 = vmul.f32 %v3581, %v3601
        %v3618 = vmul.f32 %v3584, %v3602
        %3635 = vrot.lane.b32.xlu0 %v3603, 64
        %v3636 = vpop.permute.xlu0 %3635
        %3637 = vrot.lane.b32.xlu0 %v3604, 64
        %v3638 = vpop.permute.xlu0 %3637
        %3639 = vrot.lane.b32.xlu0 %v3605, 64
        %v3640 = vpop.permute.xlu0 %3639
        %3641 = vrot.lane.b32.xlu0 %v3606, 64
        %v3642 = vpop.permute.xlu0 %3641
        %3643 = vrot.lane.b32.xlu0 %v3607, 64
        %v3644 = vpop.permute.xlu0 %3643
        %3645 = vrot.lane.b32.xlu0 %v3608, 64
        %v3646 = vpop.permute.xlu0 %3645
        %3647 = vrot.lane.b32.xlu0 %v3609, 64
        %v3648 = vpop.permute.xlu0 %3647
        %3649 = vrot.lane.b32.xlu0 %v3610, 64
        %v3650 = vpop.permute.xlu0 %3649
        %3651 = vrot.lane.b32.xlu0 %v3611, 64
        %v3652 = vpop.permute.xlu0 %3651
        %3653 = vrot.lane.b32.xlu0 %v3612, 64
        %v3654 = vpop.permute.xlu0 %3653
        %3655 = vrot.lane.b32.xlu0 %v3613, 64
        %v3656 = vpop.permute.xlu0 %3655
        %3657 = vrot.lane.b32.xlu0 %v3614, 64
        %v3658 = vpop.permute.xlu0 %3657
        %3659 = vrot.lane.b32.xlu0 %v3615, 64
        %v3660 = vpop.permute.xlu0 %3659
        %3661 = vrot.lane.b32.xlu0 %v3616, 64
        %v3662 = vpop.permute.xlu0 %3661
        %3663 = vrot.lane.b32.xlu0 %v3617, 64
        %v3664 = vpop.permute.xlu0 %3663
        %3665 = vrot.lane.b32.xlu0 %v3618, 64
        %v3666 = vpop.permute.xlu0 %3665
        %vm3683 = vcmask 785920
        %3684 = vst.msk [vmem:[#allocation3] sm:$0xff] %vm3683, %v3636
        %3685 = vst.msk [vmem:[#allocation3 + $0x8] sm:$0xff] %vm3683, %v3638
        %3686 = vst.msk [vmem:[#allocation3 + $0x10] sm:$0xff] %vm3683, %v3640
        %3687 = vst.msk [vmem:[#allocation3 + $0x18] sm:$0xff] %vm3683, %v3642
        %3688 = vst.msk [vmem:[#allocation3 + $0x20] sm:$0xff] %vm3683, %v3644
        %3689 = vst.msk [vmem:[#allocation3 + $0x28] sm:$0xff] %vm3683, %v3646
        %3690 = vst.msk [vmem:[#allocation3 + $0x30] sm:$0xff] %vm3683, %v3648
        %3691 = vst.msk [vmem:[#allocation3 + $0x38] sm:$0xff] %vm3683, %v3650
        %3692 = vst.msk [vmem:[#allocation3 + $0x40] sm:$0xff] %vm3683, %v3652
        %3693 = vst.msk [vmem:[#allocation3 + $0x48] sm:$0xff] %vm3683, %v3654
        %3694 = vst.msk [vmem:[#allocation3 + $0x50] sm:$0xff] %vm3683, %v3656
        %3695 = vst.msk [vmem:[#allocation3 + $0x58] sm:$0xff] %vm3683, %v3658
        %3696 = vst.msk [vmem:[#allocation3 + $0x60] sm:$0xff] %vm3683, %v3660
        %3697 = vst.msk [vmem:[#allocation3 + $0x68] sm:$0xff] %vm3683, %v3662
        %3698 = vst.msk [vmem:[#allocation3 + $0x70] sm:$0xff] %vm3683, %v3664
        %3699 = vst.msk [vmem:[#allocation3 + $0x78] sm:$0xff] %vm3683, %v3666
        %v3700 = vld [vmem:[#allocation2] sm:$0xf]
        %v3701 = vld [vmem:[#allocation2 + $0x8] sm:$0xf]
        %v3702 = vld [vmem:[#allocation2 + $0x10] sm:$0xf]
        %v3703 = vld [vmem:[#allocation2 + $0x18] sm:$0xf]
        %v3704 = vld [vmem:[#allocation2 + $0x20] sm:$0xf]
        %v3705 = vld [vmem:[#allocation2 + $0x28] sm:$0xf]
        %v3706 = vld [vmem:[#allocation2 + $0x30] sm:$0xf]
        %v3707 = vld [vmem:[#allocation2 + $0x38] sm:$0xf]
        %v3708 = vld [vmem:[#allocation2 + $0x40] sm:$0xf]
        %v3709 = vld [vmem:[#allocation2 + $0x48] sm:$0xf]
        %v3710 = vld [vmem:[#allocation2 + $0x50] sm:$0xf]
        %v3711 = vld [vmem:[#allocation2 + $0x58] sm:$0xf]
        %v3712 = vld [vmem:[#allocation2 + $0x60] sm:$0xf]
        %v3713 = vld [vmem:[#allocation2 + $0x68] sm:$0xf]
        %v3714 = vld [vmem:[#allocation2 + $0x70] sm:$0xf]
        %v3715 = vld [vmem:[#allocation2 + $0x78] sm:$0xf]
        %v3716 = vld [vmem:[#allocation2 + $0x80] sm:$0xf]
        %v3717 = vld [vmem:[#allocation2 + $0x88] sm:$0xf]
        %v3718 = vld [vmem:[#allocation2 + $0x90] sm:$0xf]
        %v3719 = vld [vmem:[#allocation2 + $0x98] sm:$0xf]
        %v3720 = vld [vmem:[#allocation2 + $0xa0] sm:$0xf]
        %v3721 = vld [vmem:[#allocation2 + $0xa8] sm:$0xf]
        %v3722 = vld [vmem:[#allocation2 + $0xb0] sm:$0xf]
        %v3723 = vld [vmem:[#allocation2 + $0xb8] sm:$0xf]
        %v3724 = vld [vmem:[#allocation2 + $0xc0] sm:$0xf]
        %v3725 = vld [vmem:[#allocation2 + $0xc8] sm:$0xf]
        %v3726 = vld [vmem:[#allocation2 + $0xd0] sm:$0xf]
        %v3727 = vld [vmem:[#allocation2 + $0xd8] sm:$0xf]
        %v3728 = vld [vmem:[#allocation2 + $0xe0] sm:$0xf]
        %v3729 = vld [vmem:[#allocation2 + $0xe8] sm:$0xf]
        %v3730 = vld [vmem:[#allocation2 + $0xf0] sm:$0xf]
        %v3731 = vld [vmem:[#allocation2 + $0xf8] sm:$0xf]
        %v3732 = vld [vmem:[#allocation2 + $0x4] sm:$0xf]
        %v3733 = vld [vmem:[#allocation2 + $0xc] sm:$0xf]
        %v3734 = vld [vmem:[#allocation2 + $0x14] sm:$0xf]
        %v3735 = vld [vmem:[#allocation2 + $0x1c] sm:$0xf]
        %v3736 = vld [vmem:[#allocation2 + $0x24] sm:$0xf]
        %v3737 = vld [vmem:[#allocation2 + $0x2c] sm:$0xf]
        %v3738 = vld [vmem:[#allocation2 + $0x34] sm:$0xf]
        %v3739 = vld [vmem:[#allocation2 + $0x3c] sm:$0xf]
        %v3740 = vld [vmem:[#allocation2 + $0x44] sm:$0xf]
        %v3741 = vld [vmem:[#allocation2 + $0x4c] sm:$0xf]
        %v3742 = vld [vmem:[#allocation2 + $0x54] sm:$0xf]
        %v3743 = vld [vmem:[#allocation2 + $0x5c] sm:$0xf]
        %v3744 = vld [vmem:[#allocation2 + $0x64] sm:$0xf]
        %v3745 = vld [vmem:[#allocation2 + $0x6c] sm:$0xf]
        %v3746 = vld [vmem:[#allocation2 + $0x74] sm:$0xf]
        %v3747 = vld [vmem:[#allocation2 + $0x7c] sm:$0xf]
        %v3748 = vld [vmem:[#allocation2 + $0x84] sm:$0xf]
        %v3749 = vld [vmem:[#allocation2 + $0x8c] sm:$0xf]
        %v3750 = vld [vmem:[#allocation2 + $0x94] sm:$0xf]
        %v3751 = vld [vmem:[#allocation2 + $0x9c] sm:$0xf]
        %v3752 = vld [vmem:[#allocation2 + $0xa4] sm:$0xf]
        %v3753 = vld [vmem:[#allocation2 + $0xac] sm:$0xf]
        %v3754 = vld [vmem:[#allocation2 + $0xb4] sm:$0xf]
        %v3755 = vld [vmem:[#allocation2 + $0xbc] sm:$0xf]
        %v3756 = vld [vmem:[#allocation2 + $0xc4] sm:$0xf]
        %v3757 = vld [vmem:[#allocation2 + $0xcc] sm:$0xf]
        %v3758 = vld [vmem:[#allocation2 + $0xd4] sm:$0xf]
        %v3759 = vld [vmem:[#allocation2 + $0xdc] sm:$0xf]
        %v3760 = vld [vmem:[#allocation2 + $0xe4] sm:$0xf]
        %v3761 = vld [vmem:[#allocation2 + $0xec] sm:$0xf]
        %v3762 = vld [vmem:[#allocation2 + $0xf4] sm:$0xf]
        %v3763 = vld [vmem:[#allocation2 + $0xfc] sm:$0xf]
        %3764 = vrot.lane.b32.xlu0 %v1059, 32
        %v3765 = vpop.permute.xlu0 %3764
        %3766 = vrot.lane.b32.xlu0 %v1060, 32
        %v3767 = vpop.permute.xlu0 %3766
        %3768 = vrot.lane.b32.xlu0 %v1061, 32
        %v3769 = vpop.permute.xlu0 %3768
        %3770 = vrot.lane.b32.xlu0 %v1062, 32
        %v3771 = vpop.permute.xlu0 %3770
        %3772 = vrot.lane.b32.xlu0 %v1063, 32
        %v3773 = vpop.permute.xlu0 %3772
        %3774 = vrot.lane.b32.xlu0 %v1064, 32
        %v3775 = vpop.permute.xlu0 %3774
        %3776 = vrot.lane.b32.xlu0 %v1065, 32
        %v3777 = vpop.permute.xlu0 %3776
        %3778 = vrot.lane.b32.xlu0 %v1066, 32
        %v3779 = vpop.permute.xlu0 %3778
        %v3812 = vunpack.c.l.b16 %v3700
        %v3813 = vunpack.c.l.b16 %v3701
        %v3814 = vunpack.c.l.b16 %v3702
        %v3815 = vunpack.c.l.b16 %v3703
        %v3816 = vunpack.c.l.b16 %v3704
        %v3817 = vunpack.c.l.b16 %v3705
        %v3818 = vunpack.c.l.b16 %v3706
        %v3819 = vunpack.c.l.b16 %v3707
        %v3820 = vunpack.c.l.b16 %v3708
        %v3821 = vunpack.c.l.b16 %v3709
        %v3822 = vunpack.c.l.b16 %v3710
        %v3823 = vunpack.c.l.b16 %v3711
        %v3824 = vunpack.c.l.b16 %v3712
        %v3825 = vunpack.c.l.b16 %v3713
        %v3826 = vunpack.c.l.b16 %v3714
        %v3827 = vunpack.c.l.b16 %v3715
        %v3828 = vunpack.c.l.b16 %v3716
        %v3829 = vunpack.c.l.b16 %v3717
        %v3830 = vunpack.c.l.b16 %v3718
        %v3831 = vunpack.c.l.b16 %v3719
        %v3832 = vunpack.c.l.b16 %v3720
        %v3833 = vunpack.c.l.b16 %v3721
        %v3834 = vunpack.c.l.b16 %v3722
        %v3835 = vunpack.c.l.b16 %v3723
        %v3836 = vunpack.c.l.b16 %v3724
        %v3837 = vunpack.c.l.b16 %v3725
        %v3838 = vunpack.c.l.b16 %v3726
        %v3839 = vunpack.c.l.b16 %v3727
        %v3840 = vunpack.c.l.b16 %v3728
        %v3841 = vunpack.c.l.b16 %v3729
        %v3842 = vunpack.c.l.b16 %v3730
        %v3843 = vunpack.c.l.b16 %v3731
        %v3844 = vpack.c.b16 %v3813, %v3812
        %v3845 = vpack.c.b16 %v3815, %v3814
        %v3846 = vpack.c.b16 %v3817, %v3816
        %v3847 = vpack.c.b16 %v3819, %v3818
        %v3848 = vpack.c.b16 %v3821, %v3820
        %v3849 = vpack.c.b16 %v3823, %v3822
        %v3850 = vpack.c.b16 %v3825, %v3824
        %v3851 = vpack.c.b16 %v3827, %v3826
        %v3852 = vpack.c.b16 %v3829, %v3828
        %v3853 = vpack.c.b16 %v3831, %v3830
        %v3854 = vpack.c.b16 %v3833, %v3832
        %v3855 = vpack.c.b16 %v3835, %v3834
        %v3856 = vpack.c.b16 %v3837, %v3836
        %v3857 = vpack.c.b16 %v3839, %v3838
        %v3858 = vpack.c.b16 %v3841, %v3840
        %v3859 = vpack.c.b16 %v3843, %v3842
        %3860 = vrot.lane.b32.xlu0 %v3844, 32
        %v3861 = vpop.permute.xlu0 %3860
        %3862 = vrot.lane.b32.xlu0 %v3845, 32
        %v3863 = vpop.permute.xlu0 %3862
        %3864 = vrot.lane.b32.xlu0 %v3846, 32
        %v3865 = vpop.permute.xlu0 %3864
        %3866 = vrot.lane.b32.xlu0 %v3847, 32
        %v3867 = vpop.permute.xlu0 %3866
        %3868 = vrot.lane.b32.xlu0 %v3848, 32
        %v3869 = vpop.permute.xlu0 %3868
        %3870 = vrot.lane.b32.xlu0 %v3849, 32
        %v3871 = vpop.permute.xlu0 %3870
        %3872 = vrot.lane.b32.xlu0 %v3850, 32
        %v3873 = vpop.permute.xlu0 %3872
        %3874 = vrot.lane.b32.xlu0 %v3851, 32
        %v3875 = vpop.permute.xlu0 %3874
        %3876 = vrot.lane.b32.xlu0 %v3852, 32
        %v3877 = vpop.permute.xlu0 %3876
        %3878 = vrot.lane.b32.xlu0 %v3853, 32
        %v3879 = vpop.permute.xlu0 %3878
        %3880 = vrot.lane.b32.xlu0 %v3854, 32
        %v3881 = vpop.permute.xlu0 %3880
        %3882 = vrot.lane.b32.xlu0 %v3855, 32
        %v3883 = vpop.permute.xlu0 %3882
        %3884 = vrot.lane.b32.xlu0 %v3856, 32
        %v3885 = vpop.permute.xlu0 %3884
        %3886 = vrot.lane.b32.xlu0 %v3857, 32
        %v3887 = vpop.permute.xlu0 %3886
        %3888 = vrot.lane.b32.xlu0 %v3858, 32
        %v3889 = vpop.permute.xlu0 %3888
        %3890 = vrot.lane.b32.xlu0 %v3859, 32
        %v3891 = vpop.permute.xlu0 %3890
        %v3893 = vsel %vm1211, %v3765, 0
        %v3896 = vsel %vm1211, %v3767, 0
        %v3899 = vsel %vm1211, %v3769, 0
        %v3902 = vsel %vm1211, %v3771, 0
        %v3905 = vsel %vm1211, %v3773, 0
        %v3908 = vsel %vm1211, %v3775, 0
        %v3911 = vsel %vm1211, %v3777, 0
        %v3914 = vsel %vm1211, %v3779, 0
        %v3917 = vsel %vm1211, %v3861, 0
        %v3920 = vsel %vm1211, %v3863, 0
        %v3923 = vsel %vm1211, %v3865, 0
        %v3926 = vsel %vm1211, %v3867, 0
        %v3929 = vsel %vm1211, %v3869, 0
        %v3932 = vsel %vm1211, %v3871, 0
        %v3935 = vsel %vm1211, %v3873, 0
        %v3938 = vsel %vm1211, %v3875, 0
        %v3941 = vsel %vm1211, %v3877, 0
        %v3944 = vsel %vm1211, %v3879, 0
        %v3947 = vsel %vm1211, %v3881, 0
        %v3950 = vsel %vm1211, %v3883, 0
        %v3953 = vsel %vm1211, %v3885, 0
        %v3956 = vsel %vm1211, %v3887, 0
        %v3959 = vsel %vm1211, %v3889, 0
        %v3962 = vsel %vm1211, %v3891, 0
        %3964 = vmatprep.subr.bf16.mxu0 0
        %3965 = vmatpush1.bf16.xpose.msra.mxu0 %v3938
        %3966 = vmatprep.subr.bf16.mxu0 0
        %3967 = vmatpush1.bf16.xpose.msra.mxu0 %v3935
        %3968 = vmatprep.subr.bf16.mxu0 0
        %3969 = vmatpush1.bf16.xpose.msra.mxu0 %v3932
        %3970 = vmatprep.subr.bf16.mxu0 0
        %3971 = vmatpush1.bf16.xpose.msra.mxu0 %v3929
        %3972 = vmatprep.subr.bf16.mxu0 0
        %3973 = vmatpush1.bf16.xpose.msra.mxu0 %v3926
        %3974 = vmatprep.subr.bf16.mxu0 0
        %3975 = vmatpush1.bf16.xpose.msra.mxu0 %v3923
        %3976 = vmatprep.subr.bf16.mxu0 0
        %3977 = vmatpush1.bf16.xpose.msra.mxu0 %v3920
        %3978 = vmatprep.subr.bf16.mxu0 0
        %3979 = vmatpush1.bf16.xpose.msra.mxu0 %v3917
        %3980 = vmatprep.subr.bf16.mxu0 0
        %3981 = vmatpush2.bf16.xpose.msra.mxu0 %v3962
        %3982 = vmatprep.subr.bf16.mxu0 0
        %3983 = vmatpush2.bf16.xpose.msra.mxu0 %v3959
        %3984 = vmatprep.subr.bf16.mxu0 0
        %3985 = vmatpush2.bf16.xpose.msra.mxu0 %v3956
        %3986 = vmatprep.subr.bf16.mxu0 0
        %3987 = vmatpush2.bf16.xpose.msra.mxu0 %v3953
        %3988 = vmatprep.subr.bf16.mxu0 0
        %3989 = vmatpush2.bf16.xpose.msra.mxu0 %v3950
        %3990 = vmatprep.subr.bf16.mxu0 0
        %3991 = vmatpush2.bf16.xpose.msra.mxu0 %v3947
        %3992 = vmatprep.subr.bf16.mxu0 0
        %3993 = vmatpush2.bf16.xpose.msra.mxu0 %v3944
        %3994 = vmatprep.subr.bf16.mxu0 0
        %3995 = vmatpush2.bf16.xpose.msra.mxu0 %v3941
        %3996 = vmatprep.mubr.bf16.mxu0 0
        %3997 = vmatmul.mubr.bf16.gmra.mxu0 %v3893
        %v3998 = vpop.f32.mrf.mxu0
        %v3999 = vadd.f32 0.0, %v3998
        %v4000 = vpop.f32.mrf.mxu0
        %v4001 = vadd.f32 0.0, %v4000
        %v4002 = vpop.f32.mrf.mxu0
        %v4003 = vadd.f32 0.0, %v4002
        %v4004 = vpop.f32.mrf.mxu0
        %v4005 = vadd.f32 0.0, %v4004
        %4006 = vmatprep.mubr.bf16.mxu0 0
        %4007 = vmatmul.mubr.bf16.gmra.mxu0 %v3896
        %v4008 = vpop.f32.mrf.mxu0
        %v4009 = vadd.f32 0.0, %v4008
        %v4010 = vpop.f32.mrf.mxu0
        %v4011 = vadd.f32 0.0, %v4010
        %v4012 = vpop.f32.mrf.mxu0
        %v4013 = vadd.f32 0.0, %v4012
        %v4014 = vpop.f32.mrf.mxu0
        %v4015 = vadd.f32 0.0, %v4014
        %4016 = vmatprep.mubr.bf16.mxu0 0
        %4017 = vmatmul.mubr.bf16.gmra.mxu0 %v3899
        %v4018 = vpop.f32.mrf.mxu0
        %v4019 = vadd.f32 0.0, %v4018
        %v4020 = vpop.f32.mrf.mxu0
        %v4021 = vadd.f32 0.0, %v4020
        %v4022 = vpop.f32.mrf.mxu0
        %v4023 = vadd.f32 0.0, %v4022
        %v4024 = vpop.f32.mrf.mxu0
        %v4025 = vadd.f32 0.0, %v4024
        %4026 = vmatprep.mubr.bf16.mxu0 0
        %4027 = vmatmul.mubr.bf16.gmra.mxu0 %v3902
        %v4028 = vpop.f32.mrf.mxu0
        %v4029 = vadd.f32 0.0, %v4028
        %v4030 = vpop.f32.mrf.mxu0
        %v4031 = vadd.f32 0.0, %v4030
        %v4032 = vpop.f32.mrf.mxu0
        %v4033 = vadd.f32 0.0, %v4032
        %v4034 = vpop.f32.mrf.mxu0
        %v4035 = vadd.f32 0.0, %v4034
        %4036 = vmatprep.mubr.bf16.mxu0 0
        %4037 = vmatmul.mubr.bf16.gmra.mxu0 %v3905
        %v4038 = vpop.f32.mrf.mxu0
        %v4039 = vadd.f32 0.0, %v4038
        %v4040 = vpop.f32.mrf.mxu0
        %v4041 = vadd.f32 0.0, %v4040
        %v4042 = vpop.f32.mrf.mxu0
        %v4043 = vadd.f32 0.0, %v4042
        %v4044 = vpop.f32.mrf.mxu0
        %v4045 = vadd.f32 0.0, %v4044
        %4046 = vmatprep.mubr.bf16.mxu0 0
        %4047 = vmatmul.mubr.bf16.gmra.mxu0 %v3908
        %v4048 = vpop.f32.mrf.mxu0
        %v4049 = vadd.f32 0.0, %v4048
        %v4050 = vpop.f32.mrf.mxu0
        %v4051 = vadd.f32 0.0, %v4050
        %v4052 = vpop.f32.mrf.mxu0
        %v4053 = vadd.f32 0.0, %v4052
        %v4054 = vpop.f32.mrf.mxu0
        %v4055 = vadd.f32 0.0, %v4054
        %4056 = vmatprep.mubr.bf16.mxu0 0
        %4057 = vmatmul.mubr.bf16.gmra.mxu0 %v3911
        %v4058 = vpop.f32.mrf.mxu0
        %v4059 = vadd.f32 0.0, %v4058
        %v4060 = vpop.f32.mrf.mxu0
        %v4061 = vadd.f32 0.0, %v4060
        %v4062 = vpop.f32.mrf.mxu0
        %v4063 = vadd.f32 0.0, %v4062
        %v4064 = vpop.f32.mrf.mxu0
        %v4065 = vadd.f32 0.0, %v4064
        %4066 = vmatprep.mubr.bf16.mxu0 0
        %4067 = vmatmul.mubr.bf16.gmra.mxu0 %v3914
        %v4068 = vpop.f32.mrf.mxu0
        %v4069 = vadd.f32 0.0, %v4068
        %v4070 = vpop.f32.mrf.mxu0
        %v4071 = vadd.f32 0.0, %v4070
        %v4072 = vpop.f32.mrf.mxu0
        %v4073 = vadd.f32 0.0, %v4072
        %v4074 = vpop.f32.mrf.mxu0
        %v4075 = vadd.f32 0.0, %v4074
        %4076 = vdwg.mxu0
        %v4077 = vmax.f32 %v3999, %v4001
        %4078 = vmax.xlane.f32.xlu0 %v4077
        %v4079 = vpop.xlane.xlu0 %4078
        %v4080 = vmax.f32 %v4003, %v4005
        %4081 = vmax.xlane.f32.xlu0 %v4080
        %v4082 = vpop.xlane.xlu0 %4081
        %v4083 = vmax.f32 %v4009, %v4011
        %4084 = vmax.xlane.f32.xlu0 %v4083
        %v4085 = vpop.xlane.xlu0 %4084
        %v4086 = vmax.f32 %v4013, %v4015
        %4087 = vmax.xlane.f32.xlu0 %v4086
        %v4088 = vpop.xlane.xlu0 %4087
        %v4089 = vmax.f32 %v4019, %v4021
        %4090 = vmax.xlane.f32.xlu0 %v4089
        %v4091 = vpop.xlane.xlu0 %4090
        %v4092 = vmax.f32 %v4023, %v4025
        %4093 = vmax.xlane.f32.xlu0 %v4092
        %v4094 = vpop.xlane.xlu0 %4093
        %v4095 = vmax.f32 %v4029, %v4031
        %4096 = vmax.xlane.f32.xlu0 %v4095
        %v4097 = vpop.xlane.xlu0 %4096
        %v4098 = vmax.f32 %v4033, %v4035
        %4099 = vmax.xlane.f32.xlu0 %v4098
        %v4100 = vpop.xlane.xlu0 %4099
        %v4101 = vmax.f32 %v4039, %v4041
        %4102 = vmax.xlane.f32.xlu0 %v4101
        %v4103 = vpop.xlane.xlu0 %4102
        %v4104 = vmax.f32 %v4043, %v4045
        %4105 = vmax.xlane.f32.xlu0 %v4104
        %v4106 = vpop.xlane.xlu0 %4105
        %v4107 = vmax.f32 %v4049, %v4051
        %4108 = vmax.xlane.f32.xlu0 %v4107
        %v4109 = vpop.xlane.xlu0 %4108
        %v4110 = vmax.f32 %v4053, %v4055
        %4111 = vmax.xlane.f32.xlu0 %v4110
        %v4112 = vpop.xlane.xlu0 %4111
        %v4113 = vmax.f32 %v4059, %v4061
        %4114 = vmax.xlane.f32.xlu0 %v4113
        %v4115 = vpop.xlane.xlu0 %4114
        %v4116 = vmax.f32 %v4063, %v4065
        %4117 = vmax.xlane.f32.xlu0 %v4116
        %v4118 = vpop.xlane.xlu0 %4117
        %v4119 = vmax.f32 %v4069, %v4071
        %4120 = vmax.xlane.f32.xlu0 %v4119
        %v4121 = vpop.xlane.xlu0 %4120
        %v4122 = vmax.f32 %v4073, %v4075
        %4123 = vmax.xlane.f32.xlu0 %v4122
        %v4124 = vpop.xlane.xlu0 %4123
        %v4125 = vsub.f32 %v3999, %v4079
        %v4126 = vsub.f32 %v4001, %v4079
        %v4127 = vsub.f32 %v4003, %v4082
        %v4128 = vsub.f32 %v4005, %v4082
        %v4129 = vsub.f32 %v4009, %v4085
        %v4130 = vsub.f32 %v4011, %v4085
        %v4131 = vsub.f32 %v4013, %v4088
        %v4132 = vsub.f32 %v4015, %v4088
        %v4133 = vsub.f32 %v4019, %v4091
        %v4134 = vsub.f32 %v4021, %v4091
        %v4135 = vsub.f32 %v4023, %v4094
        %v4136 = vsub.f32 %v4025, %v4094
        %v4137 = vsub.f32 %v4029, %v4097
        %v4138 = vsub.f32 %v4031, %v4097
        %v4139 = vsub.f32 %v4033, %v4100
        %v4140 = vsub.f32 %v4035, %v4100
        %v4141 = vsub.f32 %v4039, %v4103
        %v4142 = vsub.f32 %v4041, %v4103
        %v4143 = vsub.f32 %v4043, %v4106
        %v4144 = vsub.f32 %v4045, %v4106
        %v4145 = vsub.f32 %v4049, %v4109
        %v4146 = vsub.f32 %v4051, %v4109
        %v4147 = vsub.f32 %v4053, %v4112
        %v4148 = vsub.f32 %v4055, %v4112
        %v4149 = vsub.f32 %v4059, %v4115
        %v4150 = vsub.f32 %v4061, %v4115
        %v4151 = vsub.f32 %v4063, %v4118
        %v4152 = vsub.f32 %v4065, %v4118
        %v4153 = vsub.f32 %v4069, %v4121
        %v4154 = vsub.f32 %v4071, %v4121
        %v4155 = vsub.f32 %v4073, %v4124
        %v4156 = vsub.f32 %v4075, %v4124
        %v4157 = vmul.f32 %v4125, 1.442695
        %v4158 = vpow.pop %v4157
        %v4159 = vmul.f32 %v4126, 1.442695
        %v4160 = vpow.pop %v4159
        %v4161 = vmul.f32 %v4127, 1.442695
        %v4162 = vpow.pop %v4161
        %v4163 = vmul.f32 %v4128, 1.442695
        %v4164 = vpow.pop %v4163
        %v4165 = vmul.f32 %v4129, 1.442695
        %v4166 = vpow.pop %v4165
        %v4167 = vmul.f32 %v4130, 1.442695
        %v4168 = vpow.pop %v4167
        %v4169 = vmul.f32 %v4131, 1.442695
        %v4170 = vpow.pop %v4169
        %v4171 = vmul.f32 %v4132, 1.442695
        %v4172 = vpow.pop %v4171
        %v4173 = vmul.f32 %v4133, 1.442695
        %v4174 = vpow.pop %v4173
        %v4175 = vmul.f32 %v4134, 1.442695
        %v4176 = vpow.pop %v4175
        %v4177 = vmul.f32 %v4135, 1.442695
        %v4178 = vpow.pop %v4177
        %v4179 = vmul.f32 %v4136, 1.442695
        %v4180 = vpow.pop %v4179
        %v4181 = vmul.f32 %v4137, 1.442695
        %v4182 = vpow.pop %v4181
        %v4183 = vmul.f32 %v4138, 1.442695
        %v4184 = vpow.pop %v4183
        %v4185 = vmul.f32 %v4139, 1.442695
        %v4186 = vpow.pop %v4185
        %v4187 = vmul.f32 %v4140, 1.442695
        %v4188 = vpow.pop %v4187
        %v4189 = vmul.f32 %v4141, 1.442695
        %v4190 = vpow.pop %v4189
        %v4191 = vmul.f32 %v4142, 1.442695
        %v4192 = vpow.pop %v4191
        %v4193 = vmul.f32 %v4143, 1.442695
        %v4194 = vpow.pop %v4193
        %v4195 = vmul.f32 %v4144, 1.442695
        %v4196 = vpow.pop %v4195
        %v4197 = vmul.f32 %v4145, 1.442695
        %v4198 = vpow.pop %v4197
        %v4199 = vmul.f32 %v4146, 1.442695
        %v4200 = vpow.pop %v4199
        %v4201 = vmul.f32 %v4147, 1.442695
        %v4202 = vpow.pop %v4201
        %v4203 = vmul.f32 %v4148, 1.442695
        %v4204 = vpow.pop %v4203
        %v4205 = vmul.f32 %v4149, 1.442695
        %v4206 = vpow.pop %v4205
        %v4207 = vmul.f32 %v4150, 1.442695
        %v4208 = vpow.pop %v4207
        %v4209 = vmul.f32 %v4151, 1.442695
        %v4210 = vpow.pop %v4209
        %v4211 = vmul.f32 %v4152, 1.442695
        %v4212 = vpow.pop %v4211
        %v4213 = vmul.f32 %v4153, 1.442695
        %v4214 = vpow.pop %v4213
        %v4215 = vmul.f32 %v4154, 1.442695
        %v4216 = vpow.pop %v4215
        %v4217 = vmul.f32 %v4155, 1.442695
        %v4218 = vpow.pop %v4217
        %v4219 = vmul.f32 %v4156, 1.442695
        %v4220 = vpow.pop %v4219
        %v4221 = vadd.f32 %v4158, %v4160
        %4222 = vadd.xlane.f32.xlu0 %v4221
        %v4223 = vpop.xlane.xlu0 %4222
        %v4224 = vadd.f32 %v4162, %v4164
        %4225 = vadd.xlane.f32.xlu0 %v4224
        %v4226 = vpop.xlane.xlu0 %4225
        %v4227 = vadd.f32 %v4166, %v4168
        %4228 = vadd.xlane.f32.xlu0 %v4227
        %v4229 = vpop.xlane.xlu0 %4228
        %v4230 = vadd.f32 %v4170, %v4172
        %4231 = vadd.xlane.f32.xlu0 %v4230
        %v4232 = vpop.xlane.xlu0 %4231
        %v4233 = vadd.f32 %v4174, %v4176
        %4234 = vadd.xlane.f32.xlu0 %v4233
        %v4235 = vpop.xlane.xlu0 %4234
        %v4236 = vadd.f32 %v4178, %v4180
        %4237 = vadd.xlane.f32.xlu0 %v4236
        %v4238 = vpop.xlane.xlu0 %4237
        %v4239 = vadd.f32 %v4182, %v4184
        %4240 = vadd.xlane.f32.xlu0 %v4239
        %v4241 = vpop.xlane.xlu0 %4240
        %v4242 = vadd.f32 %v4186, %v4188
        %4243 = vadd.xlane.f32.xlu0 %v4242
        %v4244 = vpop.xlane.xlu0 %4243
        %v4245 = vadd.f32 %v4190, %v4192
        %4246 = vadd.xlane.f32.xlu0 %v4245
        %v4247 = vpop.xlane.xlu0 %4246
        %v4248 = vadd.f32 %v4194, %v4196
        %4249 = vadd.xlane.f32.xlu0 %v4248
        %v4250 = vpop.xlane.xlu0 %4249
        %v4251 = vadd.f32 %v4198, %v4200
        %4252 = vadd.xlane.f32.xlu0 %v4251
        %v4253 = vpop.xlane.xlu0 %4252
        %v4254 = vadd.f32 %v4202, %v4204
        %4255 = vadd.xlane.f32.xlu0 %v4254
        %v4256 = vpop.xlane.xlu0 %4255
        %v4257 = vadd.f32 %v4206, %v4208
        %4258 = vadd.xlane.f32.xlu0 %v4257
        %v4259 = vpop.xlane.xlu0 %4258
        %v4260 = vadd.f32 %v4210, %v4212
        %4261 = vadd.xlane.f32.xlu0 %v4260
        %v4262 = vpop.xlane.xlu0 %4261
        %v4263 = vadd.f32 %v4214, %v4216
        %4264 = vadd.xlane.f32.xlu0 %v4263
        %v4265 = vpop.xlane.xlu0 %4264
        %v4266 = vadd.f32 %v4218, %v4220
        %4267 = vadd.xlane.f32.xlu0 %v4266
        %v4268 = vpop.xlane.xlu0 %4267
        %v4269 = vpack.c.bf16 %v4162, %v4158
        %v4270 = vpack.c.bf16 %v4164, %v4160
        %v4271 = vpack.c.bf16 %v4170, %v4166
        %v4272 = vpack.c.bf16 %v4172, %v4168
        %v4273 = vpack.c.bf16 %v4178, %v4174
        %v4274 = vpack.c.bf16 %v4180, %v4176
        %v4275 = vpack.c.bf16 %v4186, %v4182
        %v4276 = vpack.c.bf16 %v4188, %v4184
        %v4277 = vpack.c.bf16 %v4194, %v4190
        %v4278 = vpack.c.bf16 %v4196, %v4192
        %v4279 = vpack.c.bf16 %v4202, %v4198
        %v4280 = vpack.c.bf16 %v4204, %v4200
        %v4281 = vpack.c.bf16 %v4210, %v4206
        %v4282 = vpack.c.bf16 %v4212, %v4208
        %v4283 = vpack.c.bf16 %v4218, %v4214
        %v4284 = vpack.c.bf16 %v4220, %v4216
        %v4317 = vunpack.c.l.b16 %v3732
        %v4318 = vunpack.c.l.b16 %v3733
        %v4319 = vunpack.c.l.b16 %v3734
        %v4320 = vunpack.c.l.b16 %v3735
        %v4321 = vunpack.c.l.b16 %v3736
        %v4322 = vunpack.c.l.b16 %v3737
        %v4323 = vunpack.c.l.b16 %v3738
        %v4324 = vunpack.c.l.b16 %v3739
        %v4325 = vunpack.c.l.b16 %v3740
        %v4326 = vunpack.c.l.b16 %v3741
        %v4327 = vunpack.c.l.b16 %v3742
        %v4328 = vunpack.c.l.b16 %v3743
        %v4329 = vunpack.c.l.b16 %v3744
        %v4330 = vunpack.c.l.b16 %v3745
        %v4331 = vunpack.c.l.b16 %v3746
        %v4332 = vunpack.c.l.b16 %v3747
        %v4333 = vunpack.c.l.b16 %v3748
        %v4334 = vunpack.c.l.b16 %v3749
        %v4335 = vunpack.c.l.b16 %v3750
        %v4336 = vunpack.c.l.b16 %v3751
        %v4337 = vunpack.c.l.b16 %v3752
        %v4338 = vunpack.c.l.b16 %v3753
        %v4339 = vunpack.c.l.b16 %v3754
        %v4340 = vunpack.c.l.b16 %v3755
        %v4341 = vunpack.c.l.b16 %v3756
        %v4342 = vunpack.c.l.b16 %v3757
        %v4343 = vunpack.c.l.b16 %v3758
        %v4344 = vunpack.c.l.b16 %v3759
        %v4345 = vunpack.c.l.b16 %v3760
        %v4346 = vunpack.c.l.b16 %v3761
        %v4347 = vunpack.c.l.b16 %v3762
        %v4348 = vunpack.c.l.b16 %v3763
        %v4349 = vpack.c.b16 %v4318, %v4317
        %v4350 = vpack.c.b16 %v4320, %v4319
        %v4351 = vpack.c.b16 %v4322, %v4321
        %v4352 = vpack.c.b16 %v4324, %v4323
        %v4353 = vpack.c.b16 %v4326, %v4325
        %v4354 = vpack.c.b16 %v4328, %v4327
        %v4355 = vpack.c.b16 %v4330, %v4329
        %v4356 = vpack.c.b16 %v4332, %v4331
        %v4357 = vpack.c.b16 %v4334, %v4333
        %v4358 = vpack.c.b16 %v4336, %v4335
        %v4359 = vpack.c.b16 %v4338, %v4337
        %v4360 = vpack.c.b16 %v4340, %v4339
        %v4361 = vpack.c.b16 %v4342, %v4341
        %v4362 = vpack.c.b16 %v4344, %v4343
        %v4363 = vpack.c.b16 %v4346, %v4345
        %v4364 = vpack.c.b16 %v4348, %v4347
        %4365 = vrot.lane.b32.xlu0 %v4349, 32
        %v4366 = vpop.permute.xlu0 %4365
        %4367 = vrot.lane.b32.xlu0 %v4350, 32
        %v4368 = vpop.permute.xlu0 %4367
        %4369 = vrot.lane.b32.xlu0 %v4351, 32
        %v4370 = vpop.permute.xlu0 %4369
        %4371 = vrot.lane.b32.xlu0 %v4352, 32
        %v4372 = vpop.permute.xlu0 %4371
        %4373 = vrot.lane.b32.xlu0 %v4353, 32
        %v4374 = vpop.permute.xlu0 %4373
        %4375 = vrot.lane.b32.xlu0 %v4354, 32
        %v4376 = vpop.permute.xlu0 %4375
        %4377 = vrot.lane.b32.xlu0 %v4355, 32
        %v4378 = vpop.permute.xlu0 %4377
        %4379 = vrot.lane.b32.xlu0 %v4356, 32
        %v4380 = vpop.permute.xlu0 %4379
        %4381 = vrot.lane.b32.xlu0 %v4357, 32
        %v4382 = vpop.permute.xlu0 %4381
        %4383 = vrot.lane.b32.xlu0 %v4358, 32
        %v4384 = vpop.permute.xlu0 %4383
        %4385 = vrot.lane.b32.xlu0 %v4359, 32
        %v4386 = vpop.permute.xlu0 %4385
        %4387 = vrot.lane.b32.xlu0 %v4360, 32
        %v4388 = vpop.permute.xlu0 %4387
        %4389 = vrot.lane.b32.xlu0 %v4361, 32
        %v4390 = vpop.permute.xlu0 %4389
        %4391 = vrot.lane.b32.xlu0 %v4362, 32
        %v4392 = vpop.permute.xlu0 %4391
        %4393 = vrot.lane.b32.xlu0 %v4363, 32
        %v4394 = vpop.permute.xlu0 %4393
        %4395 = vrot.lane.b32.xlu0 %v4364, 32
        %v4396 = vpop.permute.xlu0 %4395
        %4413 = vmatprep.subr.bf16.mxu0 0
        %4414 = vmatpush1.bf16.msra.mxu0 %v4380
        %4415 = vmatprep.subr.bf16.mxu0 0
        %4416 = vmatpush1.bf16.msra.mxu0 %v4378
        %4417 = vmatprep.subr.bf16.mxu0 0
        %4418 = vmatpush1.bf16.msra.mxu0 %v4376
        %4419 = vmatprep.subr.bf16.mxu0 0
        %4420 = vmatpush1.bf16.msra.mxu0 %v4374
        %4421 = vmatprep.subr.bf16.mxu0 0
        %4422 = vmatpush1.bf16.msra.mxu0 %v4372
        %4423 = vmatprep.subr.bf16.mxu0 0
        %4424 = vmatpush1.bf16.msra.mxu0 %v4370
        %4425 = vmatprep.subr.bf16.mxu0 0
        %4426 = vmatpush1.bf16.msra.mxu0 %v4368
        %4427 = vmatprep.subr.bf16.mxu0 0
        %4428 = vmatpush1.bf16.msra.mxu0 %v4366
        %4429 = vmatprep.subr.bf16.mxu0 0
        %4430 = vmatpush2.bf16.msra.mxu0 %v4396
        %4431 = vmatprep.subr.bf16.mxu0 0
        %4432 = vmatpush2.bf16.msra.mxu0 %v4394
        %4433 = vmatprep.subr.bf16.mxu0 0
        %4434 = vmatpush2.bf16.msra.mxu0 %v4392
        %4435 = vmatprep.subr.bf16.mxu0 0
        %4436 = vmatpush2.bf16.msra.mxu0 %v4390
        %4437 = vmatprep.subr.bf16.mxu0 0
        %4438 = vmatpush2.bf16.msra.mxu0 %v4388
        %4439 = vmatprep.subr.bf16.mxu0 0
        %4440 = vmatpush2.bf16.msra.mxu0 %v4386
        %4441 = vmatprep.subr.bf16.mxu0 0
        %4442 = vmatpush2.bf16.msra.mxu0 %v4384
        %4443 = vmatprep.subr.bf16.mxu0 0
        %4444 = vmatpush2.bf16.msra.mxu0 %v4382
        %4445 = vmatprep.mubr.bf16.mxu0 %v4270
        %4446 = vmatmul.mubr.bf16.gmra.mxu0 %v4269
        %v4447 = vpop.f32.mrf.mxu0
        %v4448 = vadd.f32 0.0, %v4447
        %v4449 = vpop.f32.mrf.mxu0
        %v4450 = vpop.f32.mrf.mxu0
        %v4451 = vadd.f32 0.0, %v4450
        %v4452 = vpop.f32.mrf.mxu0
        %4453 = vmatprep.mubr.bf16.mxu0 %v4272
        %4454 = vmatmul.mubr.bf16.gmra.mxu0 %v4271
        %v4455 = vpop.f32.mrf.mxu0
        %v4456 = vadd.f32 0.0, %v4455
        %v4457 = vpop.f32.mrf.mxu0
        %v4458 = vpop.f32.mrf.mxu0
        %v4459 = vadd.f32 0.0, %v4458
        %v4460 = vpop.f32.mrf.mxu0
        %4461 = vmatprep.mubr.bf16.mxu0 %v4274
        %4462 = vmatmul.mubr.bf16.gmra.mxu0 %v4273
        %v4463 = vpop.f32.mrf.mxu0
        %v4464 = vadd.f32 0.0, %v4463
        %v4465 = vpop.f32.mrf.mxu0
        %v4466 = vpop.f32.mrf.mxu0
        %v4467 = vadd.f32 0.0, %v4466
        %v4468 = vpop.f32.mrf.mxu0
        %4469 = vmatprep.mubr.bf16.mxu0 %v4276
        %4470 = vmatmul.mubr.bf16.gmra.mxu0 %v4275
        %v4471 = vpop.f32.mrf.mxu0
        %v4472 = vadd.f32 0.0, %v4471
        %v4473 = vpop.f32.mrf.mxu0
        %v4474 = vpop.f32.mrf.mxu0
        %v4475 = vadd.f32 0.0, %v4474
        %v4476 = vpop.f32.mrf.mxu0
        %4477 = vmatprep.mubr.bf16.mxu0 %v4278
        %4478 = vmatmul.mubr.bf16.gmra.mxu0 %v4277
        %v4479 = vpop.f32.mrf.mxu0
        %v4480 = vadd.f32 0.0, %v4479
        %v4481 = vpop.f32.mrf.mxu0
        %v4482 = vpop.f32.mrf.mxu0
        %v4483 = vadd.f32 0.0, %v4482
        %v4484 = vpop.f32.mrf.mxu0
        %4485 = vmatprep.mubr.bf16.mxu0 %v4280
        %4486 = vmatmul.mubr.bf16.gmra.mxu0 %v4279
        %v4487 = vpop.f32.mrf.mxu0
        %v4488 = vadd.f32 0.0, %v4487
        %v4489 = vpop.f32.mrf.mxu0
        %v4490 = vpop.f32.mrf.mxu0
        %v4491 = vadd.f32 0.0, %v4490
        %v4492 = vpop.f32.mrf.mxu0
        %4493 = vmatprep.mubr.bf16.mxu0 %v4282
        %4494 = vmatmul.mubr.bf16.gmra.mxu0 %v4281
        %v4495 = vpop.f32.mrf.mxu0
        %v4496 = vadd.f32 0.0, %v4495
        %v4497 = vpop.f32.mrf.mxu0
        %v4498 = vpop.f32.mrf.mxu0
        %v4499 = vadd.f32 0.0, %v4498
        %v4500 = vpop.f32.mrf.mxu0
        %4501 = vmatprep.mubr.bf16.mxu0 %v4284
        %4502 = vmatmul.mubr.bf16.gmra.mxu0 %v4283
        %v4503 = vpop.f32.mrf.mxu0
        %v4504 = vadd.f32 0.0, %v4503
        %v4505 = vpop.f32.mrf.mxu0
        %v4506 = vpop.f32.mrf.mxu0
        %v4507 = vadd.f32 0.0, %v4506
        %v4508 = vpop.f32.mrf.mxu0
        %4509 = vdwg.mxu0
        %v4510 = vrcp.pop %v4223
        %v4511 = vrcp.pop %v4226
        %v4512 = vrcp.pop %v4229
        %v4513 = vrcp.pop %v4232
        %v4514 = vrcp.pop %v4235
        %v4515 = vrcp.pop %v4238
        %v4516 = vrcp.pop %v4241
        %v4517 = vrcp.pop %v4244
        %v4518 = vrcp.pop %v4247
        %v4519 = vrcp.pop %v4250
        %v4520 = vrcp.pop %v4253
        %v4521 = vrcp.pop %v4256
        %v4522 = vrcp.pop %v4259
        %v4523 = vrcp.pop %v4262
        %v4524 = vrcp.pop %v4265
        %v4525 = vrcp.pop %v4268
        %v4526 = vmul.f32 %v4448, %v4510
        %v4527 = vmul.f32 %v4451, %v4511
        %v4528 = vmul.f32 %v4456, %v4512
        %v4529 = vmul.f32 %v4459, %v4513
        %v4530 = vmul.f32 %v4464, %v4514
        %v4531 = vmul.f32 %v4467, %v4515
        %v4532 = vmul.f32 %v4472, %v4516
        %v4533 = vmul.f32 %v4475, %v4517
        %v4534 = vmul.f32 %v4480, %v4518
        %v4535 = vmul.f32 %v4483, %v4519
        %v4536 = vmul.f32 %v4488, %v4520
        %v4537 = vmul.f32 %v4491, %v4521
        %v4538 = vmul.f32 %v4496, %v4522
        %v4539 = vmul.f32 %v4499, %v4523
        %v4540 = vmul.f32 %v4504, %v4524
        %v4541 = vmul.f32 %v4507, %v4525
        %4558 = vrot.lane.b32.xlu0 %v4526, 96
        %v4559 = vpop.permute.xlu0 %4558
        %4560 = vrot.lane.b32.xlu0 %v4527, 96
        %v4561 = vpop.permute.xlu0 %4560
        %4562 = vrot.lane.b32.xlu0 %v4528, 96
        %v4563 = vpop.permute.xlu0 %4562
        %4564 = vrot.lane.b32.xlu0 %v4529, 96
        %v4565 = vpop.permute.xlu0 %4564
        %4566 = vrot.lane.b32.xlu0 %v4530, 96
        %v4567 = vpop.permute.xlu0 %4566
        %4568 = vrot.lane.b32.xlu0 %v4531, 96
        %v4569 = vpop.permute.xlu0 %4568
        %4570 = vrot.lane.b32.xlu0 %v4532, 96
        %v4571 = vpop.permute.xlu0 %4570
        %4572 = vrot.lane.b32.xlu0 %v4533, 96
        %v4573 = vpop.permute.xlu0 %4572
        %4574 = vrot.lane.b32.xlu0 %v4534, 96
        %v4575 = vpop.permute.xlu0 %4574
        %4576 = vrot.lane.b32.xlu0 %v4535, 96
        %v4577 = vpop.permute.xlu0 %4576
        %4578 = vrot.lane.b32.xlu0 %v4536, 96
        %v4579 = vpop.permute.xlu0 %4578
        %4580 = vrot.lane.b32.xlu0 %v4537, 96
        %v4581 = vpop.permute.xlu0 %4580
        %4582 = vrot.lane.b32.xlu0 %v4538, 96
        %v4583 = vpop.permute.xlu0 %4582
        %4584 = vrot.lane.b32.xlu0 %v4539, 96
        %v4585 = vpop.permute.xlu0 %4584
        %4586 = vrot.lane.b32.xlu0 %v4540, 96
        %v4587 = vpop.permute.xlu0 %4586
        %4588 = vrot.lane.b32.xlu0 %v4541, 96
        %v4589 = vpop.permute.xlu0 %4588
        %vm4606 = vcmask 1048320
        %4607 = vst.msk [vmem:[#allocation3] sm:$0xff] %vm4606, %v4559
        %4608 = vst.msk [vmem:[#allocation3 + $0x8] sm:$0xff] %vm4606, %v4561
        %4609 = vst.msk [vmem:[#allocation3 + $0x10] sm:$0xff] %vm4606, %v4563
        %4610 = vst.msk [vmem:[#allocation3 + $0x18] sm:$0xff] %vm4606, %v4565
        %4611 = vst.msk [vmem:[#allocation3 + $0x20] sm:$0xff] %vm4606, %v4567
        %4612 = vst.msk [vmem:[#allocation3 + $0x28] sm:$0xff] %vm4606, %v4569
        %4613 = vst.msk [vmem:[#allocation3 + $0x30] sm:$0xff] %vm4606, %v4571
        %4614 = vst.msk [vmem:[#allocation3 + $0x38] sm:$0xff] %vm4606, %v4573
        %4615 = vst.msk [vmem:[#allocation3 + $0x40] sm:$0xff] %vm4606, %v4575
        %4616 = vst.msk [vmem:[#allocation3 + $0x48] sm:$0xff] %vm4606, %v4577
        %4617 = vst.msk [vmem:[#allocation3 + $0x50] sm:$0xff] %vm4606, %v4579
        %4618 = vst.msk [vmem:[#allocation3 + $0x58] sm:$0xff] %vm4606, %v4581
        %4619 = vst.msk [vmem:[#allocation3 + $0x60] sm:$0xff] %vm4606, %v4583
        %4620 = vst.msk [vmem:[#allocation3 + $0x68] sm:$0xff] %vm4606, %v4585
        %4621 = vst.msk [vmem:[#allocation3 + $0x70] sm:$0xff] %vm4606, %v4587
        %4622 = vst.msk [vmem:[#allocation3 + $0x78] sm:$0xff] %vm4606, %v4589
        %v4623 = vld [vmem:[#allocation3] sm:$0xff]
        %v4624 = vld [vmem:[#allocation3 + $0x8] sm:$0xff]
        %v4625 = vld [vmem:[#allocation3 + $0x10] sm:$0xff]
        %v4626 = vld [vmem:[#allocation3 + $0x18] sm:$0xff]
        %v4627 = vld [vmem:[#allocation3 + $0x20] sm:$0xff]
        %v4628 = vld [vmem:[#allocation3 + $0x28] sm:$0xff]
        %v4629 = vld [vmem:[#allocation3 + $0x30] sm:$0xff]
        %v4630 = vld [vmem:[#allocation3 + $0x38] sm:$0xff]
        %v4631 = vld [vmem:[#allocation3 + $0x40] sm:$0xff]
        %v4632 = vld [vmem:[#allocation3 + $0x48] sm:$0xff]
        %v4633 = vld [vmem:[#allocation3 + $0x50] sm:$0xff]
        %v4634 = vld [vmem:[#allocation3 + $0x58] sm:$0xff]
        %v4635 = vld [vmem:[#allocation3 + $0x60] sm:$0xff]
        %v4636 = vld [vmem:[#allocation3 + $0x68] sm:$0xff]
        %v4637 = vld [vmem:[#allocation3 + $0x70] sm:$0xff]
        %v4638 = vld [vmem:[#allocation3 + $0x78] sm:$0xff]
        %v4639 = vpack.c.bf16 %v4624, %v4623
        %v4640 = vpack.c.bf16 %v4626, %v4625
        %v4641 = vpack.c.bf16 %v4628, %v4627
        %v4642 = vpack.c.bf16 %v4630, %v4629
        %v4643 = vpack.c.bf16 %v4632, %v4631
        %v4644 = vpack.c.bf16 %v4634, %v4633
        %v4645 = vpack.c.bf16 %v4636, %v4635
        %v4646 = vpack.c.bf16 %v4638, %v4637
        %v4647 = vld [vmem:[#allocation9] sm:$0xf]
        %v4648 = vld [vmem:[#allocation9 + $0x4] sm:$0xf]
        %v4649 = vld [vmem:[#allocation9 + $0x8] sm:$0xf]
        %v4650 = vld [vmem:[#allocation9 + $0xc] sm:$0xf]
        %v4651 = vld [vmem:[#allocation9 + $0x10] sm:$0xf]
        %v4652 = vld [vmem:[#allocation9 + $0x14] sm:$0xf]
        %v4653 = vld [vmem:[#allocation9 + $0x18] sm:$0xf]
        %v4654 = vld [vmem:[#allocation9 + $0x1c] sm:$0xf]
        %v4655 = vld [vmem:[#allocation9 + $0x20] sm:$0xf]
        %v4656 = vld [vmem:[#allocation9 + $0x24] sm:$0xf]
        %v4657 = vld [vmem:[#allocation9 + $0x28] sm:$0xf]
        %v4658 = vld [vmem:[#allocation9 + $0x2c] sm:$0xf]
        %v4659 = vld [vmem:[#allocation9 + $0x30] sm:$0xf]
        %v4660 = vld [vmem:[#allocation9 + $0x34] sm:$0xf]
        %v4661 = vld [vmem:[#allocation9 + $0x38] sm:$0xf]
        %v4662 = vld [vmem:[#allocation9 + $0x3c] sm:$0xf]
        %v4663 = vld [vmem:[%s4] sm:$0x1]
        %v4665 = vlaneseq
        %v4666 = vshrl.u32 %v4665, 7
        %v4667 = vsub.s32 0, %v4666
        %v4668 = vrot.slane %v4663, %v4667
        %v4686 = vunpack.c.l.b16 %v4647
        %v4687 = vunpack.c.l.b16 %v4648
        %v4688 = vunpack.c.l.b16 %v4649
        %v4689 = vunpack.c.l.b16 %v4650
        %v4690 = vunpack.c.l.b16 %v4651
        %v4691 = vunpack.c.l.b16 %v4652
        %v4692 = vunpack.c.l.b16 %v4653
        %v4693 = vunpack.c.l.b16 %v4654
        %v4694 = vunpack.c.l.b16 %v4655
        %v4695 = vunpack.c.l.b16 %v4656
        %v4696 = vunpack.c.l.b16 %v4657
        %v4697 = vunpack.c.l.b16 %v4658
        %v4698 = vunpack.c.l.b16 %v4659
        %v4699 = vunpack.c.l.b16 %v4660
        %v4700 = vunpack.c.l.b16 %v4661
        %v4701 = vunpack.c.l.b16 %v4662
        %v4702 = vpack.c.b16 %v4687, %v4686
        %v4703 = vpack.c.b16 %v4689, %v4688
        %v4704 = vpack.c.b16 %v4691, %v4690
        %v4705 = vpack.c.b16 %v4693, %v4692
        %v4706 = vpack.c.b16 %v4695, %v4694
        %v4707 = vpack.c.b16 %v4697, %v4696
        %v4708 = vpack.c.b16 %v4699, %v4698
        %v4709 = vpack.c.b16 %v4701, %v4700
        %4718 = vmatprep.subr.bf16.mxu0 0
        %4719 = vmatpush1.bf16.msra.mxu0 %v4709
        %4720 = vmatprep.subr.bf16.mxu0 0
        %4721 = vmatpush1.bf16.msra.mxu0 %v4708
        %4722 = vmatprep.subr.bf16.mxu0 0
        %4723 = vmatpush1.bf16.msra.mxu0 %v4707
        %4724 = vmatprep.subr.bf16.mxu0 0
        %4725 = vmatpush1.bf16.msra.mxu0 %v4706
        %4726 = vmatprep.subr.bf16.mxu0 0
        %4727 = vmatpush1.bf16.msra.mxu0 %v4705
        %4728 = vmatprep.subr.bf16.mxu0 0
        %4729 = vmatpush1.bf16.msra.mxu0 %v4704
        %4730 = vmatprep.subr.bf16.mxu0 0
        %4731 = vmatpush1.bf16.msra.mxu0 %v4703
        %4732 = vmatprep.subr.bf16.mxu0 0
        %4733 = vmatpush1.bf16.msra.mxu0 %v4702
        %4734 = vmatprep.subr.bf16.mxu0 0
        %4735 = vmatpush2.bf16.msra.mxu0 0
        %4736 = vmatprep.subr.bf16.mxu0 0
        %4737 = vmatpush2.bf16.msra.mxu0 0
        %4738 = vmatprep.subr.bf16.mxu0 0
        %4739 = vmatpush2.bf16.msra.mxu0 0
        %4740 = vmatprep.subr.bf16.mxu0 0
        %4741 = vmatpush2.bf16.msra.mxu0 0
        %4742 = vmatprep.subr.bf16.mxu0 0
        %4743 = vmatpush2.bf16.msra.mxu0 0
        %4744 = vmatprep.subr.bf16.mxu0 0
        %4745 = vmatpush2.bf16.msra.mxu0 0
        %4746 = vmatprep.subr.bf16.mxu0 0
        %4747 = vmatpush2.bf16.msra.mxu0 0
        %4748 = vmatprep.subr.bf16.mxu0 0
        %4749 = vmatpush2.bf16.msra.mxu0 0
        %4750 = vmatprep.mubr.bf16.mxu0 0
        %4751 = vmatmul.mubr.bf16.gmra.mxu0 %v4639
        %v4752 = vpop.f32.mrf.mxu0
        %v4753 = vadd.f32 %v4668, %v4752
        %v4754 = vpop.f32.mrf.mxu0
        %v4755 = vpop.f32.mrf.mxu0
        %v4756 = vadd.f32 %v4668, %v4755
        %v4757 = vpop.f32.mrf.mxu0
        %4758 = vmatprep.mubr.bf16.mxu0 0
        %4759 = vmatmul.mubr.bf16.gmra.mxu0 %v4640
        %v4760 = vpop.f32.mrf.mxu0
        %v4761 = vadd.f32 %v4668, %v4760
        %v4762 = vpop.f32.mrf.mxu0
        %v4763 = vpop.f32.mrf.mxu0
        %v4764 = vadd.f32 %v4668, %v4763
        %v4765 = vpop.f32.mrf.mxu0
        %4766 = vmatprep.mubr.bf16.mxu0 0
        %4767 = vmatmul.mubr.bf16.gmra.mxu0 %v4641
        %v4768 = vpop.f32.mrf.mxu0
        %v4769 = vadd.f32 %v4668, %v4768
        %v4770 = vpop.f32.mrf.mxu0
        %v4771 = vpop.f32.mrf.mxu0
        %v4772 = vadd.f32 %v4668, %v4771
        %v4773 = vpop.f32.mrf.mxu0
        %4774 = vmatprep.mubr.bf16.mxu0 0
        %4775 = vmatmul.mubr.bf16.gmra.mxu0 %v4642
        %v4776 = vpop.f32.mrf.mxu0
        %v4777 = vadd.f32 %v4668, %v4776
        %v4778 = vpop.f32.mrf.mxu0
        %v4779 = vpop.f32.mrf.mxu0
        %v4780 = vadd.f32 %v4668, %v4779
        %v4781 = vpop.f32.mrf.mxu0
        %4782 = vmatprep.mubr.bf16.mxu0 0
        %4783 = vmatmul.mubr.bf16.gmra.mxu0 %v4643
        %v4784 = vpop.f32.mrf.mxu0
        %v4785 = vadd.f32 %v4668, %v4784
        %v4786 = vpop.f32.mrf.mxu0
        %v4787 = vpop.f32.mrf.mxu0
        %v4788 = vadd.f32 %v4668, %v4787
        %v4789 = vpop.f32.mrf.mxu0
        %4790 = vmatprep.mubr.bf16.mxu0 0
        %4791 = vmatmul.mubr.bf16.gmra.mxu0 %v4644
        %v4792 = vpop.f32.mrf.mxu0
        %v4793 = vadd.f32 %v4668, %v4792
        %v4794 = vpop.f32.mrf.mxu0
        %v4795 = vpop.f32.mrf.mxu0
        %v4796 = vadd.f32 %v4668, %v4795
        %v4797 = vpop.f32.mrf.mxu0
        %4798 = vmatprep.mubr.bf16.mxu0 0
        %4799 = vmatmul.mubr.bf16.gmra.mxu0 %v4645
        %v4800 = vpop.f32.mrf.mxu0
        %v4801 = vadd.f32 %v4668, %v4800
        %v4802 = vpop.f32.mrf.mxu0
        %v4803 = vpop.f32.mrf.mxu0
        %v4804 = vadd.f32 %v4668, %v4803
        %v4805 = vpop.f32.mrf.mxu0
        %4806 = vmatprep.mubr.bf16.mxu0 0
        %4807 = vmatmul.mubr.bf16.gmra.mxu0 %v4646
        %v4808 = vpop.f32.mrf.mxu0
        %v4809 = vadd.f32 %v4668, %v4808
        %v4810 = vpop.f32.mrf.mxu0
        %v4811 = vpop.f32.mrf.mxu0
        %v4812 = vadd.f32 %v4668, %v4811
        %v4813 = vpop.f32.mrf.mxu0
        %4814 = vdwg.mxu0
        %4815 = vst [vmem:[%s285] sm:$0xff] %v4753
        %4816 = vst [vmem:[%s285 + $0x8] sm:$0xff] %v4756
        %4817 = vst [vmem:[%s285 + $0x10] sm:$0xff] %v4761
        %4818 = vst [vmem:[%s285 + $0x18] sm:$0xff] %v4764
        %4819 = vst [vmem:[%s285 + $0x20] sm:$0xff] %v4769
        %4820 = vst [vmem:[%s285 + $0x28] sm:$0xff] %v4772
        %4821 = vst [vmem:[%s285 + $0x30] sm:$0xff] %v4777
        %4822 = vst [vmem:[%s285 + $0x38] sm:$0xff] %v4780
        %4823 = vst [vmem:[%s285 + $0x40] sm:$0xff] %v4785
        %4824 = vst [vmem:[%s285 + $0x48] sm:$0xff] %v4788
        %4825 = vst [vmem:[%s285 + $0x50] sm:$0xff] %v4793
        %4826 = vst [vmem:[%s285 + $0x58] sm:$0xff] %v4796
        %4827 = vst [vmem:[%s285 + $0x60] sm:$0xff] %v4801
        %4828 = vst [vmem:[%s285 + $0x68] sm:$0xff] %v4804
        %4829 = vst [vmem:[%s285 + $0x70] sm:$0xff] %v4809
        %4830 = vst [vmem:[%s285 + $0x78] sm:$0xff] %v4812
        %s4831 = sand.u32 %s155, 1
        %s4832 = scalar_lea.sflag [#allocation6], %s4831
        %s4833 = sand.u32 %s155, 1
        %s4834 = smul.addr %s4833, 128
        %s4835 = scalar_lea.vmem [#allocation10], %s4834
        // Predicated region
        $region57: #{tpu_custom_call.1} parent=39 // pred_check
          %p4836 = pneg %p165
        $region58: #{tpu_custom_call.1} parent=39 // pred_check_branch
          %4838 = sbr.rel (%p4836) target = $region60
        $region59: #{tpu_custom_call.1} parent=39 // pred_region
          %s4839 = smul.u32 16, %s28
          %s4841 = ssub.s32 2048, 2048
          %4842 = vsyncadd %s4832, %s4841
          %s4843 = smul.addr %s27, 32
          %s4844 = sadd.s32 %s4839, %s4843
          %s4845 = smul.addr %s4844, 128
          %s4846 = scalar_lea.hbm %s5, %s4845
          %s4847 = sshll.u32 %s4835, 4
          %s4848 = int_to_ptr.vmem [resolvable:$true] %s4847
          %4853 = dma.vmem_to_hbm [thread:$0]  %s4848, 2048, %s4846, %s4832, 128, 128, 8
        $region60: #{tpu_custom_call.1} parent=39 // pred_fallthru
          _
      $region40: #{tpu_custom_call.1} parent=5 // pred_fallthru
        _
      %p4854 = scmp.le.s32.totalorder 2, %s18
      // Predicated region
      $region61: #{tpu_custom_call.1} parent=5 // pred_check
        %p4855 = pneg %p4854
      $region62: #{tpu_custom_call.1} parent=5 // pred_check_branch
        %4857 = sbr.rel (%p4855) target = $region64
      $region63: #{tpu_custom_call.1} parent=5 // pred_region
        %s4858 = ssub.s32 %s18, 2
        // Predicated region
        $region65: #{tpu_custom_call.1} parent=63 // pred_check
          %p4859 = pneg %p171
        $region66: #{tpu_custom_call.1} parent=63 // pred_check_branch
          %4861 = sbr.rel (%p4859) target = $region68
        $region67: #{tpu_custom_call.1} parent=63 // pred_region
          %s4862 = sand.u32 %s156, 1
          %s4863 = scalar_lea.sflag [#allocation6], %s4862
          %s4864 = sand.u32 %s156, 1
          %s4865 = smul.addr %s4864, 128
          %s4866 = scalar_lea.vmem [#allocation10], %s4865
          %4867 = dma.done %s4863, 2048
        $region68: #{tpu_custom_call.1} parent=63 // pred_fallthru
          _
      $region64: #{tpu_custom_call.1} parent=5 // pred_fallthru
        _
    $region6: #{tpu_custom_call.1} parent=1 // loop_footer
      %s22 = sadd.s32 1, %s18
    $region7: #{tpu_custom_call.1} parent=1 // loop_footer_branch
      %17 = sbr.rel target = $region3
    $region8: #{tpu_custom_call.1} parent=1 // loop_exit
      _
    %4868 = vsyncpa [#allocation5], 1
    %s4869 = scalar_lea.sflag [#allocation5], 1
    %4870 = vsyncpa %s4869, 1
    %4871 = vsyncpa [#allocation8], 1
    %4872 = vsyncpa [#allocation6], 1
    %s4873 = scalar_lea.sflag [#allocation6], 1
    %4874 = vsyncpa %s4873, 1

</llo_original>
